<compile_context>
chip_gen: v7x
topology: tpu7x:2x2x1
jax: 0.10.0
libtpu: 0.0.40
codegen_flags: <defaults>
</compile_context>

<pallas_src>
import functools

import numpy as np
import jax
import jax.numpy as jnp
from jax.experimental import pallas as pl
from jax.experimental.pallas import tpu as pltpu


# ---------------------------------------------------------------------------
# Pallas kernel: fused pooling + attention + 1x1 conv (matmul) + bias + residual
# ---------------------------------------------------------------------------
def afnp_attn_kernel(q_ref, p_ref, wt_ref, b_ref, o_ref, *, l_valid, scale):
    q_f32 = q_ref[...]                                # (HW, C) f32 (residual path)
    q_bf = q_f32.astype(jnp.bfloat16)
    p_mat = p_ref[...]                                # (Lp, HW) bf16 pooling matrix

    # Value = P @ Query  (fused adaptive-avg-pooling on the MXU).  Key == Value^T.
    v = jnp.dot(p_mat, q_bf, preferred_element_type=jnp.float32)      # (Lp, C) f32

    # Scores = Query @ Key = Query @ Value^T, contracted on C (no explicit transpose).
    s = jax.lax.dot_general(
        q_bf, v.astype(jnp.bfloat16),
        dimension_numbers=(((1,), (1,)), ((), ())),
        preferred_element_type=jnp.float32) * scale                   # (HW, Lp) f32

    # Mask out the zero-padded pooling rows (columns >= l_valid).
    col = jax.lax.broadcasted_iota(jnp.int32, s.shape, 1)
    s = jnp.where(col < l_valid, s, -1e30)

    # Softmax in f32; reciprocal goes to the EUP slot.
    m = jnp.max(s, axis=-1, keepdims=True)
    e = jnp.exp(s - m)
    inv_den = pl.reciprocal(jnp.sum(e, axis=-1, keepdims=True), approx=True)
    p_attn = e * inv_den

    # Aggregate = softmax(scores) @ Value.
    agg = jnp.dot(p_attn.astype(jnp.bfloat16), v.astype(jnp.bfloat16),
                  preferred_element_type=jnp.float32)                 # (HW, C) f32

    # 1x1 conv == matmul with pre-transposed weight; fold bias into the residual add.
    conv = jnp.dot(agg.astype(jnp.bfloat16), wt_ref[...],
                   preferred_element_type=jnp.float32)                # (HW, C) f32
    o_ref[...] = (conv + b_ref[...] + q_f32).astype(o_ref.dtype)


def afnp_attention(query, p_mat, w_t, bias, *, l_valid, scale):
    B, HW, C = query.shape
    Lp = p_mat.shape[0]
    kernel = functools.partial(afnp_attn_kernel, l_valid=l_valid, scale=scale)
    return pl.pallas_call(
        kernel,
        out_shape=jax.ShapeDtypeStruct((B, HW, C), query.dtype),
        grid=(B,),
        in_specs=[
            pl.BlockSpec((None, HW, C), lambda b: (b, 0, 0)),   # Query (batch squeezed)
            pl.BlockSpec((Lp, HW), lambda b: (0, 0)),           # combined pooling matrix
            pl.BlockSpec((C, C), lambda b: (0, 0)),             # W^T (pre-transposed)
            pl.BlockSpec((1, C), lambda b: (0, 0)),             # bias row
        ],
        out_specs=pl.BlockSpec((None, HW, C), lambda b: (b, 0, 0)),
        compiler_params=pltpu.CompilerParams(dimension_semantics=("parallel",)),
    )(query, p_mat, w_t, bias)


# ---------------------------------------------------------------------------
# Host-side pooling-matrix construction (matches nn.AdaptiveAvgPool2d bins)
# ---------------------------------------------------------------------------
def _adaptive_pool_matrix(n, k):
    P = np.zeros((k, n), dtype=np.float32)
    for i in range(k):
        start = (i * n) // k
        end = -(-((i + 1) * n) // k)          # ceil((i+1)*n/k)
        P[i, start:end] = 1.0 / (end - start)
    return P


def _pool_matrix_2d(H, W, k):
    # (k*k, H*W): flat pooled index i*k+j <- flat input index h*W+w
    return np.kron(_adaptive_pool_matrix(H, k), _adaptive_pool_matrix(W, k))


def _key_pool_matrix(H, W, scales):
    P = np.concatenate([_pool_matrix_2d(H, W, k) for k in scales], axis=0)
    L = P.shape[0]
    Lp = max(128, ((L + 127) // 128) * 128)   # pad rows to a lane multiple
    if Lp > L:
        P = np.concatenate([P, np.zeros((Lp - L, H * W), np.float32)], axis=0)
    return P, L


def adaptive_avg_pool2d(x, k):
    # x: (B, C, H, W) -> (B, C, k, k); same semantics as torch AdaptiveAvgPool2d.
    _, _, H, W = x.shape
    Ph = jnp.asarray(_adaptive_pool_matrix(H, k))
    Pw = jnp.asarray(_adaptive_pool_matrix(W, k))
    return jnp.einsum("ih,bchw,jw->bcij", Ph, x, Pw)


# ---------------------------------------------------------------------------
# Full AFNPBlock_256 forward
# ---------------------------------------------------------------------------
@jax.jit
def afnp_block_256(x5, w=None, bias=None):
    B, C, H, W = x5.shape
    HW = H * W
    x_flat = x5.reshape(B, C, HW)
    query = jnp.transpose(x_flat, (0, 2, 1)).astype(jnp.float32)      # (B, HW, C)

    # Combined (padded) pooling matrix for the Key/Value scales 3,1,9,7,16.
    P_np, L = _key_pool_matrix(H, W, (3, 1, 9, 7, 16))
    p_mat = jnp.asarray(P_np, dtype=jnp.bfloat16)                     # (Lp, HW)

    # ConvOut parameters: module initializes weight & bias to 0 (constant_ init).
    if w is None:
        w = jnp.zeros((C, C), jnp.float32)
    if bias is None:
        bias = jnp.zeros((C,), jnp.float32)
    w_t = jnp.transpose(w).astype(jnp.bfloat16)                       # pre-transposed
    b_row = bias.reshape(1, C).astype(jnp.float32)

    y = afnp_attention(query, p_mat, w_t, b_row,
                       l_valid=L, scale=512.0 ** (-0.5))              # (B, HW, C)
    out = jnp.transpose(y, (0, 2, 1)).reshape(B, C, H, W)

    # The two returned pooled tensors (12x12, 6x6) are separate small outputs,
    # computed as single f32 matmuls outside the kernel.
    P12 = jnp.asarray(_pool_matrix_2d(H, W, 12))
    P6 = jnp.asarray(_pool_matrix_2d(H, W, 6))
    k12 = jnp.einsum("bcn,ln->bcl", x_flat, P12).reshape(B, C, 12, 12)
    k6 = jnp.einsum("bcn,ln->bcl", x_flat, P6).reshape(B, C, 6, 6)
    return out, k12, k6


# ---------------------------------------------------------------------------
# Pure-JAX reference (independent path, for correctness checks)
# ---------------------------------------------------------------------------
def afnp_block_256_ref(x5, w=None, bias=None):
    B, C, H, W = x5.shape
    flat = lambda t: t.reshape(B, C, -1)
    pools = {k: adaptive_avg_pool2d(x5, k) for k in (16, 12, 9, 7, 6, 3, 1)}
    Key = jnp.concatenate(
        [flat(pools[3]), flat(pools[1]), flat(pools[9]),
         flat(pools[7]), flat(pools[16])], axis=-1)                   # (B, C, 396)
    Value = jnp.transpose(Key, (0, 2, 1))
    Query = jnp.transpose(flat(x5), (0, 2, 1))
    s = jnp.einsum("bqc,bcl->bql", Query, Key) * (512.0 ** (-0.5))
    p = jax.nn.softmax(s, axis=-1)
    agg = jnp.einsum("bql,blc->bqc", p, Value)
    if w is None:
        w = jnp.zeros((C, C), jnp.float32)
    if bias is None:
        bias = jnp.zeros((C,), jnp.float32)
    conv = jnp.einsum("bqc,oc->bqo", agg, w) + bias
    out = jnp.transpose(conv + Query, (0, 2, 1)).reshape(B, C, H, W)
    return out, pools[12], pools[6]


if __name__ == "__main__":
    key = jax.random.PRNGKey(0)
    B, C, H, W = 2, 128, 16, 16   # C=128 is fixed by ConvOut(128, 128, 1)
    x5 = jax.random.normal(key, (B, C, H, W), dtype=jnp.float32)

    # 1) Module-faithful run (zero ConvOut weight/bias, as in the PyTorch init).
    out, k12, k6 = afnp_block_256(x5)
    jax.block_until_ready((out, k12, k6))
    out_ref, k12_ref, k6_ref = afnp_block_256_ref(x5)
    assert out.shape == (B, C, H, W)
    assert k12.shape == (B, C, 12, 12) and k6.shape == (B, C, 6, 6)
    assert np.allclose(np.asarray(out), np.asarray(out_ref), atol=1e-4, rtol=1e-4)
    assert np.allclose(np.asarray(k12), np.asarray(k12_ref), atol=1e-5, rtol=1e-5)
    assert np.allclose(np.asarray(k6), np.asarray(k6_ref), atol=1e-5, rtol=1e-5)

    # 2) Random-weight run to validate conv orientation / bias broadcast
    #    (bf16 MXU operands + approx reciprocal => loose tolerance).
    kw, kb = jax.random.split(jax.random.PRNGKey(1))
    w_rand = 0.05 * jax.random.normal(kw, (C, C), dtype=jnp.float32)
    b_rand = 0.05 * jax.random.normal(kb, (C,), dtype=jnp.float32)
    out2, _, _ = afnp_block_256(x5, w_rand, b_rand)
    jax.block_until_ready(out2)
    out2_ref, _, _ = afnp_block_256_ref(x5, w_rand, b_rand)
    assert np.allclose(np.asarray(out2), np.asarray(out2_ref), atol=5e-2, rtol=5e-2)

    print("KERNEL_OK")
</pallas_src>

<mosaic_0001>
module attributes {stable_mosaic.version = 11 : i64} {
  func.func @afnp_attn_kernel(%arg0: i32, %arg1: memref<1x256x128xf32, #tpu.memory_space<vmem>>, %arg2: memref<512x256xbf16, #tpu.memory_space<vmem>>, %arg3: memref<128x128xbf16, #tpu.memory_space<vmem>>, %arg4: memref<1x128xf32, #tpu.memory_space<vmem>>, %arg5: memref<1x256x128xf32, #tpu.memory_space<vmem>>) attributes {dimension_semantics = [#tpu.dimension_semantics<parallel>], iteration_bounds = array<i64: 2>, scalar_prefetch = 0 : i64, scratch_operands = 0 : i64, tpu.core_type = #tpu.core_type<tc>, window_params = [{transform_indices = @transform_0, window_bounds = array<i64: 1, 256, 128>}, {pipeline_mode = #tpu.pipeline_mode<synchronous>, transform_indices = @transform_1, window_bounds = array<i64: 512, 256>}, {pipeline_mode = #tpu.pipeline_mode<synchronous>, transform_indices = @transform_2, window_bounds = array<i64: 128, 128>}, {pipeline_mode = #tpu.pipeline_mode<synchronous>, transform_indices = @transform_3, window_bounds = array<i64: 1, 128>}, {transform_indices = @transform_4, window_bounds = array<i64: 1, 256, 128>}]} {
    %c0 = arith.constant 0 : index
    %c0_0 = arith.constant 0 : index
    %c0_1 = arith.constant 0 : index
    %0 = vector.load %arg1[%c0, %c0_0, %c0_1] : memref<1x256x128xf32, #tpu.memory_space<vmem>>, vector<1x256x128xf32>
    %1 = vector.shape_cast %0 : vector<1x256x128xf32> to vector<256x128xf32>
    %2 = arith.truncf %1 : vector<256x128xf32> to vector<256x128xbf16>
    %c0_2 = arith.constant 0 : index
    %c0_3 = arith.constant 0 : index
    %3 = vector.load %arg2[%c0_2, %c0_3] : memref<512x256xbf16, #tpu.memory_space<vmem>>, vector<512x256xbf16>
    %cst = arith.constant dense<0.000000e+00> : vector<512x128xf32>
    %4 = tpu.matmul %3, %2, %cst {dimension_numbers = #tpu.dot_dimension_numbers<[1], [0], [0], [1], [0, 0, 1, 1], [], []>} : vector<512x256xbf16>, vector<256x128xbf16>, vector<512x128xf32> -> vector<512x128xf32>
    %5 = arith.truncf %4 : vector<512x128xf32> to vector<512x128xbf16>
    %cst_4 = arith.constant dense<0.000000e+00> : vector<256x512xf32>
    %6 = tpu.matmul %2, %5, %cst_4 {dimension_numbers = #tpu.dot_dimension_numbers<[1], [1], [0], [0], [0, 0, 1, 0], [], []>} : vector<256x128xbf16>, vector<512x128xbf16>, vector<256x512xf32> -> vector<256x512xf32>
    %cst_5 = arith.constant 0.0441941731 : f32
    %7 = vector.broadcast %cst_5 : f32 to vector<256x512xf32>
    %8 = arith.mulf %6, %7 : vector<256x512xf32>
    %9 = tpu.iota {dimensions = array<i32: 1>} : vector<256x512xi32>
    %c396_i32 = arith.constant 396 : i32
    %10 = vector.broadcast %c396_i32 : i32 to vector<256x512xi32>
    %11 = arith.cmpi slt, %9, %10 : vector<256x512xi32>
    %cst_6 = arith.constant -1.000000e+30 : f32
    %12 = vector.broadcast %cst_6 : f32 to vector<256x512xf32>
    %13 = arith.select %11, %8, %12 : vector<256x512xi1>, vector<256x512xf32>
    %cst_7 = arith.constant dense<0xFF800000> : vector<256xf32>
    %14 = vector.multi_reduction <maximumf>, %13, %cst_7 [1] : vector<256x512xf32> to vector<256xf32>
    %15 = vector.shape_cast %14 : vector<256xf32> to vector<256x1xf32>
    %16 = vector.broadcast %15 : vector<256x1xf32> to vector<256x512xf32>
    %17 = arith.subf %13, %16 : vector<256x512xf32>
    %18 = math.exp %17 : vector<256x512xf32>
    %cst_8 = arith.constant dense<0.000000e+00> : vector<256xf32>
    %19 = vector.multi_reduction <add>, %18, %cst_8 [1] : vector<256x512xf32> to vector<256xf32>
    %20 = vector.shape_cast %19 : vector<256xf32> to vector<256x1xf32>
    %21 = tpu.reciprocal %20 {approx = true} : vector<256x1xf32> -> vector<256x1xf32>
    %22 = vector.broadcast %21 : vector<256x1xf32> to vector<256x512xf32>
    %23 = arith.mulf %18, %22 : vector<256x512xf32>
    %24 = arith.truncf %23 : vector<256x512xf32> to vector<256x512xbf16>
    %25 = arith.truncf %4 : vector<512x128xf32> to vector<512x128xbf16>
    %cst_9 = arith.constant dense<0.000000e+00> : vector<256x128xf32>
    %26 = tpu.matmul %24, %25, %cst_9 {dimension_numbers = #tpu.dot_dimension_numbers<[1], [0], [0], [1], [0, 0, 1, 1], [], []>} : vector<256x512xbf16>, vector<512x128xbf16>, vector<256x128xf32> -> vector<256x128xf32>
    %27 = arith.truncf %26 : vector<256x128xf32> to vector<256x128xbf16>
    %c0_10 = arith.constant 0 : index
    %c0_11 = arith.constant 0 : index
    %28 = vector.load %arg3[%c0_10, %c0_11] : memref<128x128xbf16, #tpu.memory_space<vmem>>, vector<128x128xbf16>
    %cst_12 = arith.constant dense<0.000000e+00> : vector<256x128xf32>
    %29 = tpu.matmul %27, %28, %cst_12 {dimension_numbers = #tpu.dot_dimension_numbers<[1], [0], [0], [1], [0, 0, 1, 1], [], []>} : vector<256x128xbf16>, vector<128x128xbf16>, vector<256x128xf32> -> vector<256x128xf32>
    %c0_13 = arith.constant 0 : index
    %c0_14 = arith.constant 0 : index
    %30 = vector.load %arg4[%c0_13, %c0_14] : memref<1x128xf32, #tpu.memory_space<vmem>>, vector<1x128xf32>
    %31 = vector.broadcast %30 : vector<1x128xf32> to vector<256x128xf32>
    %32 = arith.addf %29, %31 : vector<256x128xf32>
    %33 = arith.addf %32, %1 : vector<256x128xf32>
    %c0_15 = arith.constant 0 : index
    %c0_16 = arith.constant 0 : index
    %c0_17 = arith.constant 0 : index
    %34 = vector.load %arg5[%c0_15, %c0_16, %c0_17] : memref<1x256x128xf32, #tpu.memory_space<vmem>>, vector<1x256x128xf32>
    %35 = vector.shape_cast %34 : vector<1x256x128xf32> to vector<256x128xf32>
    %36 = vector.shape_cast %33 : vector<256x128xf32> to vector<1x256x128xf32>
    tpu.vector_store %arg5[%c0_15, %c0_16, %c0_17], %36 {strides = array<i32>} : memref<1x256x128xf32, #tpu.memory_space<vmem>>, vector<1x256x128xf32>,
    return
  }
  func.func @transform_0(%arg0: i32) -> (i32, i32, i32) {
    %c0_i32 = arith.constant 0 : i32
    %c0_i32_0 = arith.constant 0 : i32
    %c0_i32_1 = arith.constant 0 : i32
    return %arg0, %c0_i32, %c0_i32_0 : i32, i32, i32
  }
  func.func @transform_1(%arg0: i32) -> (i32, i32) {
    %c0_i32 = arith.constant 0 : i32
    %c0_i32_0 = arith.constant 0 : i32
    %c0_i32_1 = arith.constant 0 : i32
    return %c0_i32, %c0_i32_0 : i32, i32
  }
  func.func @transform_2(%arg0: i32) -> (i32, i32) {
    %c0_i32 = arith.constant 0 : i32
    %c0_i32_0 = arith.constant 0 : i32
    %c0_i32_1 = arith.constant 0 : i32
    return %c0_i32, %c0_i32_0 : i32, i32
  }
  func.func @transform_3(%arg0: i32) -> (i32, i32) {
    %c0_i32 = arith.constant 0 : i32
    %c0_i32_0 = arith.constant 0 : i32
    %c0_i32_1 = arith.constant 0 : i32
    return %c0_i32, %c0_i32_0 : i32, i32
  }
  func.func @transform_4(%arg0: i32) -> (i32, i32, i32) {
    %c0_i32 = arith.constant 0 : i32
    %c0_i32_0 = arith.constant 0 : i32
    %c0_i32_1 = arith.constant 0 : i32
    return %arg0, %c0_i32, %c0_i32_0 : i32, i32, i32
  }
}

</mosaic_0001>

<llo_original>
// kernel: afnp_block_256.1
$region0: #{afnp_block_256.1}
  #allocation0 [shape = 'u32[]', space=smem, size = 0x4, offset = 0x4, fixed_abs, tag = 'smem constant byte address 0x4 - core index']
  #allocation1 [shape = 'u32[144,128]{1,0:T(1,128)}', space=vmem, size = 0x12000, scoped, tag = 'internal scratch']
  %s0 = inlined_call_operand.vmem [shape: f32[2,256,128], index: 0, kind: input, shape index: {}]
  %s1 = inlined_call_operand.vmem [shape: bf16[512,256], index: 1, kind: input, shape index: {}]
  %s2 = inlined_call_operand.vmem [shape: bf16[128,128], index: 2, kind: input, shape index: {}]
  %s3 = inlined_call_operand.vmem [shape: f32[1,128], index: 3, kind: input, shape index: {}]
  %s4 = inlined_call_operand.hbm [shape: f32[2,256,128], index: 4, kind: output, shape index: {}]
  %s5 = sld [smem:[#allocation0]]
  $region49: #{afnp_block_256.1} parent=0
    _
  %s7 = ssub.s32 1, %s5
  %s8 = scalar_select 0, %s7, %s5
  $region1: #{afnp_block_256.1} parent=0
    #allocation2 [shape = 'u8[262144]{0}', space=vmem, size = 0x40000, scoped, tag = 'output window, operand 0']
    #allocation3 [shape = 's32[2]{0}', space=sflag, size = 0x8, scoped, tag = 'scoped memory for afnp_block_256.1']
    %9 = vsyncpa [#allocation3], 0
    %s10 = scalar_lea.sflag [#allocation3], 1
    %11 = vsyncpa %s10, 0
    loop: start=0, step=1, limit=4
    $region2: #{afnp_block_256.1} parent=1 // loop_pre_header
      _
    $region3: #{afnp_block_256.1} parent=1 // loop_header
      %s13 = sphi 0, %s17
      %p14 = scmp.ge.s32.totalorder %s13, 4
      %s23 = sphi 0, %s25
      %s26 = sphi 0, %s23
      %s27 = sphi 0, %s26
      %s43 = sphi 0, %s27
      %s47 = sphi 0, %s47
      %s49 = sphi 0, %s47
      %s50 = sphi 0, %s49
      %s64 = sphi 0, %s50
      %s68 = sphi 0, %s68
      %s70 = sphi 0, %s68
      %s71 = sphi 0, %s70
      %s85 = sphi 0, %s71
      %s89 = sphi 0, %s89
      %s91 = sphi 0, %s89
      %s92 = sphi 0, %s91
      %s106 = sphi 0, %s92
      %s112 = sphi 0, %s114
      %s115 = sphi 0, %s112
      %s116 = sphi 0, %s115
      %s132 = sphi 0, %s116
    $region4: #{afnp_block_256.1} parent=1 // loop_header_branch
      %16 = sbr.rel (%p14) target = $region8
    $region5: #{afnp_block_256.1} parent=1 // loop_body
      %s18 = ssub.s32 %s13, 1
      %s19 = ssub.s32 %s13, 2
      %s20 = sadd.s32 %s13, 1
      %s21 = ssub.s32 %s13, %s20
      %p22 = scmp.eq.s32.totalorder %s21, 0
      %s24 = sadd.s32 %s23, 1
      %s25 = scalar_select %p22, %s23, %s24
      %p28 = pneg %p22
      %p29 = scmp.eq.s32.totalorder %s13, 1
      %p30 = por %p28, %p29
      %p31 = scmp.ne.s32.totalorder %s23, %s26
      %p32 = scmp.eq.s32.totalorder %s13, 0
      %p33 = por %p31, %p32
      %p34 = scmp.ne.s32.totalorder %s23, %s26
      %p35 = scmp.eq.s32.totalorder %s18, 1
      %p36 = por %p34, %p35
      %p37 = scmp.ne.s32.totalorder %s26, %s27
      %p38 = scmp.eq.s32.totalorder %s18, 0
      %p39 = por %p37, %p38
      %p40 = scmp.ne.s32.totalorder %s26, %s27
      %p41 = scmp.eq.s32.totalorder %s19, 1
      %p42 = por %p40, %p41
      %p44 = scmp.ne.s32.totalorder %s27, %s43
      %p45 = scmp.eq.s32.totalorder %s19, 0
      %p46 = por %p44, %p45
      %s48 = sadd.s32 %s47, 1
      %p51 = scmp.eq.s32.totalorder %s13, 1
      %p52 = scmp.ne.s32.totalorder %s47, %s49
      %p53 = scmp.eq.s32.totalorder %s13, 0
      %p54 = por %p52, %p53
      %p55 = scmp.ne.s32.totalorder %s47, %s49
      %p56 = scmp.eq.s32.totalorder %s18, 1
      %p57 = por %p55, %p56
      %p58 = scmp.ne.s32.totalorder %s49, %s50
      %p59 = scmp.eq.s32.totalorder %s18, 0
      %p60 = por %p58, %p59
      %p61 = scmp.ne.s32.totalorder %s49, %s50
      %p62 = scmp.eq.s32.totalorder %s19, 1
      %p63 = por %p61, %p62
      %p65 = scmp.ne.s32.totalorder %s50, %s64
      %p66 = scmp.eq.s32.totalorder %s19, 0
      %p67 = por %p65, %p66
      %s69 = sadd.s32 %s68, 1
      %p72 = scmp.eq.s32.totalorder %s13, 1
      %p73 = scmp.ne.s32.totalorder %s68, %s70
      %p74 = scmp.eq.s32.totalorder %s13, 0
      %p75 = por %p73, %p74
      %p76 = scmp.ne.s32.totalorder %s68, %s70
      %p77 = scmp.eq.s32.totalorder %s18, 1
      %p78 = por %p76, %p77
      %p79 = scmp.ne.s32.totalorder %s70, %s71
      %p80 = scmp.eq.s32.totalorder %s18, 0
      %p81 = por %p79, %p80
      %p82 = scmp.ne.s32.totalorder %s70, %s71
      %p83 = scmp.eq.s32.totalorder %s19, 1
      %p84 = por %p82, %p83
      %p86 = scmp.ne.s32.totalorder %s71, %s85
      %p87 = scmp.eq.s32.totalorder %s19, 0
      %p88 = por %p86, %p87
      %s90 = sadd.s32 %s89, 1
      %p93 = scmp.eq.s32.totalorder %s13, 1
      %p94 = scmp.ne.s32.totalorder %s89, %s91
      %p95 = scmp.eq.s32.totalorder %s13, 0
      %p96 = por %p94, %p95
      %p97 = scmp.ne.s32.totalorder %s89, %s91
      %p98 = scmp.eq.s32.totalorder %s18, 1
      %p99 = por %p97, %p98
      %p100 = scmp.ne.s32.totalorder %s91, %s92
      %p101 = scmp.eq.s32.totalorder %s18, 0
      %p102 = por %p100, %p101
      %p103 = scmp.ne.s32.totalorder %s91, %s92
      %p104 = scmp.eq.s32.totalorder %s19, 1
      %p105 = por %p103, %p104
      %p107 = scmp.ne.s32.totalorder %s92, %s106
      %p108 = scmp.eq.s32.totalorder %s19, 0
      %p109 = por %p107, %p108
      %s110 = ssub.s32 %s13, %s20
      %p111 = scmp.eq.s32.totalorder %s110, 0
      %s113 = sadd.s32 %s112, 1
      %s114 = scalar_select %p111, %s112, %s113
      %p117 = pneg %p111
      %p118 = scmp.eq.s32.totalorder %s13, 1
      %p119 = por %p117, %p118
      %p120 = scmp.ne.s32.totalorder %s112, %s115
      %p121 = scmp.eq.s32.totalorder %s13, 0
      %p122 = por %p120, %p121
      %p123 = scmp.ne.s32.totalorder %s112, %s115
      %p124 = scmp.eq.s32.totalorder %s18, 1
      %p125 = por %p123, %p124
      %p126 = scmp.ne.s32.totalorder %s115, %s116
      %p127 = scmp.eq.s32.totalorder %s18, 0
      %p128 = por %p126, %p127
      %p129 = scmp.ne.s32.totalorder %s115, %s116
      %p130 = scmp.eq.s32.totalorder %s19, 1
      %p131 = por %p129, %p130
      %p133 = scmp.ne.s32.totalorder %s116, %s132
      %p134 = scmp.eq.s32.totalorder %s19, 0
      %p135 = por %p133, %p134
      %p136 = scmp.le.s32.totalorder 1, %s13
      %p137 = scmp.lt.s32.totalorder %s13, 3
      %p138 = pnand %p136, %p137
      %p139 = pneg %p138
      // Predicated region
      $region9: #{afnp_block_256.1} parent=5 // pred_check
        _
      $region10: #{afnp_block_256.1} parent=5 // pred_check_branch
        %141 = sbr.rel (%p138) target = $region12
      $region11: #{afnp_block_256.1} parent=5 // pred_region
        %s142 = ssub.s32 %s13, 1
        // Predicated region
        $region13: #{afnp_block_256.1} parent=11 // pred_check
          %p143 = pneg %p60
        $region14: #{afnp_block_256.1} parent=11 // pred_check_branch
          %145 = sbr.rel (%p143) target = $region16
        $region15: #{afnp_block_256.1} parent=11 // pred_region
          _
        $region16: #{afnp_block_256.1} parent=11 // pred_fallthru
          _
        // Predicated region
        $region17: #{afnp_block_256.1} parent=11 // pred_check
          %p146 = pneg %p81
        $region18: #{afnp_block_256.1} parent=11 // pred_check_branch
          %148 = sbr.rel (%p146) target = $region20
        $region19: #{afnp_block_256.1} parent=11 // pred_region
          _
        $region20: #{afnp_block_256.1} parent=11 // pred_fallthru
          _
        // Predicated region
        $region21: #{afnp_block_256.1} parent=11 // pred_check
          %p149 = pneg %p102
        $region22: #{afnp_block_256.1} parent=11 // pred_check_branch
          %151 = sbr.rel (%p149) target = $region24
        $region23: #{afnp_block_256.1} parent=11 // pred_region
          _
        $region24: #{afnp_block_256.1} parent=11 // pred_fallthru
          _
      $region12: #{afnp_block_256.1} parent=5 // pred_fallthru
        _
      %p152 = scmp.lt.s32.totalorder %s13, 2
      // Predicated region
      $region25: #{afnp_block_256.1} parent=5 // pred_check
        %p153 = pneg %p152
      $region26: #{afnp_block_256.1} parent=5 // pred_check_branch
        %155 = sbr.rel (%p153) target = $region28
      $region27: #{afnp_block_256.1} parent=5 // pred_region
        // Predicated region
        $region29: #{afnp_block_256.1} parent=27 // pred_check
          %p156 = pneg %p33
        $region30: #{afnp_block_256.1} parent=27 // pred_check_branch
          %158 = sbr.rel (%p156) target = $region32
        $region31: #{afnp_block_256.1} parent=27 // pred_region
          %p159 = scmp.lt.s32.totalorder %s13, 1
          %s160 = scalar_select %p159, %s13, 1
          %s161 = smul.addr %s160, 32
          %s162 = smul.addr %s161, 8
          %s163 = scalar_lea.vmem %s0, %s162
        $region32: #{afnp_block_256.1} parent=27 // pred_fallthru
          _
      $region28: #{afnp_block_256.1} parent=5 // pred_fallthru
        _
      %p164 = scmp.le.s32.totalorder 1, %s13
      %p165 = scmp.lt.s32.totalorder %s13, 3
      %p166 = pnand %p164, %p165
      %p167 = pneg %p166
      // Predicated region
      $region33: #{afnp_block_256.1} parent=5 // pred_check
        _
      $region34: #{afnp_block_256.1} parent=5 // pred_check_branch
        %169 = sbr.rel (%p166) target = $region36
      $region35: #{afnp_block_256.1} parent=5 // pred_region
        %s170 = ssub.s32 %s13, 1
        %p171 = scmp.lt.s32.totalorder %s18, 1
        %s172 = scalar_select %p171, %s18, 1
        %s173 = smul.addr %s172, 32
        %s174 = smul.addr %s173, 8
        %s175 = scalar_lea.vmem %s0, %s174
        %p176 = pneg %p39
        %p177 = pneg %p36
        %p178 = pneg %p60
        %p179 = pneg %p57
        %p180 = pneg %p81
        %p181 = pneg %p78
        %p182 = pneg %p102
        %p183 = pneg %p99
        %p184 = pneg %p128
        %p185 = pneg %p125
        %s186 = sand.u32 %s115, 1
        %s187 = scalar_lea.sflag [#allocation3], %s186
        %s188 = sand.u32 %s115, 1
        %s189 = smul.addr %s188, 256
        %s190 = scalar_lea.vmem [#allocation2], %s189
        %p191 = scmp.lt.s32.totalorder %s18, 1
        %s192 = scalar_select %p191, %s18, 1
        %s193 = smul.addr %s192, 32
        %s194 = smul.addr %s193, 8
        %s195 = scalar_lea.vmem %s0, %s194
        %v197 = vld [vmem:[%s195] sm:$0xff]
        %v198 = vld [vmem:[%s195 + $0x8] sm:$0xff]
        %v199 = vld [vmem:[%s195 + $0x10] sm:$0xff]
        %v200 = vld [vmem:[%s195 + $0x18] sm:$0xff]
        %v201 = vld [vmem:[%s195 + $0x20] sm:$0xff]
        %v202 = vld [vmem:[%s195 + $0x28] sm:$0xff]
        %v203 = vld [vmem:[%s195 + $0x30] sm:$0xff]
        %v204 = vld [vmem:[%s195 + $0x38] sm:$0xff]
        %v205 = vld [vmem:[%s195 + $0x40] sm:$0xff]
        %v206 = vld [vmem:[%s195 + $0x48] sm:$0xff]
        %v207 = vld [vmem:[%s195 + $0x50] sm:$0xff]
        %v208 = vld [vmem:[%s195 + $0x58] sm:$0xff]
        %v209 = vld [vmem:[%s195 + $0x60] sm:$0xff]
        %v210 = vld [vmem:[%s195 + $0x68] sm:$0xff]
        %v211 = vld [vmem:[%s195 + $0x70] sm:$0xff]
        %v212 = vld [vmem:[%s195 + $0x78] sm:$0xff]
        %v213 = vld [vmem:[%s195 + $0x80] sm:$0xff]
        %v214 = vld [vmem:[%s195 + $0x88] sm:$0xff]
        %v215 = vld [vmem:[%s195 + $0x90] sm:$0xff]
        %v216 = vld [vmem:[%s195 + $0x98] sm:$0xff]
        %v217 = vld [vmem:[%s195 + $0xa0] sm:$0xff]
        %v218 = vld [vmem:[%s195 + $0xa8] sm:$0xff]
        %v219 = vld [vmem:[%s195 + $0xb0] sm:$0xff]
        %v220 = vld [vmem:[%s195 + $0xb8] sm:$0xff]
        %v221 = vld [vmem:[%s195 + $0xc0] sm:$0xff]
        %v222 = vld [vmem:[%s195 + $0xc8] sm:$0xff]
        %v223 = vld [vmem:[%s195 + $0xd0] sm:$0xff]
        %v224 = vld [vmem:[%s195 + $0xd8] sm:$0xff]
        %v225 = vld [vmem:[%s195 + $0xe0] sm:$0xff]
        %v226 = vld [vmem:[%s195 + $0xe8] sm:$0xff]
        %v227 = vld [vmem:[%s195 + $0xf0] sm:$0xff]
        %v228 = vld [vmem:[%s195 + $0xf8] sm:$0xff]
        %v229 = vpack.c.bf16 %v198, %v197
        %v230 = vpack.c.bf16 %v200, %v199
        %v231 = vpack.c.bf16 %v202, %v201
        %v232 = vpack.c.bf16 %v204, %v203
        %v233 = vpack.c.bf16 %v206, %v205
        %v234 = vpack.c.bf16 %v208, %v207
        %v235 = vpack.c.bf16 %v210, %v209
        %v236 = vpack.c.bf16 %v212, %v211
        %v237 = vpack.c.bf16 %v214, %v213
        %v238 = vpack.c.bf16 %v216, %v215
        %v239 = vpack.c.bf16 %v218, %v217
        %v240 = vpack.c.bf16 %v220, %v219
        %v241 = vpack.c.bf16 %v222, %v221
        %v242 = vpack.c.bf16 %v224, %v223
        %v243 = vpack.c.bf16 %v226, %v225
        %v244 = vpack.c.bf16 %v228, %v227
        %v245 = vld [vmem:[%s1] sm:$0xff]
        %v246 = vld [vmem:[%s1 + $0x8] sm:$0xff]
        %v247 = vld [vmem:[%s1 + $0x10] sm:$0xff]
        %v248 = vld [vmem:[%s1 + $0x18] sm:$0xff]
        %v249 = vld [vmem:[%s1 + $0x20] sm:$0xff]
        %v250 = vld [vmem:[%s1 + $0x28] sm:$0xff]
        %v251 = vld [vmem:[%s1 + $0x30] sm:$0xff]
        %v252 = vld [vmem:[%s1 + $0x38] sm:$0xff]
        %v253 = vld [vmem:[%s1 + $0x40] sm:$0xff]
        %v254 = vld [vmem:[%s1 + $0x48] sm:$0xff]
        %v255 = vld [vmem:[%s1 + $0x50] sm:$0xff]
        %v256 = vld [vmem:[%s1 + $0x58] sm:$0xff]
        %v257 = vld [vmem:[%s1 + $0x60] sm:$0xff]
        %v258 = vld [vmem:[%s1 + $0x68] sm:$0xff]
        %v259 = vld [vmem:[%s1 + $0x70] sm:$0xff]
        %v260 = vld [vmem:[%s1 + $0x78] sm:$0xff]
        %v261 = vld [vmem:[%s1 + $0x80] sm:$0xff]
        %v262 = vld [vmem:[%s1 + $0x88] sm:$0xff]
        %v263 = vld [vmem:[%s1 + $0x90] sm:$0xff]
        %v264 = vld [vmem:[%s1 + $0x98] sm:$0xff]
        %v265 = vld [vmem:[%s1 + $0xa0] sm:$0xff]
        %v266 = vld [vmem:[%s1 + $0xa8] sm:$0xff]
        %v267 = vld [vmem:[%s1 + $0xb0] sm:$0xff]
        %v268 = vld [vmem:[%s1 + $0xb8] sm:$0xff]
        %v269 = vld [vmem:[%s1 + $0xc0] sm:$0xff]
        %v270 = vld [vmem:[%s1 + $0xc8] sm:$0xff]
        %v271 = vld [vmem:[%s1 + $0xd0] sm:$0xff]
        %v272 = vld [vmem:[%s1 + $0xd8] sm:$0xff]
        %v273 = vld [vmem:[%s1 + $0xe0] sm:$0xff]
        %v274 = vld [vmem:[%s1 + $0xe8] sm:$0xff]
        %v275 = vld [vmem:[%s1 + $0xf0] sm:$0xff]
        %v276 = vld [vmem:[%s1 + $0xf8] sm:$0xff]
        %v277 = vld [vmem:[%s1 + $0x100] sm:$0xff]
        %v278 = vld [vmem:[%s1 + $0x108] sm:$0xff]
        %v279 = vld [vmem:[%s1 + $0x110] sm:$0xff]
        %v280 = vld [vmem:[%s1 + $0x118] sm:$0xff]
        %v281 = vld [vmem:[%s1 + $0x120] sm:$0xff]
        %v282 = vld [vmem:[%s1 + $0x128] sm:$0xff]
        %v283 = vld [vmem:[%s1 + $0x130] sm:$0xff]
        %v284 = vld [vmem:[%s1 + $0x138] sm:$0xff]
        %v285 = vld [vmem:[%s1 + $0x140] sm:$0xff]
        %v286 = vld [vmem:[%s1 + $0x148] sm:$0xff]
        %v287 = vld [vmem:[%s1 + $0x150] sm:$0xff]
        %v288 = vld [vmem:[%s1 + $0x158] sm:$0xff]
        %v289 = vld [vmem:[%s1 + $0x160] sm:$0xff]
        %v290 = vld [vmem:[%s1 + $0x168] sm:$0xff]
        %v291 = vld [vmem:[%s1 + $0x170] sm:$0xff]
        %v292 = vld [vmem:[%s1 + $0x178] sm:$0xff]
        %v293 = vld [vmem:[%s1 + $0x180] sm:$0xff]
        %v294 = vld [vmem:[%s1 + $0x188] sm:$0xff]
        %v295 = vld [vmem:[%s1 + $0x190] sm:$0xff]
        %v296 = vld [vmem:[%s1 + $0x198] sm:$0xff]
        %v297 = vld [vmem:[%s1 + $0x1a0] sm:$0xff]
        %v298 = vld [vmem:[%s1 + $0x1a8] sm:$0xff]
        %v299 = vld [vmem:[%s1 + $0x1b0] sm:$0xff]
        %v300 = vld [vmem:[%s1 + $0x1b8] sm:$0xff]
        %v301 = vld [vmem:[%s1 + $0x1c0] sm:$0xff]
        %v302 = vld [vmem:[%s1 + $0x1c8] sm:$0xff]
        %v303 = vld [vmem:[%s1 + $0x1d0] sm:$0xff]
        %v304 = vld [vmem:[%s1 + $0x1d8] sm:$0xff]
        %v305 = vld [vmem:[%s1 + $0x1e0] sm:$0xff]
        %v306 = vld [vmem:[%s1 + $0x1e8] sm:$0xff]
        %v307 = vld [vmem:[%s1 + $0x1f0] sm:$0xff]
        %v308 = vld [vmem:[%s1 + $0x1f8] sm:$0xff]
        %v373 = vunpack.c.l.b16 %v245
        %v374 = vunpack.c.h.b16 %v245
        %v375 = vunpack.c.l.b16 %v246
        %v376 = vunpack.c.h.b16 %v246
        %v377 = vunpack.c.l.b16 %v247
        %v378 = vunpack.c.h.b16 %v247
        %v379 = vunpack.c.l.b16 %v248
        %v380 = vunpack.c.h.b16 %v248
        %v381 = vunpack.c.l.b16 %v249
        %v382 = vunpack.c.h.b16 %v249
        %v383 = vunpack.c.l.b16 %v250
        %v384 = vunpack.c.h.b16 %v250
        %v385 = vunpack.c.l.b16 %v251
        %v386 = vunpack.c.h.b16 %v251
        %v387 = vunpack.c.l.b16 %v252
        %v388 = vunpack.c.h.b16 %v252
        %v389 = vunpack.c.l.b16 %v253
        %v390 = vunpack.c.h.b16 %v253
        %v391 = vunpack.c.l.b16 %v254
        %v392 = vunpack.c.h.b16 %v254
        %v393 = vunpack.c.l.b16 %v255
        %v394 = vunpack.c.h.b16 %v255
        %v395 = vunpack.c.l.b16 %v256
        %v396 = vunpack.c.h.b16 %v256
        %v397 = vunpack.c.l.b16 %v257
        %v398 = vunpack.c.h.b16 %v257
        %v399 = vunpack.c.l.b16 %v258
        %v400 = vunpack.c.h.b16 %v258
        %v401 = vunpack.c.l.b16 %v259
        %v402 = vunpack.c.h.b16 %v259
        %v403 = vunpack.c.l.b16 %v260
        %v404 = vunpack.c.h.b16 %v260
        %v405 = vunpack.c.l.b16 %v261
        %v406 = vunpack.c.h.b16 %v261
        %v407 = vunpack.c.l.b16 %v262
        %v408 = vunpack.c.h.b16 %v262
        %v409 = vunpack.c.l.b16 %v263
        %v410 = vunpack.c.h.b16 %v263
        %v411 = vunpack.c.l.b16 %v264
        %v412 = vunpack.c.h.b16 %v264
        %v413 = vunpack.c.l.b16 %v265
        %v414 = vunpack.c.h.b16 %v265
        %v415 = vunpack.c.l.b16 %v266
        %v416 = vunpack.c.h.b16 %v266
        %v417 = vunpack.c.l.b16 %v267
        %v418 = vunpack.c.h.b16 %v267
        %v419 = vunpack.c.l.b16 %v268
        %v420 = vunpack.c.h.b16 %v268
        %v421 = vunpack.c.l.b16 %v269
        %v422 = vunpack.c.h.b16 %v269
        %v423 = vunpack.c.l.b16 %v270
        %v424 = vunpack.c.h.b16 %v270
        %v425 = vunpack.c.l.b16 %v271
        %v426 = vunpack.c.h.b16 %v271
        %v427 = vunpack.c.l.b16 %v272
        %v428 = vunpack.c.h.b16 %v272
        %v429 = vunpack.c.l.b16 %v273
        %v430 = vunpack.c.h.b16 %v273
        %v431 = vunpack.c.l.b16 %v274
        %v432 = vunpack.c.h.b16 %v274
        %v433 = vunpack.c.l.b16 %v275
        %v434 = vunpack.c.h.b16 %v275
        %v435 = vunpack.c.l.b16 %v276
        %v436 = vunpack.c.h.b16 %v276
        %v437 = vunpack.c.l.b16 %v277
        %v438 = vunpack.c.h.b16 %v277
        %v439 = vunpack.c.l.b16 %v278
        %v440 = vunpack.c.h.b16 %v278
        %v441 = vunpack.c.l.b16 %v279
        %v442 = vunpack.c.h.b16 %v279
        %v443 = vunpack.c.l.b16 %v280
        %v444 = vunpack.c.h.b16 %v280
        %v445 = vunpack.c.l.b16 %v281
        %v446 = vunpack.c.h.b16 %v281
        %v447 = vunpack.c.l.b16 %v282
        %v448 = vunpack.c.h.b16 %v282
        %v449 = vunpack.c.l.b16 %v283
        %v450 = vunpack.c.h.b16 %v283
        %v451 = vunpack.c.l.b16 %v284
        %v452 = vunpack.c.h.b16 %v284
        %v453 = vunpack.c.l.b16 %v285
        %v454 = vunpack.c.h.b16 %v285
        %v455 = vunpack.c.l.b16 %v286
        %v456 = vunpack.c.h.b16 %v286
        %v457 = vunpack.c.l.b16 %v287
        %v458 = vunpack.c.h.b16 %v287
        %v459 = vunpack.c.l.b16 %v288
        %v460 = vunpack.c.h.b16 %v288
        %v461 = vunpack.c.l.b16 %v289
        %v462 = vunpack.c.h.b16 %v289
        %v463 = vunpack.c.l.b16 %v290
        %v464 = vunpack.c.h.b16 %v290
        %v465 = vunpack.c.l.b16 %v291
        %v466 = vunpack.c.h.b16 %v291
        %v467 = vunpack.c.l.b16 %v292
        %v468 = vunpack.c.h.b16 %v292
        %v469 = vunpack.c.l.b16 %v293
        %v470 = vunpack.c.h.b16 %v293
        %v471 = vunpack.c.l.b16 %v294
        %v472 = vunpack.c.h.b16 %v294
        %v473 = vunpack.c.l.b16 %v295
        %v474 = vunpack.c.h.b16 %v295
        %v475 = vunpack.c.l.b16 %v296
        %v476 = vunpack.c.h.b16 %v296
        %v477 = vunpack.c.l.b16 %v297
        %v478 = vunpack.c.h.b16 %v297
        %v479 = vunpack.c.l.b16 %v298
        %v480 = vunpack.c.h.b16 %v298
        %v481 = vunpack.c.l.b16 %v299
        %v482 = vunpack.c.h.b16 %v299
        %v483 = vunpack.c.l.b16 %v300
        %v484 = vunpack.c.h.b16 %v300
        %v485 = vunpack.c.l.b16 %v301
        %v486 = vunpack.c.h.b16 %v301
        %v487 = vunpack.c.l.b16 %v302
        %v488 = vunpack.c.h.b16 %v302
        %v489 = vunpack.c.l.b16 %v303
        %v490 = vunpack.c.h.b16 %v303
        %v491 = vunpack.c.l.b16 %v304
        %v492 = vunpack.c.h.b16 %v304
        %v493 = vunpack.c.l.b16 %v305
        %v494 = vunpack.c.h.b16 %v305
        %v495 = vunpack.c.l.b16 %v306
        %v496 = vunpack.c.h.b16 %v306
        %v497 = vunpack.c.l.b16 %v307
        %v498 = vunpack.c.h.b16 %v307
        %v499 = vunpack.c.l.b16 %v308
        %v500 = vunpack.c.h.b16 %v308
        %v501 = vpack.c.b16 %v375, %v373
        %v502 = vpack.c.b16 %v376, %v374
        %v503 = vpack.c.b16 %v379, %v377
        %v504 = vpack.c.b16 %v380, %v378
        %v505 = vpack.c.b16 %v383, %v381
        %v506 = vpack.c.b16 %v384, %v382
        %v507 = vpack.c.b16 %v387, %v385
        %v508 = vpack.c.b16 %v388, %v386
        %v509 = vpack.c.b16 %v391, %v389
        %v510 = vpack.c.b16 %v392, %v390
        %v511 = vpack.c.b16 %v395, %v393
        %v512 = vpack.c.b16 %v396, %v394
        %v513 = vpack.c.b16 %v399, %v397
        %v514 = vpack.c.b16 %v400, %v398
        %v515 = vpack.c.b16 %v403, %v401
        %v516 = vpack.c.b16 %v404, %v402
        %v517 = vpack.c.b16 %v407, %v405
        %v518 = vpack.c.b16 %v408, %v406
        %v519 = vpack.c.b16 %v411, %v409
        %v520 = vpack.c.b16 %v412, %v410
        %v521 = vpack.c.b16 %v415, %v413
        %v522 = vpack.c.b16 %v416, %v414
        %v523 = vpack.c.b16 %v419, %v417
        %v524 = vpack.c.b16 %v420, %v418
        %v525 = vpack.c.b16 %v423, %v421
        %v526 = vpack.c.b16 %v424, %v422
        %v527 = vpack.c.b16 %v427, %v425
        %v528 = vpack.c.b16 %v428, %v426
        %v529 = vpack.c.b16 %v431, %v429
        %v530 = vpack.c.b16 %v432, %v430
        %v531 = vpack.c.b16 %v435, %v433
        %v532 = vpack.c.b16 %v436, %v434
        %v533 = vpack.c.b16 %v439, %v437
        %v534 = vpack.c.b16 %v440, %v438
        %v535 = vpack.c.b16 %v443, %v441
        %v536 = vpack.c.b16 %v444, %v442
        %v537 = vpack.c.b16 %v447, %v445
        %v538 = vpack.c.b16 %v448, %v446
        %v539 = vpack.c.b16 %v451, %v449
        %v540 = vpack.c.b16 %v452, %v450
        %v541 = vpack.c.b16 %v455, %v453
        %v542 = vpack.c.b16 %v456, %v454
        %v543 = vpack.c.b16 %v459, %v457
        %v544 = vpack.c.b16 %v460, %v458
        %v545 = vpack.c.b16 %v463, %v461
        %v546 = vpack.c.b16 %v464, %v462
        %v547 = vpack.c.b16 %v467, %v465
        %v548 = vpack.c.b16 %v468, %v466
        %v549 = vpack.c.b16 %v471, %v469
        %v550 = vpack.c.b16 %v472, %v470
        %v551 = vpack.c.b16 %v475, %v473
        %v552 = vpack.c.b16 %v476, %v474
        %v553 = vpack.c.b16 %v479, %v477
        %v554 = vpack.c.b16 %v480, %v478
        %v555 = vpack.c.b16 %v483, %v481
        %v556 = vpack.c.b16 %v484, %v482
        %v557 = vpack.c.b16 %v487, %v485
        %v558 = vpack.c.b16 %v488, %v486
        %v559 = vpack.c.b16 %v491, %v489
        %v560 = vpack.c.b16 %v492, %v490
        %v561 = vpack.c.b16 %v495, %v493
        %v562 = vpack.c.b16 %v496, %v494
        %v563 = vpack.c.b16 %v499, %v497
        %v564 = vpack.c.b16 %v500, %v498
        %629 = vmatprep.subr.bf16.mxu0 0
        %630 = vmatpush1.bf16.msra.mxu0 %v229
        %631 = vmatprep.subr.bf16.mxu0 0
        %632 = vmatpush1.bf16.msra.mxu0 %v230
        %633 = vmatprep.subr.bf16.mxu0 0
        %634 = vmatpush1.bf16.msra.mxu0 %v231
        %635 = vmatprep.subr.bf16.mxu0 0
        %636 = vmatpush1.bf16.msra.mxu0 %v232
        %637 = vmatprep.subr.bf16.mxu0 0
        %638 = vmatpush1.bf16.msra.mxu0 %v233
        %639 = vmatprep.subr.bf16.mxu0 0
        %640 = vmatpush1.bf16.msra.mxu0 %v234
        %641 = vmatprep.subr.bf16.mxu0 0
        %642 = vmatpush1.bf16.msra.mxu0 %v235
        %643 = vmatprep.subr.bf16.mxu0 0
        %644 = vmatpush1.bf16.msra.mxu0 %v236
        %645 = vmatprep.subr.bf16.mxu0 0
        %646 = vmatpush1.bf16.msra.mxu0 %v237
        %647 = vmatprep.subr.bf16.mxu0 0
        %648 = vmatpush1.bf16.msra.mxu0 %v238
        %649 = vmatprep.subr.bf16.mxu0 0
        %650 = vmatpush1.bf16.msra.mxu0 %v239
        %651 = vmatprep.subr.bf16.mxu0 0
        %652 = vmatpush1.bf16.msra.mxu0 %v240
        %653 = vmatprep.subr.bf16.mxu0 0
        %654 = vmatpush1.bf16.msra.mxu0 %v241
        %655 = vmatprep.subr.bf16.mxu0 0
        %656 = vmatpush1.bf16.msra.mxu0 %v242
        %657 = vmatprep.subr.bf16.mxu0 0
        %658 = vmatpush1.bf16.msra.mxu0 %v243
        %659 = vmatprep.subr.bf16.mxu0 0
        %660 = vmatpush1.bf16.msra.mxu0 %v244
        %661 = vmatprep.mubr.bf16.mxu0 %v502
        %662 = vmatmul.mubr.bf16.gmra.mrb[0].mxu0 %v501
        %v663 = vpop.f32.mrb[0].mxu0
        %v664 = vadd.f32 0.0, %v663
        %v665 = vpop.f32.mrb[0].mxu0
        %v666 = vpop.f32.mrb[0].mxu0
        %v667 = vadd.f32 0.0, %v666
        %v668 = vpop.f32.mrb[0].mxu0
        %669 = vmatprep.mubr.bf16.mxu0 %v504
        %670 = vmatmul.mubr.bf16.gmra.mrb[0].mxu0 %v503
        %v671 = vpop.f32.mrb[0].mxu0
        %v672 = vadd.f32 0.0, %v671
        %v673 = vpop.f32.mrb[0].mxu0
        %v674 = vpop.f32.mrb[0].mxu0
        %v675 = vadd.f32 0.0, %v674
        %v676 = vpop.f32.mrb[0].mxu0
        %677 = vmatprep.mubr.bf16.mxu0 %v506
        %678 = vmatmul.mubr.bf16.gmra.mrb[0].mxu0 %v505
        %v679 = vpop.f32.mrb[0].mxu0
        %v680 = vadd.f32 0.0, %v679
        %v681 = vpop.f32.mrb[0].mxu0
        %v682 = vpop.f32.mrb[0].mxu0
        %v683 = vadd.f32 0.0, %v682
        %v684 = vpop.f32.mrb[0].mxu0
        %685 = vmatprep.mubr.bf16.mxu0 %v508
        %686 = vmatmul.mubr.bf16.gmra.mrb[0].mxu0 %v507
        %v687 = vpop.f32.mrb[0].mxu0
        %v688 = vadd.f32 0.0, %v687
        %v689 = vpop.f32.mrb[0].mxu0
        %v690 = vpop.f32.mrb[0].mxu0
        %v691 = vadd.f32 0.0, %v690
        %v692 = vpop.f32.mrb[0].mxu0
        %693 = vmatprep.mubr.bf16.mxu0 %v510
        %694 = vmatmul.mubr.bf16.gmra.mrb[0].mxu0 %v509
        %v695 = vpop.f32.mrb[0].mxu0
        %v696 = vadd.f32 0.0, %v695
        %v697 = vpop.f32.mrb[0].mxu0
        %v698 = vpop.f32.mrb[0].mxu0
        %v699 = vadd.f32 0.0, %v698
        %v700 = vpop.f32.mrb[0].mxu0
        %701 = vmatprep.mubr.bf16.mxu0 %v512
        %702 = vmatmul.mubr.bf16.gmra.mrb[0].mxu0 %v511
        %v703 = vpop.f32.mrb[0].mxu0
        %v704 = vadd.f32 0.0, %v703
        %v705 = vpop.f32.mrb[0].mxu0
        %v706 = vpop.f32.mrb[0].mxu0
        %v707 = vadd.f32 0.0, %v706
        %v708 = vpop.f32.mrb[0].mxu0
        %709 = vmatprep.mubr.bf16.mxu0 %v514
        %710 = vmatmul.mubr.bf16.gmra.mrb[0].mxu0 %v513
        %v711 = vpop.f32.mrb[0].mxu0
        %v712 = vadd.f32 0.0, %v711
        %v713 = vpop.f32.mrb[0].mxu0
        %v714 = vpop.f32.mrb[0].mxu0
        %v715 = vadd.f32 0.0, %v714
        %v716 = vpop.f32.mrb[0].mxu0
        %717 = vmatprep.mubr.bf16.mxu0 %v516
        %718 = vmatmul.mubr.bf16.gmra.mrb[0].mxu0 %v515
        %v719 = vpop.f32.mrb[0].mxu0
        %v720 = vadd.f32 0.0, %v719
        %v721 = vpop.f32.mrb[0].mxu0
        %v722 = vpop.f32.mrb[0].mxu0
        %v723 = vadd.f32 0.0, %v722
        %v724 = vpop.f32.mrb[0].mxu0
        %725 = vmatprep.mubr.bf16.mxu0 %v518
        %726 = vmatmul.mubr.bf16.gmra.mrb[0].mxu0 %v517
        %v727 = vpop.f32.mrb[0].mxu0
        %v728 = vadd.f32 0.0, %v727
        %v729 = vpop.f32.mrb[0].mxu0
        %v730 = vpop.f32.mrb[0].mxu0
        %v731 = vadd.f32 0.0, %v730
        %v732 = vpop.f32.mrb[0].mxu0
        %733 = vmatprep.mubr.bf16.mxu0 %v520
        %734 = vmatmul.mubr.bf16.gmra.mrb[0].mxu0 %v519
        %v735 = vpop.f32.mrb[0].mxu0
        %v736 = vadd.f32 0.0, %v735
        %v737 = vpop.f32.mrb[0].mxu0
        %v738 = vpop.f32.mrb[0].mxu0
        %v739 = vadd.f32 0.0, %v738
        %v740 = vpop.f32.mrb[0].mxu0
        %741 = vmatprep.mubr.bf16.mxu0 %v522
        %742 = vmatmul.mubr.bf16.gmra.mrb[0].mxu0 %v521
        %v743 = vpop.f32.mrb[0].mxu0
        %v744 = vadd.f32 0.0, %v743
        %v745 = vpop.f32.mrb[0].mxu0
        %v746 = vpop.f32.mrb[0].mxu0
        %v747 = vadd.f32 0.0, %v746
        %v748 = vpop.f32.mrb[0].mxu0
        %749 = vmatprep.mubr.bf16.mxu0 %v524
        %750 = vmatmul.mubr.bf16.gmra.mrb[0].mxu0 %v523
        %v751 = vpop.f32.mrb[0].mxu0
        %v752 = vadd.f32 0.0, %v751
        %v753 = vpop.f32.mrb[0].mxu0
        %v754 = vpop.f32.mrb[0].mxu0
        %v755 = vadd.f32 0.0, %v754
        %v756 = vpop.f32.mrb[0].mxu0
        %757 = vmatprep.mubr.bf16.mxu0 %v526
        %758 = vmatmul.mubr.bf16.gmra.mrb[0].mxu0 %v525
        %v759 = vpop.f32.mrb[0].mxu0
        %v760 = vadd.f32 0.0, %v759
        %v761 = vpop.f32.mrb[0].mxu0
        %v762 = vpop.f32.mrb[0].mxu0
        %v763 = vadd.f32 0.0, %v762
        %v764 = vpop.f32.mrb[0].mxu0
        %765 = vmatprep.mubr.bf16.mxu0 %v528
        %766 = vmatmul.mubr.bf16.gmra.mrb[0].mxu0 %v527
        %v767 = vpop.f32.mrb[0].mxu0
        %v768 = vadd.f32 0.0, %v767
        %v769 = vpop.f32.mrb[0].mxu0
        %v770 = vpop.f32.mrb[0].mxu0
        %v771 = vadd.f32 0.0, %v770
        %v772 = vpop.f32.mrb[0].mxu0
        %773 = vmatprep.mubr.bf16.mxu0 %v530
        %774 = vmatmul.mubr.bf16.gmra.mrb[0].mxu0 %v529
        %v775 = vpop.f32.mrb[0].mxu0
        %v776 = vadd.f32 0.0, %v775
        %v777 = vpop.f32.mrb[0].mxu0
        %v778 = vpop.f32.mrb[0].mxu0
        %v779 = vadd.f32 0.0, %v778
        %v780 = vpop.f32.mrb[0].mxu0
        %781 = vmatprep.mubr.bf16.mxu0 %v532
        %782 = vmatmul.mubr.bf16.gmra.mrb[0].mxu0 %v531
        %v783 = vpop.f32.mrb[0].mxu0
        %v784 = vadd.f32 0.0, %v783
        %v785 = vpop.f32.mrb[0].mxu0
        %v786 = vpop.f32.mrb[0].mxu0
        %v787 = vadd.f32 0.0, %v786
        %v788 = vpop.f32.mrb[0].mxu0
        %789 = vmatprep.mubr.bf16.mxu0 %v534
        %790 = vmatmul.mubr.bf16.gmra.mrb[0].mxu0 %v533
        %v791 = vpop.f32.mrb[0].mxu0
        %v792 = vadd.f32 0.0, %v791
        %v793 = vpop.f32.mrb[0].mxu0
        %v794 = vpop.f32.mrb[0].mxu0
        %v795 = vadd.f32 0.0, %v794
        %v796 = vpop.f32.mrb[0].mxu0
        %797 = vmatprep.mubr.bf16.mxu0 %v536
        %798 = vmatmul.mubr.bf16.gmra.mrb[0].mxu0 %v535
        %v799 = vpop.f32.mrb[0].mxu0
        %v800 = vadd.f32 0.0, %v799
        %v801 = vpop.f32.mrb[0].mxu0
        %v802 = vpop.f32.mrb[0].mxu0
        %v803 = vadd.f32 0.0, %v802
        %v804 = vpop.f32.mrb[0].mxu0
        %805 = vmatprep.mubr.bf16.mxu0 %v538
        %806 = vmatmul.mubr.bf16.gmra.mrb[0].mxu0 %v537
        %v807 = vpop.f32.mrb[0].mxu0
        %v808 = vadd.f32 0.0, %v807
        %v809 = vpop.f32.mrb[0].mxu0
        %v810 = vpop.f32.mrb[0].mxu0
        %v811 = vadd.f32 0.0, %v810
        %v812 = vpop.f32.mrb[0].mxu0
        %813 = vmatprep.mubr.bf16.mxu0 %v540
        %814 = vmatmul.mubr.bf16.gmra.mrb[0].mxu0 %v539
        %v815 = vpop.f32.mrb[0].mxu0
        %v816 = vadd.f32 0.0, %v815
        %v817 = vpop.f32.mrb[0].mxu0
        %v818 = vpop.f32.mrb[0].mxu0
        %v819 = vadd.f32 0.0, %v818
        %v820 = vpop.f32.mrb[0].mxu0
        %821 = vmatprep.mubr.bf16.mxu0 %v542
        %822 = vmatmul.mubr.bf16.gmra.mrb[0].mxu0 %v541
        %v823 = vpop.f32.mrb[0].mxu0
        %v824 = vadd.f32 0.0, %v823
        %v825 = vpop.f32.mrb[0].mxu0
        %v826 = vpop.f32.mrb[0].mxu0
        %v827 = vadd.f32 0.0, %v826
        %v828 = vpop.f32.mrb[0].mxu0
        %829 = vmatprep.mubr.bf16.mxu0 %v544
        %830 = vmatmul.mubr.bf16.gmra.mrb[0].mxu0 %v543
        %v831 = vpop.f32.mrb[0].mxu0
        %v832 = vadd.f32 0.0, %v831
        %v833 = vpop.f32.mrb[0].mxu0
        %v834 = vpop.f32.mrb[0].mxu0
        %v835 = vadd.f32 0.0, %v834
        %v836 = vpop.f32.mrb[0].mxu0
        %837 = vmatprep.mubr.bf16.mxu0 %v546
        %838 = vmatmul.mubr.bf16.gmra.mrb[0].mxu0 %v545
        %v839 = vpop.f32.mrb[0].mxu0
        %v840 = vadd.f32 0.0, %v839
        %v841 = vpop.f32.mrb[0].mxu0
        %v842 = vpop.f32.mrb[0].mxu0
        %v843 = vadd.f32 0.0, %v842
        %v844 = vpop.f32.mrb[0].mxu0
        %845 = vmatprep.mubr.bf16.mxu0 %v548
        %846 = vmatmul.mubr.bf16.gmra.mrb[0].mxu0 %v547
        %v847 = vpop.f32.mrb[0].mxu0
        %v848 = vadd.f32 0.0, %v847
        %v849 = vpop.f32.mrb[0].mxu0
        %v850 = vpop.f32.mrb[0].mxu0
        %v851 = vadd.f32 0.0, %v850
        %v852 = vpop.f32.mrb[0].mxu0
        %853 = vmatprep.mubr.bf16.mxu0 %v550
        %854 = vmatmul.mubr.bf16.gmra.mrb[0].mxu0 %v549
        %v855 = vpop.f32.mrb[0].mxu0
        %v856 = vadd.f32 0.0, %v855
        %v857 = vpop.f32.mrb[0].mxu0
        %v858 = vpop.f32.mrb[0].mxu0
        %v859 = vadd.f32 0.0, %v858
        %v860 = vpop.f32.mrb[0].mxu0
        %861 = vmatprep.mubr.bf16.mxu0 %v552
        %862 = vmatmul.mubr.bf16.gmra.mrb[0].mxu0 %v551
        %v863 = vpop.f32.mrb[0].mxu0
        %v864 = vadd.f32 0.0, %v863
        %v865 = vpop.f32.mrb[0].mxu0
        %v866 = vpop.f32.mrb[0].mxu0
        %v867 = vadd.f32 0.0, %v866
        %v868 = vpop.f32.mrb[0].mxu0
        %869 = vmatprep.mubr.bf16.mxu0 %v554
        %870 = vmatmul.mubr.bf16.gmra.mrb[0].mxu0 %v553
        %v871 = vpop.f32.mrb[0].mxu0
        %v872 = vadd.f32 0.0, %v871
        %v873 = vpop.f32.mrb[0].mxu0
        %v874 = vpop.f32.mrb[0].mxu0
        %v875 = vadd.f32 0.0, %v874
        %v876 = vpop.f32.mrb[0].mxu0
        %877 = vmatprep.mubr.bf16.mxu0 %v556
        %878 = vmatmul.mubr.bf16.gmra.mrb[0].mxu0 %v555
        %v879 = vpop.f32.mrb[0].mxu0
        %v880 = vadd.f32 0.0, %v879
        %v881 = vpop.f32.mrb[0].mxu0
        %v882 = vpop.f32.mrb[0].mxu0
        %v883 = vadd.f32 0.0, %v882
        %v884 = vpop.f32.mrb[0].mxu0
        %885 = vmatprep.mubr.bf16.mxu0 %v558
        %886 = vmatmul.mubr.bf16.gmra.mrb[0].mxu0 %v557
        %v887 = vpop.f32.mrb[0].mxu0
        %v888 = vadd.f32 0.0, %v887
        %v889 = vpop.f32.mrb[0].mxu0
        %v890 = vpop.f32.mrb[0].mxu0
        %v891 = vadd.f32 0.0, %v890
        %v892 = vpop.f32.mrb[0].mxu0
        %893 = vmatprep.mubr.bf16.mxu0 %v560
        %894 = vmatmul.mubr.bf16.gmra.mrb[0].mxu0 %v559
        %v895 = vpop.f32.mrb[0].mxu0
        %v896 = vadd.f32 0.0, %v895
        %v897 = vpop.f32.mrb[0].mxu0
        %v898 = vpop.f32.mrb[0].mxu0
        %v899 = vadd.f32 0.0, %v898
        %v900 = vpop.f32.mrb[0].mxu0
        %901 = vmatprep.mubr.bf16.mxu0 %v562
        %902 = vmatmul.mubr.bf16.gmra.mrb[0].mxu0 %v561
        %v903 = vpop.f32.mrb[0].mxu0
        %v904 = vadd.f32 0.0, %v903
        %v905 = vpop.f32.mrb[0].mxu0
        %v906 = vpop.f32.mrb[0].mxu0
        %v907 = vadd.f32 0.0, %v906
        %v908 = vpop.f32.mrb[0].mxu0
        %909 = vmatprep.mubr.bf16.mxu0 %v564
        %910 = vmatmul.mubr.bf16.gmra.mrb[0].mxu0 %v563
        %v911 = vpop.f32.mrb[0].mxu0
        %v912 = vadd.f32 0.0, %v911
        %v913 = vpop.f32.mrb[0].mxu0
        %v914 = vpop.f32.mrb[0].mxu0
        %v915 = vadd.f32 0.0, %v914
        %v916 = vpop.f32.mrb[0].mxu0
        %917 = vdwg.mxu0
        %v918 = vpack.c.bf16 %v667, %v664
        %v919 = vpack.c.bf16 %v675, %v672
        %v920 = vpack.c.bf16 %v683, %v680
        %v921 = vpack.c.bf16 %v691, %v688
        %v922 = vpack.c.bf16 %v699, %v696
        %v923 = vpack.c.bf16 %v707, %v704
        %v924 = vpack.c.bf16 %v715, %v712
        %v925 = vpack.c.bf16 %v723, %v720
        %v926 = vpack.c.bf16 %v731, %v728
        %v927 = vpack.c.bf16 %v739, %v736
        %v928 = vpack.c.bf16 %v747, %v744
        %v929 = vpack.c.bf16 %v755, %v752
        %v930 = vpack.c.bf16 %v763, %v760
        %v931 = vpack.c.bf16 %v771, %v768
        %v932 = vpack.c.bf16 %v779, %v776
        %v933 = vpack.c.bf16 %v787, %v784
        %v934 = vpack.c.bf16 %v795, %v792
        %v935 = vpack.c.bf16 %v803, %v800
        %v936 = vpack.c.bf16 %v811, %v808
        %v937 = vpack.c.bf16 %v819, %v816
        %v938 = vpack.c.bf16 %v827, %v824
        %v939 = vpack.c.bf16 %v835, %v832
        %v940 = vpack.c.bf16 %v843, %v840
        %v941 = vpack.c.bf16 %v851, %v848
        %v942 = vpack.c.bf16 %v859, %v856
        %v943 = vpack.c.bf16 %v867, %v864
        %v944 = vpack.c.bf16 %v875, %v872
        %v945 = vpack.c.bf16 %v883, %v880
        %v946 = vpack.c.bf16 %v891, %v888
        %v947 = vpack.c.bf16 %v899, %v896
        %v948 = vpack.c.bf16 %v907, %v904
        %v949 = vpack.c.bf16 %v915, %v912
        %950 = vmatprep.subr.bf16.mxu0 0
        %951 = vmatpush1.bf16.xpose.msra.mxu0 %v918
        %952 = vmatprep.subr.bf16.mxu0 0
        %953 = vmatpush1.bf16.xpose.msra.mxu0 %v919
        %954 = vmatprep.subr.bf16.mxu0 0
        %955 = vmatpush1.bf16.xpose.msra.mxu0 %v920
        %956 = vmatprep.subr.bf16.mxu0 0
        %957 = vmatpush1.bf16.xpose.msra.mxu0 %v921
        %958 = vmatprep.subr.bf16.mxu0 0
        %959 = vmatpush1.bf16.xpose.msra.mxu0 %v922
        %960 = vmatprep.subr.bf16.mxu0 0
        %961 = vmatpush1.bf16.xpose.msra.mxu0 %v923
        %962 = vmatprep.subr.bf16.mxu0 0
        %963 = vmatpush1.bf16.xpose.msra.mxu0 %v924
        %964 = vmatprep.subr.bf16.mxu0 0
        %965 = vmatpush1.bf16.xpose.msra.mxu0 %v925
        %966 = vmatprep.subr.bf16.mxu0 0
        %967 = vmatpush1.bf16.xpose.msra.mxu0 %v926
        %968 = vmatprep.subr.bf16.mxu0 0
        %969 = vmatpush1.bf16.xpose.msra.mxu0 %v927
        %970 = vmatprep.subr.bf16.mxu0 0
        %971 = vmatpush1.bf16.xpose.msra.mxu0 %v928
        %972 = vmatprep.subr.bf16.mxu0 0
        %973 = vmatpush1.bf16.xpose.msra.mxu0 %v929
        %974 = vmatprep.subr.bf16.mxu0 0
        %975 = vmatpush1.bf16.xpose.msra.mxu0 %v930
        %976 = vmatprep.subr.bf16.mxu0 0
        %977 = vmatpush1.bf16.xpose.msra.mxu0 %v931
        %978 = vmatprep.subr.bf16.mxu0 0
        %979 = vmatpush1.bf16.xpose.msra.mxu0 %v932
        %980 = vmatprep.subr.bf16.mxu0 0
        %981 = vmatpush1.bf16.xpose.msra.mxu0 %v933
        %982 = vmatprep.mubr.bf16.mxu0 0
        %983 = vmatmul.mubr.bf16.gmra.mrb[0].mxu0 %v229
        %v984 = vpop.f32.mrb[0].mxu0
        %v985 = vadd.f32 0.0, %v984
        %v986 = vpop.f32.mrb[0].mxu0
        %v987 = vadd.f32 0.0, %v986
        %v988 = vpop.f32.mrb[0].mxu0
        %v989 = vadd.f32 0.0, %v988
        %v990 = vpop.f32.mrb[0].mxu0
        %v991 = vadd.f32 0.0, %v990
        %992 = vmatprep.mubr.bf16.mxu0 0
        %993 = vmatmul.mubr.bf16.gmra.mrb[0].mxu0 %v230
        %v994 = vpop.f32.mrb[0].mxu0
        %v995 = vadd.f32 0.0, %v994
        %v996 = vpop.f32.mrb[0].mxu0
        %v997 = vadd.f32 0.0, %v996
        %v998 = vpop.f32.mrb[0].mxu0
        %v999 = vadd.f32 0.0, %v998
        %v1000 = vpop.f32.mrb[0].mxu0
        %v1001 = vadd.f32 0.0, %v1000
        %1002 = vmatprep.mubr.bf16.mxu0 0
        %1003 = vmatmul.mubr.bf16.gmra.mrb[0].mxu0 %v231
        %v1004 = vpop.f32.mrb[0].mxu0
        %v1005 = vadd.f32 0.0, %v1004
        %v1006 = vpop.f32.mrb[0].mxu0
        %v1007 = vadd.f32 0.0, %v1006
        %v1008 = vpop.f32.mrb[0].mxu0
        %v1009 = vadd.f32 0.0, %v1008
        %v1010 = vpop.f32.mrb[0].mxu0
        %v1011 = vadd.f32 0.0, %v1010
        %1012 = vmatprep.mubr.bf16.mxu0 0
        %1013 = vmatmul.mubr.bf16.gmra.mrb[0].mxu0 %v232
        %v1014 = vpop.f32.mrb[0].mxu0
        %v1015 = vadd.f32 0.0, %v1014
        %v1016 = vpop.f32.mrb[0].mxu0
        %v1017 = vadd.f32 0.0, %v1016
        %v1018 = vpop.f32.mrb[0].mxu0
        %v1019 = vadd.f32 0.0, %v1018
        %v1020 = vpop.f32.mrb[0].mxu0
        %v1021 = vadd.f32 0.0, %v1020
        %1022 = vmatprep.mubr.bf16.mxu0 0
        %1023 = vmatmul.mubr.bf16.gmra.mrb[0].mxu0 %v233
        %v1024 = vpop.f32.mrb[0].mxu0
        %v1025 = vadd.f32 0.0, %v1024
        %v1026 = vpop.f32.mrb[0].mxu0
        %v1027 = vadd.f32 0.0, %v1026
        %v1028 = vpop.f32.mrb[0].mxu0
        %v1029 = vadd.f32 0.0, %v1028
        %v1030 = vpop.f32.mrb[0].mxu0
        %v1031 = vadd.f32 0.0, %v1030
        %1032 = vmatprep.mubr.bf16.mxu0 0
        %1033 = vmatmul.mubr.bf16.gmra.mrb[0].mxu0 %v234
        %v1034 = vpop.f32.mrb[0].mxu0
        %v1035 = vadd.f32 0.0, %v1034
        %v1036 = vpop.f32.mrb[0].mxu0
        %v1037 = vadd.f32 0.0, %v1036
        %v1038 = vpop.f32.mrb[0].mxu0
        %v1039 = vadd.f32 0.0, %v1038
        %v1040 = vpop.f32.mrb[0].mxu0
        %v1041 = vadd.f32 0.0, %v1040
        %1042 = vmatprep.mubr.bf16.mxu0 0
        %1043 = vmatmul.mubr.bf16.gmra.mrb[0].mxu0 %v235
        %v1044 = vpop.f32.mrb[0].mxu0
        %v1045 = vadd.f32 0.0, %v1044
        %v1046 = vpop.f32.mrb[0].mxu0
        %v1047 = vadd.f32 0.0, %v1046
        %v1048 = vpop.f32.mrb[0].mxu0
        %v1049 = vadd.f32 0.0, %v1048
        %v1050 = vpop.f32.mrb[0].mxu0
        %v1051 = vadd.f32 0.0, %v1050
        %1052 = vmatprep.mubr.bf16.mxu0 0
        %1053 = vmatmul.mubr.bf16.gmra.mrb[0].mxu0 %v236
        %v1054 = vpop.f32.mrb[0].mxu0
        %v1055 = vadd.f32 0.0, %v1054
        %v1056 = vpop.f32.mrb[0].mxu0
        %v1057 = vadd.f32 0.0, %v1056
        %v1058 = vpop.f32.mrb[0].mxu0
        %v1059 = vadd.f32 0.0, %v1058
        %v1060 = vpop.f32.mrb[0].mxu0
        %v1061 = vadd.f32 0.0, %v1060
        %1062 = vmatprep.mubr.bf16.mxu0 0
        %1063 = vmatmul.mubr.bf16.gmra.mrb[0].mxu0 %v237
        %v1064 = vpop.f32.mrb[0].mxu0
        %v1065 = vadd.f32 0.0, %v1064
        %v1066 = vpop.f32.mrb[0].mxu0
        %v1067 = vadd.f32 0.0, %v1066
        %v1068 = vpop.f32.mrb[0].mxu0
        %v1069 = vadd.f32 0.0, %v1068
        %v1070 = vpop.f32.mrb[0].mxu0
        %v1071 = vadd.f32 0.0, %v1070
        %1072 = vmatprep.mubr.bf16.mxu0 0
        %1073 = vmatmul.mubr.bf16.gmra.mrb[0].mxu0 %v238
        %v1074 = vpop.f32.mrb[0].mxu0
        %v1075 = vadd.f32 0.0, %v1074
        %v1076 = vpop.f32.mrb[0].mxu0
        %v1077 = vadd.f32 0.0, %v1076
        %v1078 = vpop.f32.mrb[0].mxu0
        %v1079 = vadd.f32 0.0, %v1078
        %v1080 = vpop.f32.mrb[0].mxu0
        %v1081 = vadd.f32 0.0, %v1080
        %1082 = vmatprep.mubr.bf16.mxu0 0
        %1083 = vmatmul.mubr.bf16.gmra.mrb[0].mxu0 %v239
        %v1084 = vpop.f32.mrb[0].mxu0
        %v1085 = vadd.f32 0.0, %v1084
        %v1086 = vpop.f32.mrb[0].mxu0
        %v1087 = vadd.f32 0.0, %v1086
        %v1088 = vpop.f32.mrb[0].mxu0
        %v1089 = vadd.f32 0.0, %v1088
        %v1090 = vpop.f32.mrb[0].mxu0
        %v1091 = vadd.f32 0.0, %v1090
        %1092 = vmatprep.mubr.bf16.mxu0 0
        %1093 = vmatmul.mubr.bf16.gmra.mrb[0].mxu0 %v240
        %v1094 = vpop.f32.mrb[0].mxu0
        %v1095 = vadd.f32 0.0, %v1094
        %v1096 = vpop.f32.mrb[0].mxu0
        %v1097 = vadd.f32 0.0, %v1096
        %v1098 = vpop.f32.mrb[0].mxu0
        %v1099 = vadd.f32 0.0, %v1098
        %v1100 = vpop.f32.mrb[0].mxu0
        %v1101 = vadd.f32 0.0, %v1100
        %1102 = vmatprep.mubr.bf16.mxu0 0
        %1103 = vmatmul.mubr.bf16.gmra.mrb[0].mxu0 %v241
        %v1104 = vpop.f32.mrb[0].mxu0
        %v1105 = vadd.f32 0.0, %v1104
        %v1106 = vpop.f32.mrb[0].mxu0
        %v1107 = vadd.f32 0.0, %v1106
        %v1108 = vpop.f32.mrb[0].mxu0
        %v1109 = vadd.f32 0.0, %v1108
        %v1110 = vpop.f32.mrb[0].mxu0
        %v1111 = vadd.f32 0.0, %v1110
        %1112 = vmatprep.mubr.bf16.mxu0 0
        %1113 = vmatmul.mubr.bf16.gmra.mrb[0].mxu0 %v242
        %v1114 = vpop.f32.mrb[0].mxu0
        %v1115 = vadd.f32 0.0, %v1114
        %v1116 = vpop.f32.mrb[0].mxu0
        %v1117 = vadd.f32 0.0, %v1116
        %v1118 = vpop.f32.mrb[0].mxu0
        %v1119 = vadd.f32 0.0, %v1118
        %v1120 = vpop.f32.mrb[0].mxu0
        %v1121 = vadd.f32 0.0, %v1120
        %1122 = vmatprep.mubr.bf16.mxu0 0
        %1123 = vmatmul.mubr.bf16.gmra.mrb[0].mxu0 %v243
        %v1124 = vpop.f32.mrb[0].mxu0
        %v1125 = vadd.f32 0.0, %v1124
        %v1126 = vpop.f32.mrb[0].mxu0
        %v1127 = vadd.f32 0.0, %v1126
        %v1128 = vpop.f32.mrb[0].mxu0
        %v1129 = vadd.f32 0.0, %v1128
        %v1130 = vpop.f32.mrb[0].mxu0
        %v1131 = vadd.f32 0.0, %v1130
        %1132 = vmatprep.mubr.bf16.mxu0 0
        %1133 = vmatmul.mubr.bf16.gmra.mrb[0].mxu0 %v244
        %v1134 = vpop.f32.mrb[0].mxu0
        %v1135 = vadd.f32 0.0, %v1134
        %v1136 = vpop.f32.mrb[0].mxu0
        %v1137 = vadd.f32 0.0, %v1136
        %v1138 = vpop.f32.mrb[0].mxu0
        %v1139 = vadd.f32 0.0, %v1138
        %v1140 = vpop.f32.mrb[0].mxu0
        %v1141 = vadd.f32 0.0, %v1140
        %1142 = vdwg.mxu0
        %1143 = vmatprep.subr.bf16.mxu0 0
        %1144 = vmatpush1.bf16.xpose.msra.mxu0 %v934
        %1145 = vmatprep.subr.bf16.mxu0 0
        %1146 = vmatpush1.bf16.xpose.msra.mxu0 %v935
        %1147 = vmatprep.subr.bf16.mxu0 0
        %1148 = vmatpush1.bf16.xpose.msra.mxu0 %v936
        %1149 = vmatprep.subr.bf16.mxu0 0
        %1150 = vmatpush1.bf16.xpose.msra.mxu0 %v937
        %1151 = vmatprep.subr.bf16.mxu0 0
        %1152 = vmatpush1.bf16.xpose.msra.mxu0 %v938
        %1153 = vmatprep.subr.bf16.mxu0 0
        %1154 = vmatpush1.bf16.xpose.msra.mxu0 %v939
        %1155 = vmatprep.subr.bf16.mxu0 0
        %1156 = vmatpush1.bf16.xpose.msra.mxu0 %v940
        %1157 = vmatprep.subr.bf16.mxu0 0
        %1158 = vmatpush1.bf16.xpose.msra.mxu0 %v941
        %1159 = vmatprep.subr.bf16.mxu0 0
        %1160 = vmatpush1.bf16.xpose.msra.mxu0 %v942
        %1161 = vmatprep.subr.bf16.mxu0 0
        %1162 = vmatpush1.bf16.xpose.msra.mxu0 %v943
        %1163 = vmatprep.subr.bf16.mxu0 0
        %1164 = vmatpush1.bf16.xpose.msra.mxu0 %v944
        %1165 = vmatprep.subr.bf16.mxu0 0
        %1166 = vmatpush1.bf16.xpose.msra.mxu0 %v945
        %1167 = vmatprep.subr.bf16.mxu0 0
        %1168 = vmatpush1.bf16.xpose.msra.mxu0 %v946
        %1169 = vmatprep.subr.bf16.mxu0 0
        %1170 = vmatpush1.bf16.xpose.msra.mxu0 %v947
        %1171 = vmatprep.subr.bf16.mxu0 0
        %1172 = vmatpush1.bf16.xpose.msra.mxu0 %v948
        %1173 = vmatprep.subr.bf16.mxu0 0
        %1174 = vmatpush1.bf16.xpose.msra.mxu0 %v949
        %1175 = vmatprep.mubr.bf16.mxu0 0
        %1176 = vmatmul.mubr.bf16.gmra.mrb[0].mxu0 %v229
        %v1177 = vpop.f32.mrb[0].mxu0
        %v1178 = vadd.f32 0.0, %v1177
        %v1179 = vpop.f32.mrb[0].mxu0
        %v1180 = vadd.f32 0.0, %v1179
        %v1181 = vpop.f32.mrb[0].mxu0
        %v1182 = vadd.f32 0.0, %v1181
        %v1183 = vpop.f32.mrb[0].mxu0
        %v1184 = vadd.f32 0.0, %v1183
        %1185 = vmatprep.mubr.bf16.mxu0 0
        %1186 = vmatmul.mubr.bf16.gmra.mrb[0].mxu0 %v230
        %v1187 = vpop.f32.mrb[0].mxu0
        %v1188 = vadd.f32 0.0, %v1187
        %v1189 = vpop.f32.mrb[0].mxu0
        %v1190 = vadd.f32 0.0, %v1189
        %v1191 = vpop.f32.mrb[0].mxu0
        %v1192 = vadd.f32 0.0, %v1191
        %v1193 = vpop.f32.mrb[0].mxu0
        %v1194 = vadd.f32 0.0, %v1193
        %1195 = vmatprep.mubr.bf16.mxu0 0
        %1196 = vmatmul.mubr.bf16.gmra.mrb[0].mxu0 %v231
        %v1197 = vpop.f32.mrb[0].mxu0
        %v1198 = vadd.f32 0.0, %v1197
        %v1199 = vpop.f32.mrb[0].mxu0
        %v1200 = vadd.f32 0.0, %v1199
        %v1201 = vpop.f32.mrb[0].mxu0
        %v1202 = vadd.f32 0.0, %v1201
        %v1203 = vpop.f32.mrb[0].mxu0
        %v1204 = vadd.f32 0.0, %v1203
        %1205 = vmatprep.mubr.bf16.mxu0 0
        %1206 = vmatmul.mubr.bf16.gmra.mrb[0].mxu0 %v232
        %v1207 = vpop.f32.mrb[0].mxu0
        %v1208 = vadd.f32 0.0, %v1207
        %v1209 = vpop.f32.mrb[0].mxu0
        %v1210 = vadd.f32 0.0, %v1209
        %v1211 = vpop.f32.mrb[0].mxu0
        %v1212 = vadd.f32 0.0, %v1211
        %v1213 = vpop.f32.mrb[0].mxu0
        %v1214 = vadd.f32 0.0, %v1213
        %1215 = vmatprep.mubr.bf16.mxu0 0
        %1216 = vmatmul.mubr.bf16.gmra.mrb[0].mxu0 %v233
        %v1217 = vpop.f32.mrb[0].mxu0
        %v1218 = vadd.f32 0.0, %v1217
        %v1219 = vpop.f32.mrb[0].mxu0
        %v1220 = vadd.f32 0.0, %v1219
        %v1221 = vpop.f32.mrb[0].mxu0
        %v1222 = vadd.f32 0.0, %v1221
        %v1223 = vpop.f32.mrb[0].mxu0
        %v1224 = vadd.f32 0.0, %v1223
        %1225 = vmatprep.mubr.bf16.mxu0 0
        %1226 = vmatmul.mubr.bf16.gmra.mrb[0].mxu0 %v234
        %v1227 = vpop.f32.mrb[0].mxu0
        %v1228 = vadd.f32 0.0, %v1227
        %v1229 = vpop.f32.mrb[0].mxu0
        %v1230 = vadd.f32 0.0, %v1229
        %v1231 = vpop.f32.mrb[0].mxu0
        %v1232 = vadd.f32 0.0, %v1231
        %v1233 = vpop.f32.mrb[0].mxu0
        %v1234 = vadd.f32 0.0, %v1233
        %1235 = vmatprep.mubr.bf16.mxu0 0
        %1236 = vmatmul.mubr.bf16.gmra.mrb[0].mxu0 %v235
        %v1237 = vpop.f32.mrb[0].mxu0
        %v1238 = vadd.f32 0.0, %v1237
        %v1239 = vpop.f32.mrb[0].mxu0
        %v1240 = vadd.f32 0.0, %v1239
        %v1241 = vpop.f32.mrb[0].mxu0
        %v1242 = vadd.f32 0.0, %v1241
        %v1243 = vpop.f32.mrb[0].mxu0
        %v1244 = vadd.f32 0.0, %v1243
        %1245 = vmatprep.mubr.bf16.mxu0 0
        %1246 = vmatmul.mubr.bf16.gmra.mrb[0].mxu0 %v236
        %v1247 = vpop.f32.mrb[0].mxu0
        %v1248 = vadd.f32 0.0, %v1247
        %v1249 = vpop.f32.mrb[0].mxu0
        %v1250 = vadd.f32 0.0, %v1249
        %v1251 = vpop.f32.mrb[0].mxu0
        %v1252 = vadd.f32 0.0, %v1251
        %v1253 = vpop.f32.mrb[0].mxu0
        %v1254 = vadd.f32 0.0, %v1253
        %1255 = vmatprep.mubr.bf16.mxu0 0
        %1256 = vmatmul.mubr.bf16.gmra.mrb[0].mxu0 %v237
        %v1257 = vpop.f32.mrb[0].mxu0
        %v1258 = vadd.f32 0.0, %v1257
        %v1259 = vpop.f32.mrb[0].mxu0
        %v1260 = vadd.f32 0.0, %v1259
        %v1261 = vpop.f32.mrb[0].mxu0
        %v1262 = vadd.f32 0.0, %v1261
        %v1263 = vpop.f32.mrb[0].mxu0
        %v1264 = vadd.f32 0.0, %v1263
        %1265 = vmatprep.mubr.bf16.mxu0 0
        %1266 = vmatmul.mubr.bf16.gmra.mrb[0].mxu0 %v238
        %v1267 = vpop.f32.mrb[0].mxu0
        %v1268 = vadd.f32 0.0, %v1267
        %v1269 = vpop.f32.mrb[0].mxu0
        %v1270 = vadd.f32 0.0, %v1269
        %v1271 = vpop.f32.mrb[0].mxu0
        %v1272 = vadd.f32 0.0, %v1271
        %v1273 = vpop.f32.mrb[0].mxu0
        %v1274 = vadd.f32 0.0, %v1273
        %1275 = vmatprep.mubr.bf16.mxu0 0
        %1276 = vmatmul.mubr.bf16.gmra.mrb[0].mxu0 %v239
        %v1277 = vpop.f32.mrb[0].mxu0
        %v1278 = vadd.f32 0.0, %v1277
        %v1279 = vpop.f32.mrb[0].mxu0
        %v1280 = vadd.f32 0.0, %v1279
        %v1281 = vpop.f32.mrb[0].mxu0
        %v1282 = vadd.f32 0.0, %v1281
        %v1283 = vpop.f32.mrb[0].mxu0
        %v1284 = vadd.f32 0.0, %v1283
        %1285 = vmatprep.mubr.bf16.mxu0 0
        %1286 = vmatmul.mubr.bf16.gmra.mrb[0].mxu0 %v240
        %v1287 = vpop.f32.mrb[0].mxu0
        %v1288 = vadd.f32 0.0, %v1287
        %v1289 = vpop.f32.mrb[0].mxu0
        %v1290 = vadd.f32 0.0, %v1289
        %v1291 = vpop.f32.mrb[0].mxu0
        %v1292 = vadd.f32 0.0, %v1291
        %v1293 = vpop.f32.mrb[0].mxu0
        %v1294 = vadd.f32 0.0, %v1293
        %1295 = vmatprep.mubr.bf16.mxu0 0
        %1296 = vmatmul.mubr.bf16.gmra.mrb[0].mxu0 %v241
        %v1297 = vpop.f32.mrb[0].mxu0
        %v1298 = vadd.f32 0.0, %v1297
        %v1299 = vpop.f32.mrb[0].mxu0
        %v1300 = vadd.f32 0.0, %v1299
        %v1301 = vpop.f32.mrb[0].mxu0
        %v1302 = vadd.f32 0.0, %v1301
        %v1303 = vpop.f32.mrb[0].mxu0
        %v1304 = vadd.f32 0.0, %v1303
        %1305 = vmatprep.mubr.bf16.mxu0 0
        %1306 = vmatmul.mubr.bf16.gmra.mrb[0].mxu0 %v242
        %v1307 = vpop.f32.mrb[0].mxu0
        %v1308 = vadd.f32 0.0, %v1307
        %v1309 = vpop.f32.mrb[0].mxu0
        %v1310 = vadd.f32 0.0, %v1309
        %v1311 = vpop.f32.mrb[0].mxu0
        %v1312 = vadd.f32 0.0, %v1311
        %v1313 = vpop.f32.mrb[0].mxu0
        %v1314 = vadd.f32 0.0, %v1313
        %1315 = vmatprep.mubr.bf16.mxu0 0
        %1316 = vmatmul.mubr.bf16.gmra.mrb[0].mxu0 %v243
        %v1317 = vpop.f32.mrb[0].mxu0
        %v1318 = vadd.f32 0.0, %v1317
        %v1319 = vpop.f32.mrb[0].mxu0
        %v1320 = vadd.f32 0.0, %v1319
        %v1321 = vpop.f32.mrb[0].mxu0
        %v1322 = vadd.f32 0.0, %v1321
        %v1323 = vpop.f32.mrb[0].mxu0
        %v1324 = vadd.f32 0.0, %v1323
        %1325 = vmatprep.mubr.bf16.mxu0 0
        %1326 = vmatmul.mubr.bf16.gmra.mrb[0].mxu0 %v244
        %v1327 = vpop.f32.mrb[0].mxu0
        %v1328 = vadd.f32 0.0, %v1327
        %v1329 = vpop.f32.mrb[0].mxu0
        %v1330 = vadd.f32 0.0, %v1329
        %v1331 = vpop.f32.mrb[0].mxu0
        %v1332 = vadd.f32 0.0, %v1331
        %v1333 = vpop.f32.mrb[0].mxu0
        %v1334 = vadd.f32 0.0, %v1333
        %1335 = vdwg.mxu0
        %v1336 = vmul.f32 %v985, 0.044194173
        %v1337 = vmul.f32 %v987, 0.044194173
        %v1338 = vmul.f32 %v1178, 0.044194173
        %v1339 = vmul.f32 %v1180, 0.044194173
        %v1340 = vmul.f32 %v989, 0.044194173
        %v1341 = vmul.f32 %v991, 0.044194173
        %v1342 = vmul.f32 %v1182, 0.044194173
        %v1343 = vmul.f32 %v1184, 0.044194173
        %v1344 = vmul.f32 %v995, 0.044194173
        %v1345 = vmul.f32 %v997, 0.044194173
        %v1346 = vmul.f32 %v1188, 0.044194173
        %v1347 = vmul.f32 %v1190, 0.044194173
        %v1348 = vmul.f32 %v999, 0.044194173
        %v1349 = vmul.f32 %v1001, 0.044194173
        %v1350 = vmul.f32 %v1192, 0.044194173
        %v1351 = vmul.f32 %v1194, 0.044194173
        %v1352 = vmul.f32 %v1005, 0.044194173
        %v1353 = vmul.f32 %v1007, 0.044194173
        %v1354 = vmul.f32 %v1198, 0.044194173
        %v1355 = vmul.f32 %v1200, 0.044194173
        %v1356 = vmul.f32 %v1009, 0.044194173
        %v1357 = vmul.f32 %v1011, 0.044194173
        %v1358 = vmul.f32 %v1202, 0.044194173
        %v1359 = vmul.f32 %v1204, 0.044194173
        %v1360 = vmul.f32 %v1015, 0.044194173
        %v1361 = vmul.f32 %v1017, 0.044194173
        %v1362 = vmul.f32 %v1208, 0.044194173
        %v1363 = vmul.f32 %v1210, 0.044194173
        %v1364 = vmul.f32 %v1019, 0.044194173
        %v1365 = vmul.f32 %v1021, 0.044194173
        %v1366 = vmul.f32 %v1212, 0.044194173
        %v1367 = vmul.f32 %v1214, 0.044194173
        %v1368 = vmul.f32 %v1025, 0.044194173
        %v1369 = vmul.f32 %v1027, 0.044194173
        %v1370 = vmul.f32 %v1218, 0.044194173
        %v1371 = vmul.f32 %v1220, 0.044194173
        %v1372 = vmul.f32 %v1029, 0.044194173
        %v1373 = vmul.f32 %v1031, 0.044194173
        %v1374 = vmul.f32 %v1222, 0.044194173
        %v1375 = vmul.f32 %v1224, 0.044194173
        %v1376 = vmul.f32 %v1035, 0.044194173
        %v1377 = vmul.f32 %v1037, 0.044194173
        %v1378 = vmul.f32 %v1228, 0.044194173
        %v1379 = vmul.f32 %v1230, 0.044194173
        %v1380 = vmul.f32 %v1039, 0.044194173
        %v1381 = vmul.f32 %v1041, 0.044194173
        %v1382 = vmul.f32 %v1232, 0.044194173
        %v1383 = vmul.f32 %v1234, 0.044194173
        %v1384 = vmul.f32 %v1045, 0.044194173
        %v1385 = vmul.f32 %v1047, 0.044194173
        %v1386 = vmul.f32 %v1238, 0.044194173
        %v1387 = vmul.f32 %v1240, 0.044194173
        %v1388 = vmul.f32 %v1049, 0.044194173
        %v1389 = vmul.f32 %v1051, 0.044194173
        %v1390 = vmul.f32 %v1242, 0.044194173
        %v1391 = vmul.f32 %v1244, 0.044194173
        %v1392 = vmul.f32 %v1055, 0.044194173
        %v1393 = vmul.f32 %v1057, 0.044194173
        %v1394 = vmul.f32 %v1248, 0.044194173
        %v1395 = vmul.f32 %v1250, 0.044194173
        %v1396 = vmul.f32 %v1059, 0.044194173
        %v1397 = vmul.f32 %v1061, 0.044194173
        %v1398 = vmul.f32 %v1252, 0.044194173
        %v1399 = vmul.f32 %v1254, 0.044194173
        %v1400 = vmul.f32 %v1065, 0.044194173
        %v1401 = vmul.f32 %v1067, 0.044194173
        %v1402 = vmul.f32 %v1258, 0.044194173
        %v1403 = vmul.f32 %v1260, 0.044194173
        %v1404 = vmul.f32 %v1069, 0.044194173
        %v1405 = vmul.f32 %v1071, 0.044194173
        %v1406 = vmul.f32 %v1262, 0.044194173
        %v1407 = vmul.f32 %v1264, 0.044194173
        %v1408 = vmul.f32 %v1075, 0.044194173
        %v1409 = vmul.f32 %v1077, 0.044194173
        %v1410 = vmul.f32 %v1268, 0.044194173
        %v1411 = vmul.f32 %v1270, 0.044194173
        %v1412 = vmul.f32 %v1079, 0.044194173
        %v1413 = vmul.f32 %v1081, 0.044194173
        %v1414 = vmul.f32 %v1272, 0.044194173
        %v1415 = vmul.f32 %v1274, 0.044194173
        %v1416 = vmul.f32 %v1085, 0.044194173
        %v1417 = vmul.f32 %v1087, 0.044194173
        %v1418 = vmul.f32 %v1278, 0.044194173
        %v1419 = vmul.f32 %v1280, 0.044194173
        %v1420 = vmul.f32 %v1089, 0.044194173
        %v1421 = vmul.f32 %v1091, 0.044194173
        %v1422 = vmul.f32 %v1282, 0.044194173
        %v1423 = vmul.f32 %v1284, 0.044194173
        %v1424 = vmul.f32 %v1095, 0.044194173
        %v1425 = vmul.f32 %v1097, 0.044194173
        %v1426 = vmul.f32 %v1288, 0.044194173
        %v1427 = vmul.f32 %v1290, 0.044194173
        %v1428 = vmul.f32 %v1099, 0.044194173
        %v1429 = vmul.f32 %v1101, 0.044194173
        %v1430 = vmul.f32 %v1292, 0.044194173
        %v1431 = vmul.f32 %v1294, 0.044194173
        %v1432 = vmul.f32 %v1105, 0.044194173
        %v1433 = vmul.f32 %v1107, 0.044194173
        %v1434 = vmul.f32 %v1298, 0.044194173
        %v1435 = vmul.f32 %v1300, 0.044194173
        %v1436 = vmul.f32 %v1109, 0.044194173
        %v1437 = vmul.f32 %v1111, 0.044194173
        %v1438 = vmul.f32 %v1302, 0.044194173
        %v1439 = vmul.f32 %v1304, 0.044194173
        %v1440 = vmul.f32 %v1115, 0.044194173
        %v1441 = vmul.f32 %v1117, 0.044194173
        %v1442 = vmul.f32 %v1308, 0.044194173
        %v1443 = vmul.f32 %v1310, 0.044194173
        %v1444 = vmul.f32 %v1119, 0.044194173
        %v1445 = vmul.f32 %v1121, 0.044194173
        %v1446 = vmul.f32 %v1312, 0.044194173
        %v1447 = vmul.f32 %v1314, 0.044194173
        %v1448 = vmul.f32 %v1125, 0.044194173
        %v1449 = vmul.f32 %v1127, 0.044194173
        %v1450 = vmul.f32 %v1318, 0.044194173
        %v1451 = vmul.f32 %v1320, 0.044194173
        %v1452 = vmul.f32 %v1129, 0.044194173
        %v1453 = vmul.f32 %v1131, 0.044194173
        %v1454 = vmul.f32 %v1322, 0.044194173
        %v1455 = vmul.f32 %v1324, 0.044194173
        %v1456 = vmul.f32 %v1135, 0.044194173
        %v1457 = vmul.f32 %v1137, 0.044194173
        %v1458 = vmul.f32 %v1328, 0.044194173
        %v1459 = vmul.f32 %v1330, 0.044194173
        %v1460 = vmul.f32 %v1139, 0.044194173
        %v1461 = vmul.f32 %v1141, 0.044194173
        %v1462 = vmul.f32 %v1332, 0.044194173
        %v1463 = vmul.f32 %v1334, 0.044194173
        %v1464 = vlaneseq
        %v1465 = vand.u32 %v1464, 127
        %v1466 = vadd.s32 %v1465, 128
        %v1467 = vadd.s32 %v1465, 256
        %v1468 = vadd.s32 %v1465, 384
        %vm1469 = vcmp.lt.s32.totalorder %v1465, 396
        %vm1470 = vcmp.lt.s32.totalorder %v1466, 396
        %vm1471 = vcmp.lt.s32.totalorder %v1467, 396
        %vm1472 = vcmp.lt.s32.totalorder %v1468, 396
        %v1473 = vsel %vm1469, %v1336, -1e+30
        %v1474 = vsel %vm1470, %v1337, -1e+30
        %v1475 = vsel %vm1471, %v1338, -1e+30
        %v1476 = vsel %vm1472, %v1339, -1e+30
        %v1477 = vsel %vm1469, %v1340, -1e+30
        %v1478 = vsel %vm1470, %v1341, -1e+30
        %v1479 = vsel %vm1471, %v1342, -1e+30
        %v1480 = vsel %vm1472, %v1343, -1e+30
        %v1481 = vsel %vm1469, %v1344, -1e+30
        %v1482 = vsel %vm1470, %v1345, -1e+30
        %v1483 = vsel %vm1471, %v1346, -1e+30
        %v1484 = vsel %vm1472, %v1347, -1e+30
        %v1485 = vsel %vm1469, %v1348, -1e+30
        %v1486 = vsel %vm1470, %v1349, -1e+30
        %v1487 = vsel %vm1471, %v1350, -1e+30
        %v1488 = vsel %vm1472, %v1351, -1e+30
        %v1489 = vsel %vm1469, %v1352, -1e+30
        %v1490 = vsel %vm1470, %v1353, -1e+30
        %v1491 = vsel %vm1471, %v1354, -1e+30
        %v1492 = vsel %vm1472, %v1355, -1e+30
        %v1493 = vsel %vm1469, %v1356, -1e+30
        %v1494 = vsel %vm1470, %v1357, -1e+30
        %v1495 = vsel %vm1471, %v1358, -1e+30
        %v1496 = vsel %vm1472, %v1359, -1e+30
        %v1497 = vsel %vm1469, %v1360, -1e+30
        %v1498 = vsel %vm1470, %v1361, -1e+30
        %v1499 = vsel %vm1471, %v1362, -1e+30
        %v1500 = vsel %vm1472, %v1363, -1e+30
        %v1501 = vsel %vm1469, %v1364, -1e+30
        %v1502 = vsel %vm1470, %v1365, -1e+30
        %v1503 = vsel %vm1471, %v1366, -1e+30
        %v1504 = vsel %vm1472, %v1367, -1e+30
        %v1505 = vsel %vm1469, %v1368, -1e+30
        %v1506 = vsel %vm1470, %v1369, -1e+30
        %v1507 = vsel %vm1471, %v1370, -1e+30
        %v1508 = vsel %vm1472, %v1371, -1e+30
        %v1509 = vsel %vm1469, %v1372, -1e+30
        %v1510 = vsel %vm1470, %v1373, -1e+30
        %v1511 = vsel %vm1471, %v1374, -1e+30
        %v1512 = vsel %vm1472, %v1375, -1e+30
        %v1513 = vsel %vm1469, %v1376, -1e+30
        %v1514 = vsel %vm1470, %v1377, -1e+30
        %v1515 = vsel %vm1471, %v1378, -1e+30
        %v1516 = vsel %vm1472, %v1379, -1e+30
        %v1517 = vsel %vm1469, %v1380, -1e+30
        %v1518 = vsel %vm1470, %v1381, -1e+30
        %v1519 = vsel %vm1471, %v1382, -1e+30
        %v1520 = vsel %vm1472, %v1383, -1e+30
        %v1521 = vsel %vm1469, %v1384, -1e+30
        %v1522 = vsel %vm1470, %v1385, -1e+30
        %v1523 = vsel %vm1471, %v1386, -1e+30
        %v1524 = vsel %vm1472, %v1387, -1e+30
        %v1525 = vsel %vm1469, %v1388, -1e+30
        %v1526 = vsel %vm1470, %v1389, -1e+30
        %v1527 = vsel %vm1471, %v1390, -1e+30
        %v1528 = vsel %vm1472, %v1391, -1e+30
        %v1529 = vsel %vm1469, %v1392, -1e+30
        %v1530 = vsel %vm1470, %v1393, -1e+30
        %v1531 = vsel %vm1471, %v1394, -1e+30
        %v1532 = vsel %vm1472, %v1395, -1e+30
        %v1533 = vsel %vm1469, %v1396, -1e+30
        %v1534 = vsel %vm1470, %v1397, -1e+30
        %v1535 = vsel %vm1471, %v1398, -1e+30
        %v1536 = vsel %vm1472, %v1399, -1e+30
        %v1537 = vsel %vm1469, %v1400, -1e+30
        %v1538 = vsel %vm1470, %v1401, -1e+30
        %v1539 = vsel %vm1471, %v1402, -1e+30
        %v1540 = vsel %vm1472, %v1403, -1e+30
        %v1541 = vsel %vm1469, %v1404, -1e+30
        %v1542 = vsel %vm1470, %v1405, -1e+30
        %v1543 = vsel %vm1471, %v1406, -1e+30
        %v1544 = vsel %vm1472, %v1407, -1e+30
        %v1545 = vsel %vm1469, %v1408, -1e+30
        %v1546 = vsel %vm1470, %v1409, -1e+30
        %v1547 = vsel %vm1471, %v1410, -1e+30
        %v1548 = vsel %vm1472, %v1411, -1e+30
        %v1549 = vsel %vm1469, %v1412, -1e+30
        %v1550 = vsel %vm1470, %v1413, -1e+30
        %v1551 = vsel %vm1471, %v1414, -1e+30
        %v1552 = vsel %vm1472, %v1415, -1e+30
        %v1553 = vsel %vm1469, %v1416, -1e+30
        %v1554 = vsel %vm1470, %v1417, -1e+30
        %v1555 = vsel %vm1471, %v1418, -1e+30
        %v1556 = vsel %vm1472, %v1419, -1e+30
        %v1557 = vsel %vm1469, %v1420, -1e+30
        %v1558 = vsel %vm1470, %v1421, -1e+30
        %v1559 = vsel %vm1471, %v1422, -1e+30
        %v1560 = vsel %vm1472, %v1423, -1e+30
        %v1561 = vsel %vm1469, %v1424, -1e+30
        %v1562 = vsel %vm1470, %v1425, -1e+30
        %v1563 = vsel %vm1471, %v1426, -1e+30
        %v1564 = vsel %vm1472, %v1427, -1e+30
        %v1565 = vsel %vm1469, %v1428, -1e+30
        %v1566 = vsel %vm1470, %v1429, -1e+30
        %v1567 = vsel %vm1471, %v1430, -1e+30
        %v1568 = vsel %vm1472, %v1431, -1e+30
        %v1569 = vsel %vm1469, %v1432, -1e+30
        %v1570 = vsel %vm1470, %v1433, -1e+30
        %v1571 = vsel %vm1471, %v1434, -1e+30
        %v1572 = vsel %vm1472, %v1435, -1e+30
        %v1573 = vsel %vm1469, %v1436, -1e+30
        %v1574 = vsel %vm1470, %v1437, -1e+30
        %v1575 = vsel %vm1471, %v1438, -1e+30
        %v1576 = vsel %vm1472, %v1439, -1e+30
        %v1577 = vsel %vm1469, %v1440, -1e+30
        %v1578 = vsel %vm1470, %v1441, -1e+30
        %v1579 = vsel %vm1471, %v1442, -1e+30
        %v1580 = vsel %vm1472, %v1443, -1e+30
        %v1581 = vsel %vm1469, %v1444, -1e+30
        %v1582 = vsel %vm1470, %v1445, -1e+30
        %v1583 = vsel %vm1471, %v1446, -1e+30
        %v1584 = vsel %vm1472, %v1447, -1e+30
        %v1585 = vsel %vm1469, %v1448, -1e+30
        %v1586 = vsel %vm1470, %v1449, -1e+30
        %v1587 = vsel %vm1471, %v1450, -1e+30
        %v1588 = vsel %vm1472, %v1451, -1e+30
        %v1589 = vsel %vm1469, %v1452, -1e+30
        %v1590 = vsel %vm1470, %v1453, -1e+30
        %v1591 = vsel %vm1471, %v1454, -1e+30
        %v1592 = vsel %vm1472, %v1455, -1e+30
        %v1593 = vsel %vm1469, %v1456, -1e+30
        %v1594 = vsel %vm1470, %v1457, -1e+30
        %v1595 = vsel %vm1471, %v1458, -1e+30
        %v1596 = vsel %vm1472, %v1459, -1e+30
        %v1597 = vsel %vm1469, %v1460, -1e+30
        %v1598 = vsel %vm1470, %v1461, -1e+30
        %v1599 = vsel %vm1471, %v1462, -1e+30
        %v1600 = vsel %vm1472, %v1463, -1e+30
        %v1601 = vmax.f32 %v1473, %v1474
        %v1602 = vmax.f32 %v1601, %v1475
        %v1603 = vmax.f32 %v1602, %v1476
        %1604 = vmax.xlane.f32.xlu0 %v1603
        %v1605 = vpop.xlane.xlu0 %1604
        %v1606 = vmax.f32 %v1477, %v1478
        %v1607 = vmax.f32 %v1606, %v1479
        %v1608 = vmax.f32 %v1607, %v1480
        %1609 = vmax.xlane.f32.xlu0 %v1608
        %v1610 = vpop.xlane.xlu0 %1609
        %v1611 = vmax.f32 %v1481, %v1482
        %v1612 = vmax.f32 %v1611, %v1483
        %v1613 = vmax.f32 %v1612, %v1484
        %1614 = vmax.xlane.f32.xlu0 %v1613
        %v1615 = vpop.xlane.xlu0 %1614
        %v1616 = vmax.f32 %v1485, %v1486
        %v1617 = vmax.f32 %v1616, %v1487
        %v1618 = vmax.f32 %v1617, %v1488
        %1619 = vmax.xlane.f32.xlu0 %v1618
        %v1620 = vpop.xlane.xlu0 %1619
        %v1621 = vmax.f32 %v1489, %v1490
        %v1622 = vmax.f32 %v1621, %v1491
        %v1623 = vmax.f32 %v1622, %v1492
        %1624 = vmax.xlane.f32.xlu0 %v1623
        %v1625 = vpop.xlane.xlu0 %1624
        %v1626 = vmax.f32 %v1493, %v1494
        %v1627 = vmax.f32 %v1626, %v1495
        %v1628 = vmax.f32 %v1627, %v1496
        %1629 = vmax.xlane.f32.xlu0 %v1628
        %v1630 = vpop.xlane.xlu0 %1629
        %v1631 = vmax.f32 %v1497, %v1498
        %v1632 = vmax.f32 %v1631, %v1499
        %v1633 = vmax.f32 %v1632, %v1500
        %1634 = vmax.xlane.f32.xlu0 %v1633
        %v1635 = vpop.xlane.xlu0 %1634
        %v1636 = vmax.f32 %v1501, %v1502
        %v1637 = vmax.f32 %v1636, %v1503
        %v1638 = vmax.f32 %v1637, %v1504
        %1639 = vmax.xlane.f32.xlu0 %v1638
        %v1640 = vpop.xlane.xlu0 %1639
        %v1641 = vmax.f32 %v1505, %v1506
        %v1642 = vmax.f32 %v1641, %v1507
        %v1643 = vmax.f32 %v1642, %v1508
        %1644 = vmax.xlane.f32.xlu0 %v1643
        %v1645 = vpop.xlane.xlu0 %1644
        %v1646 = vmax.f32 %v1509, %v1510
        %v1647 = vmax.f32 %v1646, %v1511
        %v1648 = vmax.f32 %v1647, %v1512
        %1649 = vmax.xlane.f32.xlu0 %v1648
        %v1650 = vpop.xlane.xlu0 %1649
        %v1651 = vmax.f32 %v1513, %v1514
        %v1652 = vmax.f32 %v1651, %v1515
        %v1653 = vmax.f32 %v1652, %v1516
        %1654 = vmax.xlane.f32.xlu0 %v1653
        %v1655 = vpop.xlane.xlu0 %1654
        %v1656 = vmax.f32 %v1517, %v1518
        %v1657 = vmax.f32 %v1656, %v1519
        %v1658 = vmax.f32 %v1657, %v1520
        %1659 = vmax.xlane.f32.xlu0 %v1658
        %v1660 = vpop.xlane.xlu0 %1659
        %v1661 = vmax.f32 %v1521, %v1522
        %v1662 = vmax.f32 %v1661, %v1523
        %v1663 = vmax.f32 %v1662, %v1524
        %1664 = vmax.xlane.f32.xlu0 %v1663
        %v1665 = vpop.xlane.xlu0 %1664
        %v1666 = vmax.f32 %v1525, %v1526
        %v1667 = vmax.f32 %v1666, %v1527
        %v1668 = vmax.f32 %v1667, %v1528
        %1669 = vmax.xlane.f32.xlu0 %v1668
        %v1670 = vpop.xlane.xlu0 %1669
        %v1671 = vmax.f32 %v1529, %v1530
        %v1672 = vmax.f32 %v1671, %v1531
        %v1673 = vmax.f32 %v1672, %v1532
        %1674 = vmax.xlane.f32.xlu0 %v1673
        %v1675 = vpop.xlane.xlu0 %1674
        %v1676 = vmax.f32 %v1533, %v1534
        %v1677 = vmax.f32 %v1676, %v1535
        %v1678 = vmax.f32 %v1677, %v1536
        %1679 = vmax.xlane.f32.xlu0 %v1678
        %v1680 = vpop.xlane.xlu0 %1679
        %v1681 = vmax.f32 %v1537, %v1538
        %v1682 = vmax.f32 %v1681, %v1539
        %v1683 = vmax.f32 %v1682, %v1540
        %1684 = vmax.xlane.f32.xlu0 %v1683
        %v1685 = vpop.xlane.xlu0 %1684
        %v1686 = vmax.f32 %v1541, %v1542
        %v1687 = vmax.f32 %v1686, %v1543
        %v1688 = vmax.f32 %v1687, %v1544
        %1689 = vmax.xlane.f32.xlu0 %v1688
        %v1690 = vpop.xlane.xlu0 %1689
        %v1691 = vmax.f32 %v1545, %v1546
        %v1692 = vmax.f32 %v1691, %v1547
        %v1693 = vmax.f32 %v1692, %v1548
        %1694 = vmax.xlane.f32.xlu0 %v1693
        %v1695 = vpop.xlane.xlu0 %1694
        %v1696 = vmax.f32 %v1549, %v1550
        %v1697 = vmax.f32 %v1696, %v1551
        %v1698 = vmax.f32 %v1697, %v1552
        %1699 = vmax.xlane.f32.xlu0 %v1698
        %v1700 = vpop.xlane.xlu0 %1699
        %v1701 = vmax.f32 %v1553, %v1554
        %v1702 = vmax.f32 %v1701, %v1555
        %v1703 = vmax.f32 %v1702, %v1556
        %1704 = vmax.xlane.f32.xlu0 %v1703
        %v1705 = vpop.xlane.xlu0 %1704
        %v1706 = vmax.f32 %v1557, %v1558
        %v1707 = vmax.f32 %v1706, %v1559
        %v1708 = vmax.f32 %v1707, %v1560
        %1709 = vmax.xlane.f32.xlu0 %v1708
        %v1710 = vpop.xlane.xlu0 %1709
        %v1711 = vmax.f32 %v1561, %v1562
        %v1712 = vmax.f32 %v1711, %v1563
        %v1713 = vmax.f32 %v1712, %v1564
        %1714 = vmax.xlane.f32.xlu0 %v1713
        %v1715 = vpop.xlane.xlu0 %1714
        %v1716 = vmax.f32 %v1565, %v1566
        %v1717 = vmax.f32 %v1716, %v1567
        %v1718 = vmax.f32 %v1717, %v1568
        %1719 = vmax.xlane.f32.xlu0 %v1718
        %v1720 = vpop.xlane.xlu0 %1719
        %v1721 = vmax.f32 %v1569, %v1570
        %v1722 = vmax.f32 %v1721, %v1571
        %v1723 = vmax.f32 %v1722, %v1572
        %1724 = vmax.xlane.f32.xlu0 %v1723
        %v1725 = vpop.xlane.xlu0 %1724
        %v1726 = vmax.f32 %v1573, %v1574
        %v1727 = vmax.f32 %v1726, %v1575
        %v1728 = vmax.f32 %v1727, %v1576
        %1729 = vmax.xlane.f32.xlu0 %v1728
        %v1730 = vpop.xlane.xlu0 %1729
        %v1731 = vmax.f32 %v1577, %v1578
        %v1732 = vmax.f32 %v1731, %v1579
        %v1733 = vmax.f32 %v1732, %v1580
        %1734 = vmax.xlane.f32.xlu0 %v1733
        %v1735 = vpop.xlane.xlu0 %1734
        %v1736 = vmax.f32 %v1581, %v1582
        %v1737 = vmax.f32 %v1736, %v1583
        %v1738 = vmax.f32 %v1737, %v1584
        %1739 = vmax.xlane.f32.xlu0 %v1738
        %v1740 = vpop.xlane.xlu0 %1739
        %v1741 = vmax.f32 %v1585, %v1586
        %v1742 = vmax.f32 %v1741, %v1587
        %v1743 = vmax.f32 %v1742, %v1588
        %1744 = vmax.xlane.f32.xlu0 %v1743
        %v1745 = vpop.xlane.xlu0 %1744
        %v1746 = vmax.f32 %v1589, %v1590
        %v1747 = vmax.f32 %v1746, %v1591
        %v1748 = vmax.f32 %v1747, %v1592
        %1749 = vmax.xlane.f32.xlu0 %v1748
        %v1750 = vpop.xlane.xlu0 %1749
        %v1751 = vmax.f32 %v1593, %v1594
        %v1752 = vmax.f32 %v1751, %v1595
        %v1753 = vmax.f32 %v1752, %v1596
        %1754 = vmax.xlane.f32.xlu0 %v1753
        %v1755 = vpop.xlane.xlu0 %1754
        %v1756 = vmax.f32 %v1597, %v1598
        %v1757 = vmax.f32 %v1756, %v1599
        %v1758 = vmax.f32 %v1757, %v1600
        %1759 = vmax.xlane.f32.xlu0 %v1758
        %v1760 = vpop.xlane.xlu0 %1759
        %v1761 = vsub.f32 %v1473, %v1605
        %v1762 = vsub.f32 %v1474, %v1605
        %v1763 = vsub.f32 %v1475, %v1605
        %v1764 = vsub.f32 %v1476, %v1605
        %v1765 = vsub.f32 %v1477, %v1610
        %v1766 = vsub.f32 %v1478, %v1610
        %v1767 = vsub.f32 %v1479, %v1610
        %v1768 = vsub.f32 %v1480, %v1610
        %v1769 = vsub.f32 %v1481, %v1615
        %v1770 = vsub.f32 %v1482, %v1615
        %v1771 = vsub.f32 %v1483, %v1615
        %v1772 = vsub.f32 %v1484, %v1615
        %v1773 = vsub.f32 %v1485, %v1620
        %v1774 = vsub.f32 %v1486, %v1620
        %v1775 = vsub.f32 %v1487, %v1620
        %v1776 = vsub.f32 %v1488, %v1620
        %v1777 = vsub.f32 %v1489, %v1625
        %v1778 = vsub.f32 %v1490, %v1625
        %v1779 = vsub.f32 %v1491, %v1625
        %v1780 = vsub.f32 %v1492, %v1625
        %v1781 = vsub.f32 %v1493, %v1630
        %v1782 = vsub.f32 %v1494, %v1630
        %v1783 = vsub.f32 %v1495, %v1630
        %v1784 = vsub.f32 %v1496, %v1630
        %v1785 = vsub.f32 %v1497, %v1635
        %v1786 = vsub.f32 %v1498, %v1635
        %v1787 = vsub.f32 %v1499, %v1635
        %v1788 = vsub.f32 %v1500, %v1635
        %v1789 = vsub.f32 %v1501, %v1640
        %v1790 = vsub.f32 %v1502, %v1640
        %v1791 = vsub.f32 %v1503, %v1640
        %v1792 = vsub.f32 %v1504, %v1640
        %v1793 = vsub.f32 %v1505, %v1645
        %v1794 = vsub.f32 %v1506, %v1645
        %v1795 = vsub.f32 %v1507, %v1645
        %v1796 = vsub.f32 %v1508, %v1645
        %v1797 = vsub.f32 %v1509, %v1650
        %v1798 = vsub.f32 %v1510, %v1650
        %v1799 = vsub.f32 %v1511, %v1650
        %v1800 = vsub.f32 %v1512, %v1650
        %v1801 = vsub.f32 %v1513, %v1655
        %v1802 = vsub.f32 %v1514, %v1655
        %v1803 = vsub.f32 %v1515, %v1655
        %v1804 = vsub.f32 %v1516, %v1655
        %v1805 = vsub.f32 %v1517, %v1660
        %v1806 = vsub.f32 %v1518, %v1660
        %v1807 = vsub.f32 %v1519, %v1660
        %v1808 = vsub.f32 %v1520, %v1660
        %v1809 = vsub.f32 %v1521, %v1665
        %v1810 = vsub.f32 %v1522, %v1665
        %v1811 = vsub.f32 %v1523, %v1665
        %v1812 = vsub.f32 %v1524, %v1665
        %v1813 = vsub.f32 %v1525, %v1670
        %v1814 = vsub.f32 %v1526, %v1670
        %v1815 = vsub.f32 %v1527, %v1670
        %v1816 = vsub.f32 %v1528, %v1670
        %v1817 = vsub.f32 %v1529, %v1675
        %v1818 = vsub.f32 %v1530, %v1675
        %v1819 = vsub.f32 %v1531, %v1675
        %v1820 = vsub.f32 %v1532, %v1675
        %v1821 = vsub.f32 %v1533, %v1680
        %v1822 = vsub.f32 %v1534, %v1680
        %v1823 = vsub.f32 %v1535, %v1680
        %v1824 = vsub.f32 %v1536, %v1680
        %v1825 = vsub.f32 %v1537, %v1685
        %v1826 = vsub.f32 %v1538, %v1685
        %v1827 = vsub.f32 %v1539, %v1685
        %v1828 = vsub.f32 %v1540, %v1685
        %v1829 = vsub.f32 %v1541, %v1690
        %v1830 = vsub.f32 %v1542, %v1690
        %v1831 = vsub.f32 %v1543, %v1690
        %v1832 = vsub.f32 %v1544, %v1690
        %v1833 = vsub.f32 %v1545, %v1695
        %v1834 = vsub.f32 %v1546, %v1695
        %v1835 = vsub.f32 %v1547, %v1695
        %v1836 = vsub.f32 %v1548, %v1695
        %v1837 = vsub.f32 %v1549, %v1700
        %v1838 = vsub.f32 %v1550, %v1700
        %v1839 = vsub.f32 %v1551, %v1700
        %v1840 = vsub.f32 %v1552, %v1700
        %v1841 = vsub.f32 %v1553, %v1705
        %v1842 = vsub.f32 %v1554, %v1705
        %v1843 = vsub.f32 %v1555, %v1705
        %v1844 = vsub.f32 %v1556, %v1705
        %v1845 = vsub.f32 %v1557, %v1710
        %v1846 = vsub.f32 %v1558, %v1710
        %v1847 = vsub.f32 %v1559, %v1710
        %v1848 = vsub.f32 %v1560, %v1710
        %v1849 = vsub.f32 %v1561, %v1715
        %v1850 = vsub.f32 %v1562, %v1715
        %v1851 = vsub.f32 %v1563, %v1715
        %v1852 = vsub.f32 %v1564, %v1715
        %v1853 = vsub.f32 %v1565, %v1720
        %v1854 = vsub.f32 %v1566, %v1720
        %v1855 = vsub.f32 %v1567, %v1720
        %v1856 = vsub.f32 %v1568, %v1720
        %v1857 = vsub.f32 %v1569, %v1725
        %v1858 = vsub.f32 %v1570, %v1725
        %v1859 = vsub.f32 %v1571, %v1725
        %v1860 = vsub.f32 %v1572, %v1725
        %v1861 = vsub.f32 %v1573, %v1730
        %v1862 = vsub.f32 %v1574, %v1730
        %v1863 = vsub.f32 %v1575, %v1730
        %v1864 = vsub.f32 %v1576, %v1730
        %v1865 = vsub.f32 %v1577, %v1735
        %v1866 = vsub.f32 %v1578, %v1735
        %v1867 = vsub.f32 %v1579, %v1735
        %v1868 = vsub.f32 %v1580, %v1735
        %v1869 = vsub.f32 %v1581, %v1740
        %v1870 = vsub.f32 %v1582, %v1740
        %v1871 = vsub.f32 %v1583, %v1740
        %v1872 = vsub.f32 %v1584, %v1740
        %v1873 = vsub.f32 %v1585, %v1745
        %v1874 = vsub.f32 %v1586, %v1745
        %v1875 = vsub.f32 %v1587, %v1745
        %v1876 = vsub.f32 %v1588, %v1745
        %v1877 = vsub.f32 %v1589, %v1750
        %v1878 = vsub.f32 %v1590, %v1750
        %v1879 = vsub.f32 %v1591, %v1750
        %v1880 = vsub.f32 %v1592, %v1750
        %v1881 = vsub.f32 %v1593, %v1755
        %v1882 = vsub.f32 %v1594, %v1755
        %v1883 = vsub.f32 %v1595, %v1755
        %v1884 = vsub.f32 %v1596, %v1755
        %v1885 = vsub.f32 %v1597, %v1760
        %v1886 = vsub.f32 %v1598, %v1760
        %v1887 = vsub.f32 %v1599, %v1760
        %v1888 = vsub.f32 %v1600, %v1760
        %v1889 = vmul.f32 %v1761, 1.442695
        %v1890 = vpow.pop %v1889
        %v1891 = vmul.f32 %v1762, 1.442695
        %v1892 = vpow.pop %v1891
        %v1893 = vmul.f32 %v1763, 1.442695
        %v1894 = vpow.pop %v1893
        %v1895 = vmul.f32 %v1764, 1.442695
        %v1896 = vpow.pop %v1895
        %v1897 = vmul.f32 %v1765, 1.442695
        %v1898 = vpow.pop %v1897
        %v1899 = vmul.f32 %v1766, 1.442695
        %v1900 = vpow.pop %v1899
        %v1901 = vmul.f32 %v1767, 1.442695
        %v1902 = vpow.pop %v1901
        %v1903 = vmul.f32 %v1768, 1.442695
        %v1904 = vpow.pop %v1903
        %v1905 = vmul.f32 %v1769, 1.442695
        %v1906 = vpow.pop %v1905
        %v1907 = vmul.f32 %v1770, 1.442695
        %v1908 = vpow.pop %v1907
        %v1909 = vmul.f32 %v1771, 1.442695
        %v1910 = vpow.pop %v1909
        %v1911 = vmul.f32 %v1772, 1.442695
        %v1912 = vpow.pop %v1911
        %v1913 = vmul.f32 %v1773, 1.442695
        %v1914 = vpow.pop %v1913
        %v1915 = vmul.f32 %v1774, 1.442695
        %v1916 = vpow.pop %v1915
        %v1917 = vmul.f32 %v1775, 1.442695
        %v1918 = vpow.pop %v1917
        %v1919 = vmul.f32 %v1776, 1.442695
        %v1920 = vpow.pop %v1919
        %v1921 = vmul.f32 %v1777, 1.442695
        %v1922 = vpow.pop %v1921
        %v1923 = vmul.f32 %v1778, 1.442695
        %v1924 = vpow.pop %v1923
        %v1925 = vmul.f32 %v1779, 1.442695
        %v1926 = vpow.pop %v1925
        %v1927 = vmul.f32 %v1780, 1.442695
        %v1928 = vpow.pop %v1927
        %v1929 = vmul.f32 %v1781, 1.442695
        %v1930 = vpow.pop %v1929
        %v1931 = vmul.f32 %v1782, 1.442695
        %v1932 = vpow.pop %v1931
        %v1933 = vmul.f32 %v1783, 1.442695
        %v1934 = vpow.pop %v1933
        %v1935 = vmul.f32 %v1784, 1.442695
        %v1936 = vpow.pop %v1935
        %v1937 = vmul.f32 %v1785, 1.442695
        %v1938 = vpow.pop %v1937
        %v1939 = vmul.f32 %v1786, 1.442695
        %v1940 = vpow.pop %v1939
        %v1941 = vmul.f32 %v1787, 1.442695
        %v1942 = vpow.pop %v1941
        %v1943 = vmul.f32 %v1788, 1.442695
        %v1944 = vpow.pop %v1943
        %v1945 = vmul.f32 %v1789, 1.442695
        %v1946 = vpow.pop %v1945
        %v1947 = vmul.f32 %v1790, 1.442695
        %v1948 = vpow.pop %v1947
        %v1949 = vmul.f32 %v1791, 1.442695
        %v1950 = vpow.pop %v1949
        %v1951 = vmul.f32 %v1792, 1.442695
        %v1952 = vpow.pop %v1951
        %v1953 = vmul.f32 %v1793, 1.442695
        %v1954 = vpow.pop %v1953
        %v1955 = vmul.f32 %v1794, 1.442695
        %v1956 = vpow.pop %v1955
        %v1957 = vmul.f32 %v1795, 1.442695
        %v1958 = vpow.pop %v1957
        %v1959 = vmul.f32 %v1796, 1.442695
        %v1960 = vpow.pop %v1959
        %v1961 = vmul.f32 %v1797, 1.442695
        %v1962 = vpow.pop %v1961
        %v1963 = vmul.f32 %v1798, 1.442695
        %v1964 = vpow.pop %v1963
        %v1965 = vmul.f32 %v1799, 1.442695
        %v1966 = vpow.pop %v1965
        %v1967 = vmul.f32 %v1800, 1.442695
        %v1968 = vpow.pop %v1967
        %v1969 = vmul.f32 %v1801, 1.442695
        %v1970 = vpow.pop %v1969
        %v1971 = vmul.f32 %v1802, 1.442695
        %v1972 = vpow.pop %v1971
        %v1973 = vmul.f32 %v1803, 1.442695
        %v1974 = vpow.pop %v1973
        %v1975 = vmul.f32 %v1804, 1.442695
        %v1976 = vpow.pop %v1975
        %v1977 = vmul.f32 %v1805, 1.442695
        %v1978 = vpow.pop %v1977
        %v1979 = vmul.f32 %v1806, 1.442695
        %v1980 = vpow.pop %v1979
        %v1981 = vmul.f32 %v1807, 1.442695
        %v1982 = vpow.pop %v1981
        %v1983 = vmul.f32 %v1808, 1.442695
        %v1984 = vpow.pop %v1983
        %v1985 = vmul.f32 %v1809, 1.442695
        %v1986 = vpow.pop %v1985
        %v1987 = vmul.f32 %v1810, 1.442695
        %v1988 = vpow.pop %v1987
        %v1989 = vmul.f32 %v1811, 1.442695
        %v1990 = vpow.pop %v1989
        %v1991 = vmul.f32 %v1812, 1.442695
        %v1992 = vpow.pop %v1991
        %v1993 = vmul.f32 %v1813, 1.442695
        %v1994 = vpow.pop %v1993
        %v1995 = vmul.f32 %v1814, 1.442695
        %v1996 = vpow.pop %v1995
        %v1997 = vmul.f32 %v1815, 1.442695
        %v1998 = vpow.pop %v1997
        %v1999 = vmul.f32 %v1816, 1.442695
        %v2000 = vpow.pop %v1999
        %v2001 = vmul.f32 %v1817, 1.442695
        %v2002 = vpow.pop %v2001
        %v2003 = vmul.f32 %v1818, 1.442695
        %v2004 = vpow.pop %v2003
        %v2005 = vmul.f32 %v1819, 1.442695
        %v2006 = vpow.pop %v2005
        %v2007 = vmul.f32 %v1820, 1.442695
        %v2008 = vpow.pop %v2007
        %v2009 = vmul.f32 %v1821, 1.442695
        %v2010 = vpow.pop %v2009
        %v2011 = vmul.f32 %v1822, 1.442695
        %v2012 = vpow.pop %v2011
        %v2013 = vmul.f32 %v1823, 1.442695
        %v2014 = vpow.pop %v2013
        %v2015 = vmul.f32 %v1824, 1.442695
        %v2016 = vpow.pop %v2015
        %v2017 = vmul.f32 %v1825, 1.442695
        %v2018 = vpow.pop %v2017
        %v2019 = vmul.f32 %v1826, 1.442695
        %v2020 = vpow.pop %v2019
        %v2021 = vmul.f32 %v1827, 1.442695
        %v2022 = vpow.pop %v2021
        %v2023 = vmul.f32 %v1828, 1.442695
        %v2024 = vpow.pop %v2023
        %v2025 = vmul.f32 %v1829, 1.442695
        %v2026 = vpow.pop %v2025
        %v2027 = vmul.f32 %v1830, 1.442695
        %v2028 = vpow.pop %v2027
        %v2029 = vmul.f32 %v1831, 1.442695
        %v2030 = vpow.pop %v2029
        %v2031 = vmul.f32 %v1832, 1.442695
        %v2032 = vpow.pop %v2031
        %v2033 = vmul.f32 %v1833, 1.442695
        %v2034 = vpow.pop %v2033
        %v2035 = vmul.f32 %v1834, 1.442695
        %v2036 = vpow.pop %v2035
        %v2037 = vmul.f32 %v1835, 1.442695
        %v2038 = vpow.pop %v2037
        %v2039 = vmul.f32 %v1836, 1.442695
        %v2040 = vpow.pop %v2039
        %v2041 = vmul.f32 %v1837, 1.442695
        %v2042 = vpow.pop %v2041
        %v2043 = vmul.f32 %v1838, 1.442695
        %v2044 = vpow.pop %v2043
        %v2045 = vmul.f32 %v1839, 1.442695
        %v2046 = vpow.pop %v2045
        %v2047 = vmul.f32 %v1840, 1.442695
        %v2048 = vpow.pop %v2047
        %v2049 = vmul.f32 %v1841, 1.442695
        %v2050 = vpow.pop %v2049
        %v2051 = vmul.f32 %v1842, 1.442695
        %v2052 = vpow.pop %v2051
        %v2053 = vmul.f32 %v1843, 1.442695
        %v2054 = vpow.pop %v2053
        %v2055 = vmul.f32 %v1844, 1.442695
        %v2056 = vpow.pop %v2055
        %v2057 = vmul.f32 %v1845, 1.442695
        %v2058 = vpow.pop %v2057
        %v2059 = vmul.f32 %v1846, 1.442695
        %v2060 = vpow.pop %v2059
        %v2061 = vmul.f32 %v1847, 1.442695
        %v2062 = vpow.pop %v2061
        %v2063 = vmul.f32 %v1848, 1.442695
        %v2064 = vpow.pop %v2063
        %v2065 = vmul.f32 %v1849, 1.442695
        %v2066 = vpow.pop %v2065
        %v2067 = vmul.f32 %v1850, 1.442695
        %v2068 = vpow.pop %v2067
        %v2069 = vmul.f32 %v1851, 1.442695
        %v2070 = vpow.pop %v2069
        %v2071 = vmul.f32 %v1852, 1.442695
        %v2072 = vpow.pop %v2071
        %v2073 = vmul.f32 %v1853, 1.442695
        %v2074 = vpow.pop %v2073
        %v2075 = vmul.f32 %v1854, 1.442695
        %v2076 = vpow.pop %v2075
        %v2077 = vmul.f32 %v1855, 1.442695
        %v2078 = vpow.pop %v2077
        %v2079 = vmul.f32 %v1856, 1.442695
        %v2080 = vpow.pop %v2079
        %v2081 = vmul.f32 %v1857, 1.442695
        %v2082 = vpow.pop %v2081
        %v2083 = vmul.f32 %v1858, 1.442695
        %v2084 = vpow.pop %v2083
        %v2085 = vmul.f32 %v1859, 1.442695
        %v2086 = vpow.pop %v2085
        %v2087 = vmul.f32 %v1860, 1.442695
        %v2088 = vpow.pop %v2087
        %v2089 = vmul.f32 %v1861, 1.442695
        %v2090 = vpow.pop %v2089
        %v2091 = vmul.f32 %v1862, 1.442695
        %v2092 = vpow.pop %v2091
        %v2093 = vmul.f32 %v1863, 1.442695
        %v2094 = vpow.pop %v2093
        %v2095 = vmul.f32 %v1864, 1.442695
        %v2096 = vpow.pop %v2095
        %v2097 = vmul.f32 %v1865, 1.442695
        %v2098 = vpow.pop %v2097
        %v2099 = vmul.f32 %v1866, 1.442695
        %v2100 = vpow.pop %v2099
        %v2101 = vmul.f32 %v1867, 1.442695
        %v2102 = vpow.pop %v2101
        %v2103 = vmul.f32 %v1868, 1.442695
        %v2104 = vpow.pop %v2103
        %v2105 = vmul.f32 %v1869, 1.442695
        %v2106 = vpow.pop %v2105
        %v2107 = vmul.f32 %v1870, 1.442695
        %v2108 = vpow.pop %v2107
        %v2109 = vmul.f32 %v1871, 1.442695
        %v2110 = vpow.pop %v2109
        %v2111 = vmul.f32 %v1872, 1.442695
        %v2112 = vpow.pop %v2111
        %v2113 = vmul.f32 %v1873, 1.442695
        %v2114 = vpow.pop %v2113
        %v2115 = vmul.f32 %v1874, 1.442695
        %v2116 = vpow.pop %v2115
        %v2117 = vmul.f32 %v1875, 1.442695
        %v2118 = vpow.pop %v2117
        %v2119 = vmul.f32 %v1876, 1.442695
        %v2120 = vpow.pop %v2119
        %v2121 = vmul.f32 %v1877, 1.442695
        %v2122 = vpow.pop %v2121
        %v2123 = vmul.f32 %v1878, 1.442695
        %v2124 = vpow.pop %v2123
        %v2125 = vmul.f32 %v1879, 1.442695
        %v2126 = vpow.pop %v2125
        %v2127 = vmul.f32 %v1880, 1.442695
        %v2128 = vpow.pop %v2127
        %v2129 = vmul.f32 %v1881, 1.442695
        %v2130 = vpow.pop %v2129
        %v2131 = vmul.f32 %v1882, 1.442695
        %v2132 = vpow.pop %v2131
        %v2133 = vmul.f32 %v1883, 1.442695
        %v2134 = vpow.pop %v2133
        %v2135 = vmul.f32 %v1884, 1.442695
        %v2136 = vpow.pop %v2135
        %v2137 = vmul.f32 %v1885, 1.442695
        %v2138 = vpow.pop %v2137
        %v2139 = vmul.f32 %v1886, 1.442695
        %v2140 = vpow.pop %v2139
        %v2141 = vmul.f32 %v1887, 1.442695
        %v2142 = vpow.pop %v2141
        %v2143 = vmul.f32 %v1888, 1.442695
        %v2144 = vpow.pop %v2143
        %v2145 = vadd.f32 %v1890, %v1892
        %v2146 = vadd.f32 %v2145, %v1894
        %v2147 = vadd.f32 %v2146, %v1896
        %2148 = vadd.xlane.f32.xlu0 %v2147
        %v2149 = vpop.xlane.xlu0 %2148
        %v2150 = vadd.f32 %v1898, %v1900
        %v2151 = vadd.f32 %v2150, %v1902
        %v2152 = vadd.f32 %v2151, %v1904
        %2153 = vadd.xlane.f32.xlu0 %v2152
        %v2154 = vpop.xlane.xlu0 %2153
        %v2155 = vadd.f32 %v1906, %v1908
        %v2156 = vadd.f32 %v2155, %v1910
        %v2157 = vadd.f32 %v2156, %v1912
        %2158 = vadd.xlane.f32.xlu0 %v2157
        %v2159 = vpop.xlane.xlu0 %2158
        %v2160 = vadd.f32 %v1914, %v1916
        %v2161 = vadd.f32 %v2160, %v1918
        %v2162 = vadd.f32 %v2161, %v1920
        %2163 = vadd.xlane.f32.xlu0 %v2162
        %v2164 = vpop.xlane.xlu0 %2163
        %v2165 = vadd.f32 %v1922, %v1924
        %v2166 = vadd.f32 %v2165, %v1926
        %v2167 = vadd.f32 %v2166, %v1928
        %2168 = vadd.xlane.f32.xlu0 %v2167
        %v2169 = vpop.xlane.xlu0 %2168
        %v2170 = vadd.f32 %v1930, %v1932
        %v2171 = vadd.f32 %v2170, %v1934
        %v2172 = vadd.f32 %v2171, %v1936
        %2173 = vadd.xlane.f32.xlu0 %v2172
        %v2174 = vpop.xlane.xlu0 %2173
        %v2175 = vadd.f32 %v1938, %v1940
        %v2176 = vadd.f32 %v2175, %v1942
        %v2177 = vadd.f32 %v2176, %v1944
        %2178 = vadd.xlane.f32.xlu0 %v2177
        %v2179 = vpop.xlane.xlu0 %2178
        %v2180 = vadd.f32 %v1946, %v1948
        %v2181 = vadd.f32 %v2180, %v1950
        %v2182 = vadd.f32 %v2181, %v1952
        %2183 = vadd.xlane.f32.xlu0 %v2182
        %v2184 = vpop.xlane.xlu0 %2183
        %v2185 = vadd.f32 %v1954, %v1956
        %v2186 = vadd.f32 %v2185, %v1958
        %v2187 = vadd.f32 %v2186, %v1960
        %2188 = vadd.xlane.f32.xlu0 %v2187
        %v2189 = vpop.xlane.xlu0 %2188
        %v2190 = vadd.f32 %v1962, %v1964
        %v2191 = vadd.f32 %v2190, %v1966
        %v2192 = vadd.f32 %v2191, %v1968
        %2193 = vadd.xlane.f32.xlu0 %v2192
        %v2194 = vpop.xlane.xlu0 %2193
        %v2195 = vadd.f32 %v1970, %v1972
        %v2196 = vadd.f32 %v2195, %v1974
        %v2197 = vadd.f32 %v2196, %v1976
        %2198 = vadd.xlane.f32.xlu0 %v2197
        %v2199 = vpop.xlane.xlu0 %2198
        %v2200 = vadd.f32 %v1978, %v1980
        %v2201 = vadd.f32 %v2200, %v1982
        %v2202 = vadd.f32 %v2201, %v1984
        %2203 = vadd.xlane.f32.xlu0 %v2202
        %v2204 = vpop.xlane.xlu0 %2203
        %v2205 = vadd.f32 %v1986, %v1988
        %v2206 = vadd.f32 %v2205, %v1990
        %v2207 = vadd.f32 %v2206, %v1992
        %2208 = vadd.xlane.f32.xlu0 %v2207
        %v2209 = vpop.xlane.xlu0 %2208
        %v2210 = vadd.f32 %v1994, %v1996
        %v2211 = vadd.f32 %v2210, %v1998
        %v2212 = vadd.f32 %v2211, %v2000
        %2213 = vadd.xlane.f32.xlu0 %v2212
        %v2214 = vpop.xlane.xlu0 %2213
        %v2215 = vadd.f32 %v2002, %v2004
        %v2216 = vadd.f32 %v2215, %v2006
        %v2217 = vadd.f32 %v2216, %v2008
        %2218 = vadd.xlane.f32.xlu0 %v2217
        %v2219 = vpop.xlane.xlu0 %2218
        %v2220 = vadd.f32 %v2010, %v2012
        %v2221 = vadd.f32 %v2220, %v2014
        %v2222 = vadd.f32 %v2221, %v2016
        %2223 = vadd.xlane.f32.xlu0 %v2222
        %v2224 = vpop.xlane.xlu0 %2223
        %v2225 = vadd.f32 %v2018, %v2020
        %v2226 = vadd.f32 %v2225, %v2022
        %v2227 = vadd.f32 %v2226, %v2024
        %2228 = vadd.xlane.f32.xlu0 %v2227
        %v2229 = vpop.xlane.xlu0 %2228
        %v2230 = vadd.f32 %v2026, %v2028
        %v2231 = vadd.f32 %v2230, %v2030
        %v2232 = vadd.f32 %v2231, %v2032
        %2233 = vadd.xlane.f32.xlu0 %v2232
        %v2234 = vpop.xlane.xlu0 %2233
        %v2235 = vadd.f32 %v2034, %v2036
        %v2236 = vadd.f32 %v2235, %v2038
        %v2237 = vadd.f32 %v2236, %v2040
        %2238 = vadd.xlane.f32.xlu0 %v2237
        %v2239 = vpop.xlane.xlu0 %2238
        %v2240 = vadd.f32 %v2042, %v2044
        %v2241 = vadd.f32 %v2240, %v2046
        %v2242 = vadd.f32 %v2241, %v2048
        %2243 = vadd.xlane.f32.xlu0 %v2242
        %v2244 = vpop.xlane.xlu0 %2243
        %v2245 = vadd.f32 %v2050, %v2052
        %v2246 = vadd.f32 %v2245, %v2054
        %v2247 = vadd.f32 %v2246, %v2056
        %2248 = vadd.xlane.f32.xlu0 %v2247
        %v2249 = vpop.xlane.xlu0 %2248
        %v2250 = vadd.f32 %v2058, %v2060
        %v2251 = vadd.f32 %v2250, %v2062
        %v2252 = vadd.f32 %v2251, %v2064
        %2253 = vadd.xlane.f32.xlu0 %v2252
        %v2254 = vpop.xlane.xlu0 %2253
        %v2255 = vadd.f32 %v2066, %v2068
        %v2256 = vadd.f32 %v2255, %v2070
        %v2257 = vadd.f32 %v2256, %v2072
        %2258 = vadd.xlane.f32.xlu0 %v2257
        %v2259 = vpop.xlane.xlu0 %2258
        %v2260 = vadd.f32 %v2074, %v2076
        %v2261 = vadd.f32 %v2260, %v2078
        %v2262 = vadd.f32 %v2261, %v2080
        %2263 = vadd.xlane.f32.xlu0 %v2262
        %v2264 = vpop.xlane.xlu0 %2263
        %v2265 = vadd.f32 %v2082, %v2084
        %v2266 = vadd.f32 %v2265, %v2086
        %v2267 = vadd.f32 %v2266, %v2088
        %2268 = vadd.xlane.f32.xlu0 %v2267
        %v2269 = vpop.xlane.xlu0 %2268
        %v2270 = vadd.f32 %v2090, %v2092
        %v2271 = vadd.f32 %v2270, %v2094
        %v2272 = vadd.f32 %v2271, %v2096
        %2273 = vadd.xlane.f32.xlu0 %v2272
        %v2274 = vpop.xlane.xlu0 %2273
        %v2275 = vadd.f32 %v2098, %v2100
        %v2276 = vadd.f32 %v2275, %v2102
        %v2277 = vadd.f32 %v2276, %v2104
        %2278 = vadd.xlane.f32.xlu0 %v2277
        %v2279 = vpop.xlane.xlu0 %2278
        %v2280 = vadd.f32 %v2106, %v2108
        %v2281 = vadd.f32 %v2280, %v2110
        %v2282 = vadd.f32 %v2281, %v2112
        %2283 = vadd.xlane.f32.xlu0 %v2282
        %v2284 = vpop.xlane.xlu0 %2283
        %v2285 = vadd.f32 %v2114, %v2116
        %v2286 = vadd.f32 %v2285, %v2118
        %v2287 = vadd.f32 %v2286, %v2120
        %2288 = vadd.xlane.f32.xlu0 %v2287
        %v2289 = vpop.xlane.xlu0 %2288
        %v2290 = vadd.f32 %v2122, %v2124
        %v2291 = vadd.f32 %v2290, %v2126
        %v2292 = vadd.f32 %v2291, %v2128
        %2293 = vadd.xlane.f32.xlu0 %v2292
        %v2294 = vpop.xlane.xlu0 %2293
        %v2295 = vadd.f32 %v2130, %v2132
        %v2296 = vadd.f32 %v2295, %v2134
        %v2297 = vadd.f32 %v2296, %v2136
        %2298 = vadd.xlane.f32.xlu0 %v2297
        %v2299 = vpop.xlane.xlu0 %2298
        %v2300 = vadd.f32 %v2138, %v2140
        %v2301 = vadd.f32 %v2300, %v2142
        %v2302 = vadd.f32 %v2301, %v2144
        %2303 = vadd.xlane.f32.xlu0 %v2302
        %v2304 = vpop.xlane.xlu0 %2303
        %v2305 = vrcp.pop %v2149
        %v2306 = vrcp.pop %v2154
        %v2307 = vrcp.pop %v2159
        %v2308 = vrcp.pop %v2164
        %v2309 = vrcp.pop %v2169
        %v2310 = vrcp.pop %v2174
        %v2311 = vrcp.pop %v2179
        %v2312 = vrcp.pop %v2184
        %v2313 = vrcp.pop %v2189
        %v2314 = vrcp.pop %v2194
        %v2315 = vrcp.pop %v2199
        %v2316 = vrcp.pop %v2204
        %v2317 = vrcp.pop %v2209
        %v2318 = vrcp.pop %v2214
        %v2319 = vrcp.pop %v2219
        %v2320 = vrcp.pop %v2224
        %v2321 = vrcp.pop %v2229
        %v2322 = vrcp.pop %v2234
        %v2323 = vrcp.pop %v2239
        %v2324 = vrcp.pop %v2244
        %v2325 = vrcp.pop %v2249
        %v2326 = vrcp.pop %v2254
        %v2327 = vrcp.pop %v2259
        %v2328 = vrcp.pop %v2264
        %v2329 = vrcp.pop %v2269
        %v2330 = vrcp.pop %v2274
        %v2331 = vrcp.pop %v2279
        %v2332 = vrcp.pop %v2284
        %v2333 = vrcp.pop %v2289
        %v2334 = vrcp.pop %v2294
        %v2335 = vrcp.pop %v2299
        %v2336 = vrcp.pop %v2304
        %v2337 = vmul.f32 %v1890, %v2305
        %v2338 = vmul.f32 %v1892, %v2305
        %v2339 = vmul.f32 %v1894, %v2305
        %v2340 = vmul.f32 %v1896, %v2305
        %v2341 = vmul.f32 %v1898, %v2306
        %v2342 = vmul.f32 %v1900, %v2306
        %v2343 = vmul.f32 %v1902, %v2306
        %v2344 = vmul.f32 %v1904, %v2306
        %v2345 = vmul.f32 %v1906, %v2307
        %v2346 = vmul.f32 %v1908, %v2307
        %v2347 = vmul.f32 %v1910, %v2307
        %v2348 = vmul.f32 %v1912, %v2307
        %v2349 = vmul.f32 %v1914, %v2308
        %v2350 = vmul.f32 %v1916, %v2308
        %v2351 = vmul.f32 %v1918, %v2308
        %v2352 = vmul.f32 %v1920, %v2308
        %v2353 = vmul.f32 %v1922, %v2309
        %v2354 = vmul.f32 %v1924, %v2309
        %v2355 = vmul.f32 %v1926, %v2309
        %v2356 = vmul.f32 %v1928, %v2309
        %v2357 = vmul.f32 %v1930, %v2310
        %v2358 = vmul.f32 %v1932, %v2310
        %v2359 = vmul.f32 %v1934, %v2310
        %v2360 = vmul.f32 %v1936, %v2310
        %v2361 = vmul.f32 %v1938, %v2311
        %v2362 = vmul.f32 %v1940, %v2311
        %v2363 = vmul.f32 %v1942, %v2311
        %v2364 = vmul.f32 %v1944, %v2311
        %v2365 = vmul.f32 %v1946, %v2312
        %v2366 = vmul.f32 %v1948, %v2312
        %v2367 = vmul.f32 %v1950, %v2312
        %v2368 = vmul.f32 %v1952, %v2312
        %v2369 = vmul.f32 %v1954, %v2313
        %v2370 = vmul.f32 %v1956, %v2313
        %v2371 = vmul.f32 %v1958, %v2313
        %v2372 = vmul.f32 %v1960, %v2313
        %v2373 = vmul.f32 %v1962, %v2314
        %v2374 = vmul.f32 %v1964, %v2314
        %v2375 = vmul.f32 %v1966, %v2314
        %v2376 = vmul.f32 %v1968, %v2314
        %v2377 = vmul.f32 %v1970, %v2315
        %v2378 = vmul.f32 %v1972, %v2315
        %v2379 = vmul.f32 %v1974, %v2315
        %v2380 = vmul.f32 %v1976, %v2315
        %v2381 = vmul.f32 %v1978, %v2316
        %v2382 = vmul.f32 %v1980, %v2316
        %v2383 = vmul.f32 %v1982, %v2316
        %v2384 = vmul.f32 %v1984, %v2316
        %v2385 = vmul.f32 %v1986, %v2317
        %v2386 = vmul.f32 %v1988, %v2317
        %v2387 = vmul.f32 %v1990, %v2317
        %v2388 = vmul.f32 %v1992, %v2317
        %v2389 = vmul.f32 %v1994, %v2318
        %v2390 = vmul.f32 %v1996, %v2318
        %v2391 = vmul.f32 %v1998, %v2318
        %v2392 = vmul.f32 %v2000, %v2318
        %v2393 = vmul.f32 %v2002, %v2319
        %v2394 = vmul.f32 %v2004, %v2319
        %v2395 = vmul.f32 %v2006, %v2319
        %v2396 = vmul.f32 %v2008, %v2319
        %v2397 = vmul.f32 %v2010, %v2320
        %v2398 = vmul.f32 %v2012, %v2320
        %v2399 = vmul.f32 %v2014, %v2320
        %v2400 = vmul.f32 %v2016, %v2320
        %v2401 = vmul.f32 %v2018, %v2321
        %v2402 = vmul.f32 %v2020, %v2321
        %v2403 = vmul.f32 %v2022, %v2321
        %v2404 = vmul.f32 %v2024, %v2321
        %v2405 = vmul.f32 %v2026, %v2322
        %v2406 = vmul.f32 %v2028, %v2322
        %v2407 = vmul.f32 %v2030, %v2322
        %v2408 = vmul.f32 %v2032, %v2322
        %v2409 = vmul.f32 %v2034, %v2323
        %v2410 = vmul.f32 %v2036, %v2323
        %v2411 = vmul.f32 %v2038, %v2323
        %v2412 = vmul.f32 %v2040, %v2323
        %v2413 = vmul.f32 %v2042, %v2324
        %v2414 = vmul.f32 %v2044, %v2324
        %v2415 = vmul.f32 %v2046, %v2324
        %v2416 = vmul.f32 %v2048, %v2324
        %v2417 = vmul.f32 %v2050, %v2325
        %v2418 = vmul.f32 %v2052, %v2325
        %v2419 = vmul.f32 %v2054, %v2325
        %v2420 = vmul.f32 %v2056, %v2325
        %v2421 = vmul.f32 %v2058, %v2326
        %v2422 = vmul.f32 %v2060, %v2326
        %v2423 = vmul.f32 %v2062, %v2326
        %v2424 = vmul.f32 %v2064, %v2326
        %v2425 = vmul.f32 %v2066, %v2327
        %v2426 = vmul.f32 %v2068, %v2327
        %v2427 = vmul.f32 %v2070, %v2327
        %v2428 = vmul.f32 %v2072, %v2327
        %v2429 = vmul.f32 %v2074, %v2328
        %v2430 = vmul.f32 %v2076, %v2328
        %v2431 = vmul.f32 %v2078, %v2328
        %v2432 = vmul.f32 %v2080, %v2328
        %v2433 = vmul.f32 %v2082, %v2329
        %v2434 = vmul.f32 %v2084, %v2329
        %v2435 = vmul.f32 %v2086, %v2329
        %v2436 = vmul.f32 %v2088, %v2329
        %v2437 = vmul.f32 %v2090, %v2330
        %v2438 = vmul.f32 %v2092, %v2330
        %v2439 = vmul.f32 %v2094, %v2330
        %v2440 = vmul.f32 %v2096, %v2330
        %v2441 = vmul.f32 %v2098, %v2331
        %v2442 = vmul.f32 %v2100, %v2331
        %v2443 = vmul.f32 %v2102, %v2331
        %v2444 = vmul.f32 %v2104, %v2331
        %v2445 = vmul.f32 %v2106, %v2332
        %v2446 = vmul.f32 %v2108, %v2332
        %v2447 = vmul.f32 %v2110, %v2332
        %v2448 = vmul.f32 %v2112, %v2332
        %v2449 = vmul.f32 %v2114, %v2333
        %v2450 = vmul.f32 %v2116, %v2333
        %v2451 = vmul.f32 %v2118, %v2333
        %v2452 = vmul.f32 %v2120, %v2333
        %v2453 = vmul.f32 %v2122, %v2334
        %v2454 = vmul.f32 %v2124, %v2334
        %v2455 = vmul.f32 %v2126, %v2334
        %v2456 = vmul.f32 %v2128, %v2334
        %v2457 = vmul.f32 %v2130, %v2335
        %v2458 = vmul.f32 %v2132, %v2335
        %v2459 = vmul.f32 %v2134, %v2335
        %v2460 = vmul.f32 %v2136, %v2335
        %v2461 = vmul.f32 %v2138, %v2336
        %v2462 = vmul.f32 %v2140, %v2336
        %v2463 = vmul.f32 %v2142, %v2336
        %v2464 = vmul.f32 %v2144, %v2336
        %v2465 = vpack.c.bf16 %v2341, %v2337
        %v2466 = vpack.c.bf16 %v2342, %v2338
        %v2467 = vpack.c.bf16 %v2343, %v2339
        %v2468 = vpack.c.bf16 %v2344, %v2340
        %v2469 = vpack.c.bf16 %v2349, %v2345
        %v2470 = vpack.c.bf16 %v2350, %v2346
        %v2471 = vpack.c.bf16 %v2351, %v2347
        %v2472 = vpack.c.bf16 %v2352, %v2348
        %v2473 = vpack.c.bf16 %v2357, %v2353
        %v2474 = vpack.c.bf16 %v2358, %v2354
        %v2475 = vpack.c.bf16 %v2359, %v2355
        %v2476 = vpack.c.bf16 %v2360, %v2356
        %v2477 = vpack.c.bf16 %v2365, %v2361
        %v2478 = vpack.c.bf16 %v2366, %v2362
        %v2479 = vpack.c.bf16 %v2367, %v2363
        %v2480 = vpack.c.bf16 %v2368, %v2364
        %v2481 = vpack.c.bf16 %v2373, %v2369
        %v2482 = vpack.c.bf16 %v2374, %v2370
        %v2483 = vpack.c.bf16 %v2375, %v2371
        %v2484 = vpack.c.bf16 %v2376, %v2372
        %v2485 = vpack.c.bf16 %v2381, %v2377
        %v2486 = vpack.c.bf16 %v2382, %v2378
        %v2487 = vpack.c.bf16 %v2383, %v2379
        %v2488 = vpack.c.bf16 %v2384, %v2380
        %v2489 = vpack.c.bf16 %v2389, %v2385
        %v2490 = vpack.c.bf16 %v2390, %v2386
        %v2491 = vpack.c.bf16 %v2391, %v2387
        %v2492 = vpack.c.bf16 %v2392, %v2388
        %v2493 = vpack.c.bf16 %v2397, %v2393
        %v2494 = vpack.c.bf16 %v2398, %v2394
        %v2495 = vpack.c.bf16 %v2399, %v2395
        %v2496 = vpack.c.bf16 %v2400, %v2396
        %v2497 = vpack.c.bf16 %v2405, %v2401
        %v2498 = vpack.c.bf16 %v2406, %v2402
        %v2499 = vpack.c.bf16 %v2407, %v2403
        %v2500 = vpack.c.bf16 %v2408, %v2404
        %v2501 = vpack.c.bf16 %v2413, %v2409
        %v2502 = vpack.c.bf16 %v2414, %v2410
        %v2503 = vpack.c.bf16 %v2415, %v2411
        %v2504 = vpack.c.bf16 %v2416, %v2412
        %v2505 = vpack.c.bf16 %v2421, %v2417
        %v2506 = vpack.c.bf16 %v2422, %v2418
        %v2507 = vpack.c.bf16 %v2423, %v2419
        %v2508 = vpack.c.bf16 %v2424, %v2420
        %v2509 = vpack.c.bf16 %v2429, %v2425
        %v2510 = vpack.c.bf16 %v2430, %v2426
        %v2511 = vpack.c.bf16 %v2431, %v2427
        %v2512 = vpack.c.bf16 %v2432, %v2428
        %v2513 = vpack.c.bf16 %v2437, %v2433
        %v2514 = vpack.c.bf16 %v2438, %v2434
        %v2515 = vpack.c.bf16 %v2439, %v2435
        %v2516 = vpack.c.bf16 %v2440, %v2436
        %v2517 = vpack.c.bf16 %v2445, %v2441
        %v2518 = vpack.c.bf16 %v2446, %v2442
        %v2519 = vpack.c.bf16 %v2447, %v2443
        %v2520 = vpack.c.bf16 %v2448, %v2444
        %v2521 = vpack.c.bf16 %v2453, %v2449
        %v2522 = vpack.c.bf16 %v2454, %v2450
        %v2523 = vpack.c.bf16 %v2455, %v2451
        %v2524 = vpack.c.bf16 %v2456, %v2452
        %v2525 = vpack.c.bf16 %v2461, %v2457
        %v2526 = vpack.c.bf16 %v2462, %v2458
        %v2527 = vpack.c.bf16 %v2463, %v2459
        %v2528 = vpack.c.bf16 %v2464, %v2460
        %2529 = vmatprep.subr.bf16.mxu0 0
        %2530 = vmatpush1.bf16.msra.mxu0 %v918
        %2531 = vmatprep.subr.bf16.mxu0 0
        %2532 = vmatpush1.bf16.msra.mxu0 %v919
        %2533 = vmatprep.subr.bf16.mxu0 0
        %2534 = vmatpush1.bf16.msra.mxu0 %v920
        %2535 = vmatprep.subr.bf16.mxu0 0
        %2536 = vmatpush1.bf16.msra.mxu0 %v921
        %2537 = vmatprep.subr.bf16.mxu0 0
        %2538 = vmatpush1.bf16.msra.mxu0 %v922
        %2539 = vmatprep.subr.bf16.mxu0 0
        %2540 = vmatpush1.bf16.msra.mxu0 %v923
        %2541 = vmatprep.subr.bf16.mxu0 0
        %2542 = vmatpush1.bf16.msra.mxu0 %v924
        %2543 = vmatprep.subr.bf16.mxu0 0
        %2544 = vmatpush1.bf16.msra.mxu0 %v925
        %2545 = vmatprep.subr.bf16.mxu0 0
        %2546 = vmatpush1.bf16.msra.mxu0 %v926
        %2547 = vmatprep.subr.bf16.mxu0 0
        %2548 = vmatpush1.bf16.msra.mxu0 %v927
        %2549 = vmatprep.subr.bf16.mxu0 0
        %2550 = vmatpush1.bf16.msra.mxu0 %v928
        %2551 = vmatprep.subr.bf16.mxu0 0
        %2552 = vmatpush1.bf16.msra.mxu0 %v929
        %2553 = vmatprep.subr.bf16.mxu0 0
        %2554 = vmatpush1.bf16.msra.mxu0 %v930
        %2555 = vmatprep.subr.bf16.mxu0 0
        %2556 = vmatpush1.bf16.msra.mxu0 %v931
        %2557 = vmatprep.subr.bf16.mxu0 0
        %2558 = vmatpush1.bf16.msra.mxu0 %v932
        %2559 = vmatprep.subr.bf16.mxu0 0
        %2560 = vmatpush1.bf16.msra.mxu0 %v933
        %2561 = vmatprep.mubr.bf16.mxu0 %v2466
        %2562 = vmatmul.mubr.bf16.gmra.mrb[0].mxu0 %v2465
        %v2563 = vpop.f32.mrb[0].mxu0
        %v2564 = vadd.f32 0.0, %v2563
        %v2565 = vpop.f32.mrb[0].mxu0
        %v2566 = vpop.f32.mrb[0].mxu0
        %v2567 = vadd.f32 0.0, %v2566
        %v2568 = vpop.f32.mrb[0].mxu0
        %2569 = vmatprep.mubr.bf16.mxu0 %v2470
        %2570 = vmatmul.mubr.bf16.gmra.mrb[0].mxu0 %v2469
        %v2571 = vpop.f32.mrb[0].mxu0
        %v2572 = vadd.f32 0.0, %v2571
        %v2573 = vpop.f32.mrb[0].mxu0
        %v2574 = vpop.f32.mrb[0].mxu0
        %v2575 = vadd.f32 0.0, %v2574
        %v2576 = vpop.f32.mrb[0].mxu0
        %2577 = vmatprep.mubr.bf16.mxu0 %v2474
        %2578 = vmatmul.mubr.bf16.gmra.mrb[0].mxu0 %v2473
        %v2579 = vpop.f32.mrb[0].mxu0
        %v2580 = vadd.f32 0.0, %v2579
        %v2581 = vpop.f32.mrb[0].mxu0
        %v2582 = vpop.f32.mrb[0].mxu0
        %v2583 = vadd.f32 0.0, %v2582
        %v2584 = vpop.f32.mrb[0].mxu0
        %2585 = vmatprep.mubr.bf16.mxu0 %v2478
        %2586 = vmatmul.mubr.bf16.gmra.mrb[0].mxu0 %v2477
        %v2587 = vpop.f32.mrb[0].mxu0
        %v2588 = vadd.f32 0.0, %v2587
        %v2589 = vpop.f32.mrb[0].mxu0
        %v2590 = vpop.f32.mrb[0].mxu0
        %v2591 = vadd.f32 0.0, %v2590
        %v2592 = vpop.f32.mrb[0].mxu0
        %2593 = vmatprep.mubr.bf16.mxu0 %v2482
        %2594 = vmatmul.mubr.bf16.gmra.mrb[0].mxu0 %v2481
        %v2595 = vpop.f32.mrb[0].mxu0
        %v2596 = vadd.f32 0.0, %v2595
        %v2597 = vpop.f32.mrb[0].mxu0
        %v2598 = vpop.f32.mrb[0].mxu0
        %v2599 = vadd.f32 0.0, %v2598
        %v2600 = vpop.f32.mrb[0].mxu0
        %2601 = vmatprep.mubr.bf16.mxu0 %v2486
        %2602 = vmatmul.mubr.bf16.gmra.mrb[0].mxu0 %v2485
        %v2603 = vpop.f32.mrb[0].mxu0
        %v2604 = vadd.f32 0.0, %v2603
        %v2605 = vpop.f32.mrb[0].mxu0
        %v2606 = vpop.f32.mrb[0].mxu0
        %v2607 = vadd.f32 0.0, %v2606
        %v2608 = vpop.f32.mrb[0].mxu0
        %2609 = vmatprep.mubr.bf16.mxu0 %v2490
        %2610 = vmatmul.mubr.bf16.gmra.mrb[0].mxu0 %v2489
        %v2611 = vpop.f32.mrb[0].mxu0
        %v2612 = vadd.f32 0.0, %v2611
        %v2613 = vpop.f32.mrb[0].mxu0
        %v2614 = vpop.f32.mrb[0].mxu0
        %v2615 = vadd.f32 0.0, %v2614
        %v2616 = vpop.f32.mrb[0].mxu0
        %2617 = vmatprep.mubr.bf16.mxu0 %v2494
        %2618 = vmatmul.mubr.bf16.gmra.mrb[0].mxu0 %v2493
        %v2619 = vpop.f32.mrb[0].mxu0
        %v2620 = vadd.f32 0.0, %v2619
        %v2621 = vpop.f32.mrb[0].mxu0
        %v2622 = vpop.f32.mrb[0].mxu0
        %v2623 = vadd.f32 0.0, %v2622
        %v2624 = vpop.f32.mrb[0].mxu0
        %2625 = vmatprep.mubr.bf16.mxu0 %v2498
        %2626 = vmatmul.mubr.bf16.gmra.mrb[0].mxu0 %v2497
        %v2627 = vpop.f32.mrb[0].mxu0
        %v2628 = vadd.f32 0.0, %v2627
        %v2629 = vpop.f32.mrb[0].mxu0
        %v2630 = vpop.f32.mrb[0].mxu0
        %v2631 = vadd.f32 0.0, %v2630
        %v2632 = vpop.f32.mrb[0].mxu0
        %2633 = vmatprep.mubr.bf16.mxu0 %v2502
        %2634 = vmatmul.mubr.bf16.gmra.mrb[0].mxu0 %v2501
        %v2635 = vpop.f32.mrb[0].mxu0
        %v2636 = vadd.f32 0.0, %v2635
        %v2637 = vpop.f32.mrb[0].mxu0
        %v2638 = vpop.f32.mrb[0].mxu0
        %v2639 = vadd.f32 0.0, %v2638
        %v2640 = vpop.f32.mrb[0].mxu0
        %2641 = vmatprep.mubr.bf16.mxu0 %v2506
        %2642 = vmatmul.mubr.bf16.gmra.mrb[0].mxu0 %v2505
        %v2643 = vpop.f32.mrb[0].mxu0
        %v2644 = vadd.f32 0.0, %v2643
        %v2645 = vpop.f32.mrb[0].mxu0
        %v2646 = vpop.f32.mrb[0].mxu0
        %v2647 = vadd.f32 0.0, %v2646
        %v2648 = vpop.f32.mrb[0].mxu0
        %2649 = vmatprep.mubr.bf16.mxu0 %v2510
        %2650 = vmatmul.mubr.bf16.gmra.mrb[0].mxu0 %v2509
        %v2651 = vpop.f32.mrb[0].mxu0
        %v2652 = vadd.f32 0.0, %v2651
        %v2653 = vpop.f32.mrb[0].mxu0
        %v2654 = vpop.f32.mrb[0].mxu0
        %v2655 = vadd.f32 0.0, %v2654
        %v2656 = vpop.f32.mrb[0].mxu0
        %2657 = vmatprep.mubr.bf16.mxu0 %v2514
        %2658 = vmatmul.mubr.bf16.gmra.mrb[0].mxu0 %v2513
        %v2659 = vpop.f32.mrb[0].mxu0
        %v2660 = vadd.f32 0.0, %v2659
        %v2661 = vpop.f32.mrb[0].mxu0
        %v2662 = vpop.f32.mrb[0].mxu0
        %v2663 = vadd.f32 0.0, %v2662
        %v2664 = vpop.f32.mrb[0].mxu0
        %2665 = vmatprep.mubr.bf16.mxu0 %v2518
        %2666 = vmatmul.mubr.bf16.gmra.mrb[0].mxu0 %v2517
        %v2667 = vpop.f32.mrb[0].mxu0
        %v2668 = vadd.f32 0.0, %v2667
        %v2669 = vpop.f32.mrb[0].mxu0
        %v2670 = vpop.f32.mrb[0].mxu0
        %v2671 = vadd.f32 0.0, %v2670
        %v2672 = vpop.f32.mrb[0].mxu0
        %2673 = vmatprep.mubr.bf16.mxu0 %v2522
        %2674 = vmatmul.mubr.bf16.gmra.mrb[0].mxu0 %v2521
        %v2675 = vpop.f32.mrb[0].mxu0
        %v2676 = vadd.f32 0.0, %v2675
        %v2677 = vpop.f32.mrb[0].mxu0
        %v2678 = vpop.f32.mrb[0].mxu0
        %v2679 = vadd.f32 0.0, %v2678
        %v2680 = vpop.f32.mrb[0].mxu0
        %2681 = vmatprep.mubr.bf16.mxu0 %v2526
        %2682 = vmatmul.mubr.bf16.gmra.mrb[0].mxu0 %v2525
        %v2683 = vpop.f32.mrb[0].mxu0
        %v2684 = vadd.f32 0.0, %v2683
        %v2685 = vpop.f32.mrb[0].mxu0
        %v2686 = vpop.f32.mrb[0].mxu0
        %v2687 = vadd.f32 0.0, %v2686
        %v2688 = vpop.f32.mrb[0].mxu0
        %2689 = vdwg.mxu0
        %2690 = vmatprep.subr.bf16.mxu0 0
        %2691 = vmatpush1.bf16.msra.mxu0 %v934
        %2692 = vmatprep.subr.bf16.mxu0 0
        %2693 = vmatpush1.bf16.msra.mxu0 %v935
        %2694 = vmatprep.subr.bf16.mxu0 0
        %2695 = vmatpush1.bf16.msra.mxu0 %v936
        %2696 = vmatprep.subr.bf16.mxu0 0
        %2697 = vmatpush1.bf16.msra.mxu0 %v937
        %2698 = vmatprep.subr.bf16.mxu0 0
        %2699 = vmatpush1.bf16.msra.mxu0 %v938
        %2700 = vmatprep.subr.bf16.mxu0 0
        %2701 = vmatpush1.bf16.msra.mxu0 %v939
        %2702 = vmatprep.subr.bf16.mxu0 0
        %2703 = vmatpush1.bf16.msra.mxu0 %v940
        %2704 = vmatprep.subr.bf16.mxu0 0
        %2705 = vmatpush1.bf16.msra.mxu0 %v941
        %2706 = vmatprep.subr.bf16.mxu0 0
        %2707 = vmatpush1.bf16.msra.mxu0 %v942
        %2708 = vmatprep.subr.bf16.mxu0 0
        %2709 = vmatpush1.bf16.msra.mxu0 %v943
        %2710 = vmatprep.subr.bf16.mxu0 0
        %2711 = vmatpush1.bf16.msra.mxu0 %v944
        %2712 = vmatprep.subr.bf16.mxu0 0
        %2713 = vmatpush1.bf16.msra.mxu0 %v945
        %2714 = vmatprep.subr.bf16.mxu0 0
        %2715 = vmatpush1.bf16.msra.mxu0 %v946
        %2716 = vmatprep.subr.bf16.mxu0 0
        %2717 = vmatpush1.bf16.msra.mxu0 %v947
        %2718 = vmatprep.subr.bf16.mxu0 0
        %2719 = vmatpush1.bf16.msra.mxu0 %v948
        %2720 = vmatprep.subr.bf16.mxu0 0
        %2721 = vmatpush1.bf16.msra.mxu0 %v949
        %2722 = vmatprep.mubr.bf16.mxu0 %v2468
        %2723 = vmatmul.mubr.bf16.gmra.mrb[0].mxu0 %v2467
        %v2724 = vpop.f32.mrb[0].mxu0
        %v2725 = vadd.f32 %v2564, %v2724
        %v2726 = vpop.f32.mrb[0].mxu0
        %v2727 = vpop.f32.mrb[0].mxu0
        %v2728 = vadd.f32 %v2567, %v2727
        %v2729 = vpop.f32.mrb[0].mxu0
        %2730 = vmatprep.mubr.bf16.mxu0 %v2472
        %2731 = vmatmul.mubr.bf16.gmra.mrb[0].mxu0 %v2471
        %v2732 = vpop.f32.mrb[0].mxu0
        %v2733 = vadd.f32 %v2572, %v2732
        %v2734 = vpop.f32.mrb[0].mxu0
        %v2735 = vpop.f32.mrb[0].mxu0
        %v2736 = vadd.f32 %v2575, %v2735
        %v2737 = vpop.f32.mrb[0].mxu0
        %2738 = vmatprep.mubr.bf16.mxu0 %v2476
        %2739 = vmatmul.mubr.bf16.gmra.mrb[0].mxu0 %v2475
        %v2740 = vpop.f32.mrb[0].mxu0
        %v2741 = vadd.f32 %v2580, %v2740
        %v2742 = vpop.f32.mrb[0].mxu0
        %v2743 = vpop.f32.mrb[0].mxu0
        %v2744 = vadd.f32 %v2583, %v2743
        %v2745 = vpop.f32.mrb[0].mxu0
        %2746 = vmatprep.mubr.bf16.mxu0 %v2480
        %2747 = vmatmul.mubr.bf16.gmra.mrb[0].mxu0 %v2479
        %v2748 = vpop.f32.mrb[0].mxu0
        %v2749 = vadd.f32 %v2588, %v2748
        %v2750 = vpop.f32.mrb[0].mxu0
        %v2751 = vpop.f32.mrb[0].mxu0
        %v2752 = vadd.f32 %v2591, %v2751
        %v2753 = vpop.f32.mrb[0].mxu0
        %2754 = vmatprep.mubr.bf16.mxu0 %v2484
        %2755 = vmatmul.mubr.bf16.gmra.mrb[0].mxu0 %v2483
        %v2756 = vpop.f32.mrb[0].mxu0
        %v2757 = vadd.f32 %v2596, %v2756
        %v2758 = vpop.f32.mrb[0].mxu0
        %v2759 = vpop.f32.mrb[0].mxu0
        %v2760 = vadd.f32 %v2599, %v2759
        %v2761 = vpop.f32.mrb[0].mxu0
        %2762 = vmatprep.mubr.bf16.mxu0 %v2488
        %2763 = vmatmul.mubr.bf16.gmra.mrb[0].mxu0 %v2487
        %v2764 = vpop.f32.mrb[0].mxu0
        %v2765 = vadd.f32 %v2604, %v2764
        %v2766 = vpop.f32.mrb[0].mxu0
        %v2767 = vpop.f32.mrb[0].mxu0
        %v2768 = vadd.f32 %v2607, %v2767
        %v2769 = vpop.f32.mrb[0].mxu0
        %2770 = vmatprep.mubr.bf16.mxu0 %v2492
        %2771 = vmatmul.mubr.bf16.gmra.mrb[0].mxu0 %v2491
        %v2772 = vpop.f32.mrb[0].mxu0
        %v2773 = vadd.f32 %v2612, %v2772
        %v2774 = vpop.f32.mrb[0].mxu0
        %v2775 = vpop.f32.mrb[0].mxu0
        %v2776 = vadd.f32 %v2615, %v2775
        %v2777 = vpop.f32.mrb[0].mxu0
        %2778 = vmatprep.mubr.bf16.mxu0 %v2496
        %2779 = vmatmul.mubr.bf16.gmra.mrb[0].mxu0 %v2495
        %v2780 = vpop.f32.mrb[0].mxu0
        %v2781 = vadd.f32 %v2620, %v2780
        %v2782 = vpop.f32.mrb[0].mxu0
        %v2783 = vpop.f32.mrb[0].mxu0
        %v2784 = vadd.f32 %v2623, %v2783
        %v2785 = vpop.f32.mrb[0].mxu0
        %2786 = vmatprep.mubr.bf16.mxu0 %v2500
        %2787 = vmatmul.mubr.bf16.gmra.mrb[0].mxu0 %v2499
        %v2788 = vpop.f32.mrb[0].mxu0
        %v2789 = vadd.f32 %v2628, %v2788
        %v2790 = vpop.f32.mrb[0].mxu0
        %v2791 = vpop.f32.mrb[0].mxu0
        %v2792 = vadd.f32 %v2631, %v2791
        %v2793 = vpop.f32.mrb[0].mxu0
        %2794 = vmatprep.mubr.bf16.mxu0 %v2504
        %2795 = vmatmul.mubr.bf16.gmra.mrb[0].mxu0 %v2503
        %v2796 = vpop.f32.mrb[0].mxu0
        %v2797 = vadd.f32 %v2636, %v2796
        %v2798 = vpop.f32.mrb[0].mxu0
        %v2799 = vpop.f32.mrb[0].mxu0
        %v2800 = vadd.f32 %v2639, %v2799
        %v2801 = vpop.f32.mrb[0].mxu0
        %2802 = vmatprep.mubr.bf16.mxu0 %v2508
        %2803 = vmatmul.mubr.bf16.gmra.mrb[0].mxu0 %v2507
        %v2804 = vpop.f32.mrb[0].mxu0
        %v2805 = vadd.f32 %v2644, %v2804
        %v2806 = vpop.f32.mrb[0].mxu0
        %v2807 = vpop.f32.mrb[0].mxu0
        %v2808 = vadd.f32 %v2647, %v2807
        %v2809 = vpop.f32.mrb[0].mxu0
        %2810 = vmatprep.mubr.bf16.mxu0 %v2512
        %2811 = vmatmul.mubr.bf16.gmra.mrb[0].mxu0 %v2511
        %v2812 = vpop.f32.mrb[0].mxu0
        %v2813 = vadd.f32 %v2652, %v2812
        %v2814 = vpop.f32.mrb[0].mxu0
        %v2815 = vpop.f32.mrb[0].mxu0
        %v2816 = vadd.f32 %v2655, %v2815
        %v2817 = vpop.f32.mrb[0].mxu0
        %2818 = vmatprep.mubr.bf16.mxu0 %v2516
        %2819 = vmatmul.mubr.bf16.gmra.mrb[0].mxu0 %v2515
        %v2820 = vpop.f32.mrb[0].mxu0
        %v2821 = vadd.f32 %v2660, %v2820
        %v2822 = vpop.f32.mrb[0].mxu0
        %v2823 = vpop.f32.mrb[0].mxu0
        %v2824 = vadd.f32 %v2663, %v2823
        %v2825 = vpop.f32.mrb[0].mxu0
        %2826 = vmatprep.mubr.bf16.mxu0 %v2520
        %2827 = vmatmul.mubr.bf16.gmra.mrb[0].mxu0 %v2519
        %v2828 = vpop.f32.mrb[0].mxu0
        %v2829 = vadd.f32 %v2668, %v2828
        %v2830 = vpop.f32.mrb[0].mxu0
        %v2831 = vpop.f32.mrb[0].mxu0
        %v2832 = vadd.f32 %v2671, %v2831
        %v2833 = vpop.f32.mrb[0].mxu0
        %2834 = vmatprep.mubr.bf16.mxu0 %v2524
        %2835 = vmatmul.mubr.bf16.gmra.mrb[0].mxu0 %v2523
        %v2836 = vpop.f32.mrb[0].mxu0
        %v2837 = vadd.f32 %v2676, %v2836
        %v2838 = vpop.f32.mrb[0].mxu0
        %v2839 = vpop.f32.mrb[0].mxu0
        %v2840 = vadd.f32 %v2679, %v2839
        %v2841 = vpop.f32.mrb[0].mxu0
        %2842 = vmatprep.mubr.bf16.mxu0 %v2528
        %2843 = vmatmul.mubr.bf16.gmra.mrb[0].mxu0 %v2527
        %v2844 = vpop.f32.mrb[0].mxu0
        %v2845 = vadd.f32 %v2684, %v2844
        %v2846 = vpop.f32.mrb[0].mxu0
        %v2847 = vpop.f32.mrb[0].mxu0
        %v2848 = vadd.f32 %v2687, %v2847
        %v2849 = vpop.f32.mrb[0].mxu0
        %2850 = vdwg.mxu0
        %v2851 = vpack.c.bf16 %v2728, %v2725
        %v2852 = vpack.c.bf16 %v2736, %v2733
        %v2853 = vpack.c.bf16 %v2744, %v2741
        %v2854 = vpack.c.bf16 %v2752, %v2749
        %v2855 = vpack.c.bf16 %v2760, %v2757
        %v2856 = vpack.c.bf16 %v2768, %v2765
        %v2857 = vpack.c.bf16 %v2776, %v2773
        %v2858 = vpack.c.bf16 %v2784, %v2781
        %v2859 = vpack.c.bf16 %v2792, %v2789
        %v2860 = vpack.c.bf16 %v2800, %v2797
        %v2861 = vpack.c.bf16 %v2808, %v2805
        %v2862 = vpack.c.bf16 %v2816, %v2813
        %v2863 = vpack.c.bf16 %v2824, %v2821
        %v2864 = vpack.c.bf16 %v2832, %v2829
        %v2865 = vpack.c.bf16 %v2840, %v2837
        %v2866 = vpack.c.bf16 %v2848, %v2845
        %v2867 = vld [vmem:[%s2] sm:$0xf]
        %v2868 = vld [vmem:[%s2 + $0x4] sm:$0xf]
        %v2869 = vld [vmem:[%s2 + $0x8] sm:$0xf]
        %v2870 = vld [vmem:[%s2 + $0xc] sm:$0xf]
        %v2871 = vld [vmem:[%s2 + $0x10] sm:$0xf]
        %v2872 = vld [vmem:[%s2 + $0x14] sm:$0xf]
        %v2873 = vld [vmem:[%s2 + $0x18] sm:$0xf]
        %v2874 = vld [vmem:[%s2 + $0x1c] sm:$0xf]
        %v2875 = vld [vmem:[%s2 + $0x20] sm:$0xf]
        %v2876 = vld [vmem:[%s2 + $0x24] sm:$0xf]
        %v2877 = vld [vmem:[%s2 + $0x28] sm:$0xf]
        %v2878 = vld [vmem:[%s2 + $0x2c] sm:$0xf]
        %v2879 = vld [vmem:[%s2 + $0x30] sm:$0xf]
        %v2880 = vld [vmem:[%s2 + $0x34] sm:$0xf]
        %v2881 = vld [vmem:[%s2 + $0x38] sm:$0xf]
        %v2882 = vld [vmem:[%s2 + $0x3c] sm:$0xf]
        %v2883 = vld [vmem:[%s3] sm:$0x1]
        %v2885 = vlaneseq
        %v2886 = vshrl.u32 %v2885, 7
        %v2887 = vsub.s32 0, %v2886
        %v2888 = vrot.slane %v2883, %v2887
        %v2906 = vunpack.c.l.b16 %v2867
        %v2907 = vunpack.c.l.b16 %v2868
        %v2908 = vunpack.c.l.b16 %v2869
        %v2909 = vunpack.c.l.b16 %v2870
        %v2910 = vunpack.c.l.b16 %v2871
        %v2911 = vunpack.c.l.b16 %v2872
        %v2912 = vunpack.c.l.b16 %v2873
        %v2913 = vunpack.c.l.b16 %v2874
        %v2914 = vunpack.c.l.b16 %v2875
        %v2915 = vunpack.c.l.b16 %v2876
        %v2916 = vunpack.c.l.b16 %v2877
        %v2917 = vunpack.c.l.b16 %v2878
        %v2918 = vunpack.c.l.b16 %v2879
        %v2919 = vunpack.c.l.b16 %v2880
        %v2920 = vunpack.c.l.b16 %v2881
        %v2921 = vunpack.c.l.b16 %v2882
        %v2922 = vpack.c.b16 %v2907, %v2906
        %v2923 = vpack.c.b16 %v2909, %v2908
        %v2924 = vpack.c.b16 %v2911, %v2910
        %v2925 = vpack.c.b16 %v2913, %v2912
        %v2926 = vpack.c.b16 %v2915, %v2914
        %v2927 = vpack.c.b16 %v2917, %v2916
        %v2928 = vpack.c.b16 %v2919, %v2918
        %v2929 = vpack.c.b16 %v2921, %v2920
        %2938 = vmatprep.subr.bf16.mxu0 0
        %2939 = vmatpush1.bf16.msra.mxu0 %v2922
        %2940 = vmatprep.subr.bf16.mxu0 0
        %2941 = vmatpush1.bf16.msra.mxu0 %v2923
        %2942 = vmatprep.subr.bf16.mxu0 0
        %2943 = vmatpush1.bf16.msra.mxu0 %v2924
        %2944 = vmatprep.subr.bf16.mxu0 0
        %2945 = vmatpush1.bf16.msra.mxu0 %v2925
        %2946 = vmatprep.subr.bf16.mxu0 0
        %2947 = vmatpush1.bf16.msra.mxu0 %v2926
        %2948 = vmatprep.subr.bf16.mxu0 0
        %2949 = vmatpush1.bf16.msra.mxu0 %v2927
        %2950 = vmatprep.subr.bf16.mxu0 0
        %2951 = vmatpush1.bf16.msra.mxu0 %v2928
        %2952 = vmatprep.subr.bf16.mxu0 0
        %2953 = vmatpush1.bf16.msra.mxu0 %v2929
        %2954 = vmatprep.subr.bf16.mxu0 0
        %2955 = vmatpush1.bf16.msra.mxu0 0
        %2956 = vmatprep.subr.bf16.mxu0 0
        %2957 = vmatpush1.bf16.msra.mxu0 0
        %2958 = vmatprep.subr.bf16.mxu0 0
        %2959 = vmatpush1.bf16.msra.mxu0 0
        %2960 = vmatprep.subr.bf16.mxu0 0
        %2961 = vmatpush1.bf16.msra.mxu0 0
        %2962 = vmatprep.subr.bf16.mxu0 0
        %2963 = vmatpush1.bf16.msra.mxu0 0
        %2964 = vmatprep.subr.bf16.mxu0 0
        %2965 = vmatpush1.bf16.msra.mxu0 0
        %2966 = vmatprep.subr.bf16.mxu0 0
        %2967 = vmatpush1.bf16.msra.mxu0 0
        %2968 = vmatprep.subr.bf16.mxu0 0
        %2969 = vmatpush1.bf16.msra.mxu0 0
        %2970 = vmatprep.mubr.bf16.mxu0 0
        %2971 = vmatmul.mubr.bf16.gmra.mrb[0].mxu0 %v2851
        %v2972 = vpop.f32.mrb[0].mxu0
        %v2973 = vadd.f32 %v2888, %v2972
        %v2974 = vpop.f32.mrb[0].mxu0
        %v2975 = vpop.f32.mrb[0].mxu0
        %v2976 = vadd.f32 %v2888, %v2975
        %v2977 = vpop.f32.mrb[0].mxu0
        %2978 = vmatprep.mubr.bf16.mxu0 0
        %2979 = vmatmul.mubr.bf16.gmra.mrb[0].mxu0 %v2852
        %v2980 = vpop.f32.mrb[0].mxu0
        %v2981 = vadd.f32 %v2888, %v2980
        %v2982 = vpop.f32.mrb[0].mxu0
        %v2983 = vpop.f32.mrb[0].mxu0
        %v2984 = vadd.f32 %v2888, %v2983
        %v2985 = vpop.f32.mrb[0].mxu0
        %2986 = vmatprep.mubr.bf16.mxu0 0
        %2987 = vmatmul.mubr.bf16.gmra.mrb[0].mxu0 %v2853
        %v2988 = vpop.f32.mrb[0].mxu0
        %v2989 = vadd.f32 %v2888, %v2988
        %v2990 = vpop.f32.mrb[0].mxu0
        %v2991 = vpop.f32.mrb[0].mxu0
        %v2992 = vadd.f32 %v2888, %v2991
        %v2993 = vpop.f32.mrb[0].mxu0
        %2994 = vmatprep.mubr.bf16.mxu0 0
        %2995 = vmatmul.mubr.bf16.gmra.mrb[0].mxu0 %v2854
        %v2996 = vpop.f32.mrb[0].mxu0
        %v2997 = vadd.f32 %v2888, %v2996
        %v2998 = vpop.f32.mrb[0].mxu0
        %v2999 = vpop.f32.mrb[0].mxu0
        %v3000 = vadd.f32 %v2888, %v2999
        %v3001 = vpop.f32.mrb[0].mxu0
        %3002 = vmatprep.mubr.bf16.mxu0 0
        %3003 = vmatmul.mubr.bf16.gmra.mrb[0].mxu0 %v2855
        %v3004 = vpop.f32.mrb[0].mxu0
        %v3005 = vadd.f32 %v2888, %v3004
        %v3006 = vpop.f32.mrb[0].mxu0
        %v3007 = vpop.f32.mrb[0].mxu0
        %v3008 = vadd.f32 %v2888, %v3007
        %v3009 = vpop.f32.mrb[0].mxu0
        %3010 = vmatprep.mubr.bf16.mxu0 0
        %3011 = vmatmul.mubr.bf16.gmra.mrb[0].mxu0 %v2856
        %v3012 = vpop.f32.mrb[0].mxu0
        %v3013 = vadd.f32 %v2888, %v3012
        %v3014 = vpop.f32.mrb[0].mxu0
        %v3015 = vpop.f32.mrb[0].mxu0
        %v3016 = vadd.f32 %v2888, %v3015
        %v3017 = vpop.f32.mrb[0].mxu0
        %3018 = vmatprep.mubr.bf16.mxu0 0
        %3019 = vmatmul.mubr.bf16.gmra.mrb[0].mxu0 %v2857
        %v3020 = vpop.f32.mrb[0].mxu0
        %v3021 = vadd.f32 %v2888, %v3020
        %v3022 = vpop.f32.mrb[0].mxu0
        %v3023 = vpop.f32.mrb[0].mxu0
        %v3024 = vadd.f32 %v2888, %v3023
        %v3025 = vpop.f32.mrb[0].mxu0
        %3026 = vmatprep.mubr.bf16.mxu0 0
        %3027 = vmatmul.mubr.bf16.gmra.mrb[0].mxu0 %v2858
        %v3028 = vpop.f32.mrb[0].mxu0
        %v3029 = vadd.f32 %v2888, %v3028
        %v3030 = vpop.f32.mrb[0].mxu0
        %v3031 = vpop.f32.mrb[0].mxu0
        %v3032 = vadd.f32 %v2888, %v3031
        %v3033 = vpop.f32.mrb[0].mxu0
        %3034 = vmatprep.mubr.bf16.mxu0 0
        %3035 = vmatmul.mubr.bf16.gmra.mrb[0].mxu0 %v2859
        %v3036 = vpop.f32.mrb[0].mxu0
        %v3037 = vadd.f32 %v2888, %v3036
        %v3038 = vpop.f32.mrb[0].mxu0
        %v3039 = vpop.f32.mrb[0].mxu0
        %v3040 = vadd.f32 %v2888, %v3039
        %v3041 = vpop.f32.mrb[0].mxu0
        %3042 = vmatprep.mubr.bf16.mxu0 0
        %3043 = vmatmul.mubr.bf16.gmra.mrb[0].mxu0 %v2860
        %v3044 = vpop.f32.mrb[0].mxu0
        %v3045 = vadd.f32 %v2888, %v3044
        %v3046 = vpop.f32.mrb[0].mxu0
        %v3047 = vpop.f32.mrb[0].mxu0
        %v3048 = vadd.f32 %v2888, %v3047
        %v3049 = vpop.f32.mrb[0].mxu0
        %3050 = vmatprep.mubr.bf16.mxu0 0
        %3051 = vmatmul.mubr.bf16.gmra.mrb[0].mxu0 %v2861
        %v3052 = vpop.f32.mrb[0].mxu0
        %v3053 = vadd.f32 %v2888, %v3052
        %v3054 = vpop.f32.mrb[0].mxu0
        %v3055 = vpop.f32.mrb[0].mxu0
        %v3056 = vadd.f32 %v2888, %v3055
        %v3057 = vpop.f32.mrb[0].mxu0
        %3058 = vmatprep.mubr.bf16.mxu0 0
        %3059 = vmatmul.mubr.bf16.gmra.mrb[0].mxu0 %v2862
        %v3060 = vpop.f32.mrb[0].mxu0
        %v3061 = vadd.f32 %v2888, %v3060
        %v3062 = vpop.f32.mrb[0].mxu0
        %v3063 = vpop.f32.mrb[0].mxu0
        %v3064 = vadd.f32 %v2888, %v3063
        %v3065 = vpop.f32.mrb[0].mxu0
        %3066 = vmatprep.mubr.bf16.mxu0 0
        %3067 = vmatmul.mubr.bf16.gmra.mrb[0].mxu0 %v2863
        %v3068 = vpop.f32.mrb[0].mxu0
        %v3069 = vadd.f32 %v2888, %v3068
        %v3070 = vpop.f32.mrb[0].mxu0
        %v3071 = vpop.f32.mrb[0].mxu0
        %v3072 = vadd.f32 %v2888, %v3071
        %v3073 = vpop.f32.mrb[0].mxu0
        %3074 = vmatprep.mubr.bf16.mxu0 0
        %3075 = vmatmul.mubr.bf16.gmra.mrb[0].mxu0 %v2864
        %v3076 = vpop.f32.mrb[0].mxu0
        %v3077 = vadd.f32 %v2888, %v3076
        %v3078 = vpop.f32.mrb[0].mxu0
        %v3079 = vpop.f32.mrb[0].mxu0
        %v3080 = vadd.f32 %v2888, %v3079
        %v3081 = vpop.f32.mrb[0].mxu0
        %3082 = vmatprep.mubr.bf16.mxu0 0
        %3083 = vmatmul.mubr.bf16.gmra.mrb[0].mxu0 %v2865
        %v3084 = vpop.f32.mrb[0].mxu0
        %v3085 = vadd.f32 %v2888, %v3084
        %v3086 = vpop.f32.mrb[0].mxu0
        %v3087 = vpop.f32.mrb[0].mxu0
        %v3088 = vadd.f32 %v2888, %v3087
        %v3089 = vpop.f32.mrb[0].mxu0
        %3090 = vmatprep.mubr.bf16.mxu0 0
        %3091 = vmatmul.mubr.bf16.gmra.mrb[0].mxu0 %v2866
        %v3092 = vpop.f32.mrb[0].mxu0
        %v3093 = vadd.f32 %v2888, %v3092
        %v3094 = vpop.f32.mrb[0].mxu0
        %v3095 = vpop.f32.mrb[0].mxu0
        %v3096 = vadd.f32 %v2888, %v3095
        %v3097 = vpop.f32.mrb[0].mxu0
        %3098 = vdwg.mxu0
        %v3099 = vadd.f32 %v2973, %v197
        %v3100 = vadd.f32 %v2976, %v198
        %v3101 = vadd.f32 %v2981, %v199
        %v3102 = vadd.f32 %v2984, %v200
        %v3103 = vadd.f32 %v2989, %v201
        %v3104 = vadd.f32 %v2992, %v202
        %v3105 = vadd.f32 %v2997, %v203
        %v3106 = vadd.f32 %v3000, %v204
        %v3107 = vadd.f32 %v3005, %v205
        %v3108 = vadd.f32 %v3008, %v206
        %v3109 = vadd.f32 %v3013, %v207
        %v3110 = vadd.f32 %v3016, %v208
        %v3111 = vadd.f32 %v3021, %v209
        %v3112 = vadd.f32 %v3024, %v210
        %v3113 = vadd.f32 %v3029, %v211
        %v3114 = vadd.f32 %v3032, %v212
        %v3115 = vadd.f32 %v3037, %v213
        %v3116 = vadd.f32 %v3040, %v214
        %v3117 = vadd.f32 %v3045, %v215
        %v3118 = vadd.f32 %v3048, %v216
        %v3119 = vadd.f32 %v3053, %v217
        %v3120 = vadd.f32 %v3056, %v218
        %v3121 = vadd.f32 %v3061, %v219
        %v3122 = vadd.f32 %v3064, %v220
        %v3123 = vadd.f32 %v3069, %v221
        %v3124 = vadd.f32 %v3072, %v222
        %v3125 = vadd.f32 %v3077, %v223
        %v3126 = vadd.f32 %v3080, %v224
        %v3127 = vadd.f32 %v3085, %v225
        %v3128 = vadd.f32 %v3088, %v226
        %v3129 = vadd.f32 %v3093, %v227
        %v3130 = vadd.f32 %v3096, %v228
        %3131 = vst [vmem:[%s190] sm:$0xff] %v3099
        %3132 = vst [vmem:[%s190 + $0x8] sm:$0xff] %v3100
        %3133 = vst [vmem:[%s190 + $0x10] sm:$0xff] %v3101
        %3134 = vst [vmem:[%s190 + $0x18] sm:$0xff] %v3102
        %3135 = vst [vmem:[%s190 + $0x20] sm:$0xff] %v3103
        %3136 = vst [vmem:[%s190 + $0x28] sm:$0xff] %v3104
        %3137 = vst [vmem:[%s190 + $0x30] sm:$0xff] %v3105
        %3138 = vst [vmem:[%s190 + $0x38] sm:$0xff] %v3106
        %3139 = vst [vmem:[%s190 + $0x40] sm:$0xff] %v3107
        %3140 = vst [vmem:[%s190 + $0x48] sm:$0xff] %v3108
        %3141 = vst [vmem:[%s190 + $0x50] sm:$0xff] %v3109
        %3142 = vst [vmem:[%s190 + $0x58] sm:$0xff] %v3110
        %3143 = vst [vmem:[%s190 + $0x60] sm:$0xff] %v3111
        %3144 = vst [vmem:[%s190 + $0x68] sm:$0xff] %v3112
        %3145 = vst [vmem:[%s190 + $0x70] sm:$0xff] %v3113
        %3146 = vst [vmem:[%s190 + $0x78] sm:$0xff] %v3114
        %3147 = vst [vmem:[%s190 + $0x80] sm:$0xff] %v3115
        %3148 = vst [vmem:[%s190 + $0x88] sm:$0xff] %v3116
        %3149 = vst [vmem:[%s190 + $0x90] sm:$0xff] %v3117
        %3150 = vst [vmem:[%s190 + $0x98] sm:$0xff] %v3118
        %3151 = vst [vmem:[%s190 + $0xa0] sm:$0xff] %v3119
        %3152 = vst [vmem:[%s190 + $0xa8] sm:$0xff] %v3120
        %3153 = vst [vmem:[%s190 + $0xb0] sm:$0xff] %v3121
        %3154 = vst [vmem:[%s190 + $0xb8] sm:$0xff] %v3122
        %3155 = vst [vmem:[%s190 + $0xc0] sm:$0xff] %v3123
        %3156 = vst [vmem:[%s190 + $0xc8] sm:$0xff] %v3124
        %3157 = vst [vmem:[%s190 + $0xd0] sm:$0xff] %v3125
        %3158 = vst [vmem:[%s190 + $0xd8] sm:$0xff] %v3126
        %3159 = vst [vmem:[%s190 + $0xe0] sm:$0xff] %v3127
        %3160 = vst [vmem:[%s190 + $0xe8] sm:$0xff] %v3128
        %3161 = vst [vmem:[%s190 + $0xf0] sm:$0xff] %v3129
        %3162 = vst [vmem:[%s190 + $0xf8] sm:$0xff] %v3130
        %s3163 = sand.u32 %s115, 1
        %s3164 = scalar_lea.sflag [#allocation3], %s3163
        %s3165 = sand.u32 %s115, 1
        %s3166 = smul.addr %s3165, 256
        %s3167 = scalar_lea.vmem [#allocation2], %s3166
        // Predicated region
        $region37: #{afnp_block_256.1} parent=35 // pred_check
          %p3168 = pneg %p125
        $region38: #{afnp_block_256.1} parent=35 // pred_check_branch
          %3170 = sbr.rel (%p3168) target = $region40
        $region39: #{afnp_block_256.1} parent=35 // pred_region
          %s3172 = ssub.s32 4096, 4096
          %3173 = vsyncadd %s3164, %s3172
          %s3174 = smul.addr %s18, 32
          %s3175 = smul.addr %s3174, 128
          %s3176 = scalar_lea.hbm %s4, %s3175
          %s3177 = sshll.u32 %s3167, 4
          %s3178 = int_to_ptr.vmem [resolvable:$true] %s3177
          %3183 = dma.vmem_to_hbm [thread:$0]  %s3178, 4096, %s3176, %s3164, 128, 128, 8
        $region40: #{afnp_block_256.1} parent=35 // pred_fallthru
          _
      $region36: #{afnp_block_256.1} parent=5 // pred_fallthru
        _
      %p3184 = scmp.le.s32.totalorder 2, %s13
      // Predicated region
      $region41: #{afnp_block_256.1} parent=5 // pred_check
        %p3185 = pneg %p3184
      $region42: #{afnp_block_256.1} parent=5 // pred_check_branch
        %3187 = sbr.rel (%p3185) target = $region44
      $region43: #{afnp_block_256.1} parent=5 // pred_region
        %s3188 = ssub.s32 %s13, 2
        // Predicated region
        $region45: #{afnp_block_256.1} parent=43 // pred_check
          %p3189 = pneg %p131
        $region46: #{afnp_block_256.1} parent=43 // pred_check_branch
          %3191 = sbr.rel (%p3189) target = $region48
        $region47: #{afnp_block_256.1} parent=43 // pred_region
          %s3192 = sand.u32 %s116, 1
          %s3193 = scalar_lea.sflag [#allocation3], %s3192
          %s3194 = sand.u32 %s116, 1
          %s3195 = smul.addr %s3194, 256
          %s3196 = scalar_lea.vmem [#allocation2], %s3195
          %3197 = dma.done %s3193, 4096
        $region48: #{afnp_block_256.1} parent=43 // pred_fallthru
          _
      $region44: #{afnp_block_256.1} parent=5 // pred_fallthru
        _
    $region6: #{afnp_block_256.1} parent=1 // loop_footer
      %s17 = sadd.s32 1, %s13
    $region7: #{afnp_block_256.1} parent=1 // loop_footer_branch
      %12 = sbr.rel target = $region3
    $region8: #{afnp_block_256.1} parent=1 // loop_exit
      _
    %3198 = vsyncpa [#allocation3], 1
    %s3199 = scalar_lea.sflag [#allocation3], 1
    %3200 = vsyncpa %s3199, 1

</llo_original>
